<compile_context>
chip_gen: v6e
topology: v6e:2x2x1
jax: 0.10.0
libtpu: 0.0.40
codegen_flags: <defaults>
</compile_context>

<pallas_src>
import jax
import jax.numpy as jnp
from jax.experimental import pallas as pl
from jax.experimental.pallas import tpu as pltpu

# ---- model hyperparameters --------------------------------------------------
BATCH = 2
NPOINTS = 64          # number of points per cloud
C_IN = 3              # input_channels
C1, C2 = 64, 128      # hidden channel widths (fixed by the module)
C_OUT = 256           # output_channels
BN_EPS = 1e-5

# Full-f32 MXU passes so the Pallas kernel and the pure-JAX reference agree to
# tight tolerance regardless of the backend's default matmul precision.
MXU_PREC = jax.lax.Precision.HIGHEST


# ------------------------------- kernel --------------------------------------
def pointnet_kernel(x_ref, w1_ref, w2_ref, w3_ref, b_ref, o_ref):
    # x_ref: (B*N, C_IN) — batch folded into the matmul M dimension.
    x = x_ref[...]                                                   # (128, 3)

    # layer 1: C_IN(=3) -> 64.  K=3 is a degenerate MXU contraction, so do it
    # on the VPU as broadcast-FMAs (column of x  x  row of W1^T).
    w1 = w1_ref[...]                                                 # (3, 64)
    h = x[:, 0:1] * w1[0:1, :]
    for c in range(1, C_IN):
        h = h + x[:, c:c + 1] * w1[c:c + 1, :]
    h = jnp.maximum(h + b_ref[0:1, 0:C1], 0.0)                       # (128, 64)

    # layer 2: 64 -> 128 (MXU, M = B*N = 128), BN folded, ReLU
    h = jnp.dot(h, w2_ref[...], precision=MXU_PREC,
                preferred_element_type=jnp.float32)
    h = jnp.maximum(h + b_ref[1:2, 0:C2], 0.0)                       # (128, 128)

    # layer 3: 128 -> 256 (MXU), BN folded, no ReLU
    h = jnp.dot(h, w3_ref[...], precision=MXU_PREC,
                preferred_element_type=jnp.float32)
    h = h + b_ref[2:3, :]                                            # (128, 256)

    # global max-pool over points for each batch element, then one lane-dense
    # (B, 256) store.
    parts = [
        jnp.max(h[b * NPOINTS:(b + 1) * NPOINTS, :], axis=0, keepdims=True)
        for b in range(BATCH)
    ]
    o_ref[...] = jnp.concatenate(parts, axis=0)                      # (2, 256)


# ------------------------------- wrapper --------------------------------------
def pointnet_encoder(x, folded_params):
    B, N, _ = x.shape
    w1t, w2t, w3t, b_slab = folded_params

    # Fold batch into the matmul M dimension: (B, N, C_IN) -> (B*N, C_IN).
    x2d = x.reshape(B * N, C_IN)

    vmem = lambda: pl.BlockSpec(memory_space=pltpu.MemorySpace.VMEM)

    out = pl.pallas_call(
        pointnet_kernel,
        out_shape=jax.ShapeDtypeStruct((B, C_OUT), jnp.float32),
        in_specs=[vmem(), vmem(), vmem(), vmem(), vmem()],
        out_specs=vmem(),
    )(x2d, w1t, w2t, w3t, b_slab)
    return out                                                       # (B, C_OUT)


# ----------------------- parameter folding (wrapper side) --------------------
def fold_params(raw):
    """Fold Conv1d(k=1) + BatchNorm(eval) into (W^T scaled, packed bias slab)."""
    def fold(W, b, g, be, m, v):
        s = g / jnp.sqrt(v + BN_EPS)            # (C_out,)
        wt = (W * s[:, None]).T                 # (C_in, C_out), pre-transposed
        bf = (b - m) * s + be                   # (C_out,)
        return wt.astype(jnp.float32), bf.astype(jnp.float32)

    w1t, b1 = fold(raw["W1"], raw["b1"], raw["g1"], raw["be1"], raw["m1"], raw["v1"])
    w2t, b2 = fold(raw["W2"], raw["b2"], raw["g2"], raw["be2"], raw["m2"], raw["v2"])
    w3t, b3 = fold(raw["W3"], raw["b3"], raw["g3"], raw["be3"], raw["m3"], raw["v3"])

    # pack all biases into one lane-dense (3, 256) slab -> single DMA
    b_slab = jnp.zeros((3, C_OUT), jnp.float32)
    b_slab = b_slab.at[0, :C1].set(b1)
    b_slab = b_slab.at[1, :C2].set(b2)
    b_slab = b_slab.at[2, :].set(b3)
    return w1t, w2t, w3t, b_slab


# --------------------------- reference (pure JAX) -----------------------------
def reference_forward(x, raw):
    def layer(h, W, b, g, be, m, v, relu):
        y = jnp.einsum("bnc,oc->bno", h, W,
                       precision=jax.lax.Precision.HIGHEST) + b      # Conv1d(k=1)
        y = (y - m) / jnp.sqrt(v + BN_EPS) * g + be                  # BatchNorm1d (eval)
        return jnp.maximum(y, 0.0) if relu else y

    h = layer(x, raw["W1"], raw["b1"], raw["g1"], raw["be1"], raw["m1"], raw["v1"], True)
    h = layer(h, raw["W2"], raw["b2"], raw["g2"], raw["be2"], raw["m2"], raw["v2"], True)
    h = layer(h, raw["W3"], raw["b3"], raw["g3"], raw["be3"], raw["m3"], raw["v3"], False)
    return jnp.max(h, axis=1)                            # (B, C_OUT)


# ------------------------------ init -----------------------------------------
def init_raw_params(key):
    kW1, kb1, kbn1, kW2, kb2, kbn2, kW3, kb3, kbn3 = jax.random.split(key, 9)
    f32 = jnp.float32
    w = lambda k, shp: (0.1 * jax.random.normal(k, shp)).astype(f32)

    def bn(k, c):
        kg, kb, km, kv = jax.random.split(k, 4)
        return ((1.0 + 0.1 * jax.random.normal(kg, (c,))).astype(f32),   # gamma
                (0.1 * jax.random.normal(kb, (c,))).astype(f32),         # beta
                (0.1 * jax.random.normal(km, (c,))).astype(f32),         # running mean
                jax.random.uniform(kv, (c,), minval=0.5, maxval=1.5).astype(f32))  # running var

    g1, be1, m1, v1 = bn(kbn1, C1)
    g2, be2, m2, v2 = bn(kbn2, C2)
    g3, be3, m3, v3 = bn(kbn3, C_OUT)
    return {
        "W1": w(kW1, (C1, C_IN)),   "b1": w(kb1, (C1,)),
        "W2": w(kW2, (C2, C1)),     "b2": w(kb2, (C2,)),
        "W3": w(kW3, (C_OUT, C2)),  "b3": w(kb3, (C_OUT,)),
        "g1": g1, "be1": be1, "m1": m1, "v1": v1,
        "g2": g2, "be2": be2, "m2": m2, "v2": v2,
        "g3": g3, "be3": be3, "m3": m3, "v3": v3,
    }


if __name__ == "__main__":
    key = jax.random.PRNGKey(0)
    kx, kp = jax.random.split(key)
    x = jax.random.normal(kx, (BATCH, NPOINTS, C_IN), dtype=jnp.float32)
    raw = init_raw_params(kp)
    folded = fold_params(raw)

    out = pointnet_encoder(x, folded)
    out = jax.block_until_ready(out)

    ref = reference_forward(x, raw)
    assert out.shape == (BATCH, C_OUT)
    assert jnp.allclose(out, ref, rtol=2e-4, atol=2e-4), "mismatch vs reference"

    print("KERNEL_OK")
</pallas_src>

<mosaic_0001>
module attributes {stable_mosaic.version = 11 : i64} {
  func.func @pointnet_kernel(%arg0: memref<128x3xf32, #tpu.memory_space<vmem>>, %arg1: memref<3x64xf32, #tpu.memory_space<vmem>>, %arg2: memref<64x128xf32, #tpu.memory_space<vmem>>, %arg3: memref<128x256xf32, #tpu.memory_space<vmem>>, %arg4: memref<3x256xf32, #tpu.memory_space<vmem>>, %arg5: memref<2x256xf32, #tpu.memory_space<vmem>>) attributes {dimension_semantics = [], scalar_prefetch = 0 : i64, scratch_operands = 0 : i64, tpu.core_type = #tpu.core_type<tc>} {
    %c0 = arith.constant 0 : index
    %c0_0 = arith.constant 0 : index
    %0 = vector.load %arg0[%c0, %c0_0] : memref<128x3xf32, #tpu.memory_space<vmem>>, vector<128x3xf32>
    %c0_1 = arith.constant 0 : index
    %c0_2 = arith.constant 0 : index
    %1 = vector.load %arg1[%c0_1, %c0_2] : memref<3x64xf32, #tpu.memory_space<vmem>>, vector<3x64xf32>
    %2 = vector.extract_strided_slice %0 {offsets = [0, 0], sizes = [128, 1], strides = [1, 1]} : vector<128x3xf32> to vector<128x1xf32>
    %3 = vector.extract_strided_slice %1 {offsets = [0, 0], sizes = [1, 64], strides = [1, 1]} : vector<3x64xf32> to vector<1x64xf32>
    %4 = vector.broadcast %2 : vector<128x1xf32> to vector<128x64xf32>
    %5 = vector.broadcast %3 : vector<1x64xf32> to vector<128x64xf32>
    %6 = arith.mulf %4, %5 : vector<128x64xf32>
    %7 = vector.extract_strided_slice %0 {offsets = [0, 1], sizes = [128, 1], strides = [1, 1]} : vector<128x3xf32> to vector<128x1xf32>
    %8 = vector.extract_strided_slice %1 {offsets = [1, 0], sizes = [1, 64], strides = [1, 1]} : vector<3x64xf32> to vector<1x64xf32>
    %9 = vector.broadcast %7 : vector<128x1xf32> to vector<128x64xf32>
    %10 = vector.broadcast %8 : vector<1x64xf32> to vector<128x64xf32>
    %11 = arith.mulf %9, %10 : vector<128x64xf32>
    %12 = arith.addf %6, %11 : vector<128x64xf32>
    %13 = vector.extract_strided_slice %0 {offsets = [0, 2], sizes = [128, 1], strides = [1, 1]} : vector<128x3xf32> to vector<128x1xf32>
    %14 = vector.extract_strided_slice %1 {offsets = [2, 0], sizes = [1, 64], strides = [1, 1]} : vector<3x64xf32> to vector<1x64xf32>
    %15 = vector.broadcast %13 : vector<128x1xf32> to vector<128x64xf32>
    %16 = vector.broadcast %14 : vector<1x64xf32> to vector<128x64xf32>
    %17 = arith.mulf %15, %16 : vector<128x64xf32>
    %18 = arith.addf %12, %17 : vector<128x64xf32>
    %c0_3 = arith.constant 0 : index
    %c0_4 = arith.constant 0 : index
    %19 = vector.load %arg4[%c0_3, %c0_4] : memref<3x256xf32, #tpu.memory_space<vmem>>, vector<1x64xf32>
    %20 = vector.broadcast %19 : vector<1x64xf32> to vector<128x64xf32>
    %21 = arith.addf %18, %20 : vector<128x64xf32>
    %cst = arith.constant 0.000000e+00 : f32
    %22 = vector.broadcast %cst : f32 to vector<128x64xf32>
    %23 = arith.maximumf %21, %22 : vector<128x64xf32>
    %c0_5 = arith.constant 0 : index
    %c0_6 = arith.constant 0 : index
    %24 = vector.load %arg2[%c0_5, %c0_6] : memref<64x128xf32, #tpu.memory_space<vmem>>, vector<64x128xf32>
    %cst_7 = arith.constant dense<0.000000e+00> : vector<128x128xf32>
    %25 = tpu.matmul %23, %24, %cst_7 {dimension_numbers = #tpu.dot_dimension_numbers<[1], [0], [0], [1], [0, 0, 1, 1], [], []>, precision = #tpu.contract_precision<fp32>} : vector<128x64xf32>, vector<64x128xf32>, vector<128x128xf32> -> vector<128x128xf32>
    %c1 = arith.constant 1 : index
    %c0_8 = arith.constant 0 : index
    %26 = vector.load %arg4[%c1, %c0_8] : memref<3x256xf32, #tpu.memory_space<vmem>>, vector<1x128xf32>
    %27 = vector.broadcast %26 : vector<1x128xf32> to vector<128x128xf32>
    %28 = arith.addf %25, %27 : vector<128x128xf32>
    %cst_9 = arith.constant 0.000000e+00 : f32
    %29 = vector.broadcast %cst_9 : f32 to vector<128x128xf32>
    %30 = arith.maximumf %28, %29 : vector<128x128xf32>
    %c0_10 = arith.constant 0 : index
    %c0_11 = arith.constant 0 : index
    %31 = vector.load %arg3[%c0_10, %c0_11] : memref<128x256xf32, #tpu.memory_space<vmem>>, vector<128x256xf32>
    %cst_12 = arith.constant dense<0.000000e+00> : vector<128x256xf32>
    %32 = tpu.matmul %30, %31, %cst_12 {dimension_numbers = #tpu.dot_dimension_numbers<[1], [0], [0], [1], [0, 0, 1, 1], [], []>, precision = #tpu.contract_precision<fp32>} : vector<128x128xf32>, vector<128x256xf32>, vector<128x256xf32> -> vector<128x256xf32>
    %c2 = arith.constant 2 : index
    %c0_13 = arith.constant 0 : index
    %33 = vector.load %arg4[%c2, %c0_13] : memref<3x256xf32, #tpu.memory_space<vmem>>, vector<1x256xf32>
    %34 = vector.broadcast %33 : vector<1x256xf32> to vector<128x256xf32>
    %35 = arith.addf %32, %34 : vector<128x256xf32>
    %36 = vector.extract_strided_slice %35 {offsets = [0, 0], sizes = [64, 256], strides = [1, 1]} : vector<128x256xf32> to vector<64x256xf32>
    %cst_14 = arith.constant dense<0xFF800000> : vector<256xf32>
    %37 = vector.multi_reduction <maximumf>, %36, %cst_14 [0] : vector<64x256xf32> to vector<256xf32>
    %38 = vector.shape_cast %37 : vector<256xf32> to vector<1x256xf32>
    %39 = vector.extract_strided_slice %35 {offsets = [64, 0], sizes = [64, 256], strides = [1, 1]} : vector<128x256xf32> to vector<64x256xf32>
    %cst_15 = arith.constant dense<0xFF800000> : vector<256xf32>
    %40 = vector.multi_reduction <maximumf>, %39, %cst_15 [0] : vector<64x256xf32> to vector<256xf32>
    %41 = vector.shape_cast %40 : vector<256xf32> to vector<1x256xf32>
    %42 = tpu.concatenate %38, %41 in 0 : vector<1x256xf32>, vector<1x256xf32> -> vector<2x256xf32>
    %c0_16 = arith.constant 0 : index
    %c0_17 = arith.constant 0 : index
    %43 = vector.load %arg5[%c0_16, %c0_17] : memref<2x256xf32, #tpu.memory_space<vmem>>, vector<2x256xf32>
    tpu.vector_store %arg5[%c0_16, %c0_17], %42 {strides = array<i32>} : memref<2x256xf32, #tpu.memory_space<vmem>>, vector<2x256xf32>,
    return
  }
}

</mosaic_0001>

<llo_original>
// kernel: tpu_custom_call.1
$region0: #{tpu_custom_call.1}
  #allocation0 [shape = 'u32[]', space=smem, size = 0x4, offset = 0x4, fixed_abs, tag = 'smem constant byte address 0x4 - core index']
  #allocation1 [shape = 'u32[144,128]{1,0:T(1,128)}', space=vmem, size = 0x12000, scoped, tag = 'internal scratch']
  %s0 = inlined_call_operand.vmem [shape: f32[128,3], index: 0, kind: input, shape index: {}]
  %s1 = inlined_call_operand.vmem [shape: f32[3,64], index: 1, kind: input, shape index: {}]
  %s2 = inlined_call_operand.vmem [shape: f32[64,128], index: 2, kind: input, shape index: {}]
  %s3 = inlined_call_operand.hbm [shape: f32[128,256], index: 3, kind: input, shape index: {}]
  %s4 = inlined_call_operand.vmem [shape: f32[3,256], index: 4, kind: input, shape index: {}]
  %s5 = inlined_call_operand.hbm [shape: f32[2,256], index: 5, kind: output, shape index: {}]
  %s6 = sld [smem:[#allocation0]]
  $region34: #{tpu_custom_call.1} parent=0
    _
  %s8 = ssub.s32 1, %s6
  %s9 = scalar_select 0, %s8, %s6
  $region1: #{tpu_custom_call.1} parent=0
    #allocation2 [shape = 'u8[131072]{0}', space=vmem, size = 0x20000, scoped, tag = 'input window, operand 3, single buffered']
    #allocation3 [shape = 's32[1]{0}', space=sflag, size = 0x4, scoped, tag = 'scoped memory for tpu_custom_call.1']
    #allocation4 [shape = 's32[1]{0}', space=sflag, size = 0x4, scoped, tag = 'scoped memory for tpu_custom_call.1']
    #allocation5 [shape = 'u8[2048]{0}', space=vmem, size = 0x800, scoped, tag = 'output window, operand 0, single buffered']
    %10 = vsyncpa [#allocation3], 0
    %11 = vsyncpa [#allocation4], 0
    // Predicated region
    $region2: #{tpu_custom_call.1} parent=1 // pred_check
      _
    $region3: #{tpu_custom_call.1} parent=1 // pred_check_branch
      %13 = sbr.rel (0) target = $region5
    $region4: #{tpu_custom_call.1} parent=1 // pred_region
      _
    $region5: #{tpu_custom_call.1} parent=1 // pred_fallthru
      _
    // Predicated region
    $region6: #{tpu_custom_call.1} parent=1 // pred_check
      _
    $region7: #{tpu_custom_call.1} parent=1 // pred_check_branch
      %15 = sbr.rel (0) target = $region9
    $region8: #{tpu_custom_call.1} parent=1 // pred_region
      _
    $region9: #{tpu_custom_call.1} parent=1 // pred_fallthru
      _
    // Predicated region
    $region10: #{tpu_custom_call.1} parent=1 // pred_check
      _
    $region11: #{tpu_custom_call.1} parent=1 // pred_check_branch
      %17 = sbr.rel (0) target = $region13
    $region12: #{tpu_custom_call.1} parent=1 // pred_region
      _
    $region13: #{tpu_custom_call.1} parent=1 // pred_fallthru
      _
    // Predicated region
    $region14: #{tpu_custom_call.1} parent=1 // pred_check
      _
    $region15: #{tpu_custom_call.1} parent=1 // pred_check_branch
      %19 = sbr.rel (0) target = $region17
    $region16: #{tpu_custom_call.1} parent=1 // pred_region
      %s21 = ssub.s32 4096, 4096
      %22 = vsyncadd [#allocation3], %s21
      %s23 = sshll.u32 [#allocation2], 4
      %s24 = int_to_ptr.vmem [resolvable:$true] %s23
      %29 = dma.hbm_to_vmem [thread:$0]  %s3, 4096, %s24, [#allocation3], 256, 256, 16
    $region17: #{tpu_custom_call.1} parent=1 // pred_fallthru
      _
    // Predicated region
    $region18: #{tpu_custom_call.1} parent=1 // pred_check
      _
    $region19: #{tpu_custom_call.1} parent=1 // pred_check_branch
      %31 = sbr.rel (0) target = $region21
    $region20: #{tpu_custom_call.1} parent=1 // pred_region
      _
    $region21: #{tpu_custom_call.1} parent=1 // pred_fallthru
      _
    // Predicated region
    $region22: #{tpu_custom_call.1} parent=1 // pred_check
      _
    $region23: #{tpu_custom_call.1} parent=1 // pred_check_branch
      %33 = sbr.rel (0) target = $region25
    $region24: #{tpu_custom_call.1} parent=1 // pred_region
      %34 = dma.done [#allocation3], 4096
    $region25: #{tpu_custom_call.1} parent=1 // pred_fallthru
      _
    %v35 = vld [vmem:[%s0] sm:$0xff]
    %v36 = vld [vmem:[%s0 + $0x8] sm:$0xff]
    %v37 = vld [vmem:[%s0 + $0x10] sm:$0xff]
    %v38 = vld [vmem:[%s0 + $0x18] sm:$0xff]
    %v39 = vld [vmem:[%s0 + $0x20] sm:$0xff]
    %v40 = vld [vmem:[%s0 + $0x28] sm:$0xff]
    %v41 = vld [vmem:[%s0 + $0x30] sm:$0xff]
    %v42 = vld [vmem:[%s0 + $0x38] sm:$0xff]
    %v43 = vld [vmem:[%s0 + $0x40] sm:$0xff]
    %v44 = vld [vmem:[%s0 + $0x48] sm:$0xff]
    %v45 = vld [vmem:[%s0 + $0x50] sm:$0xff]
    %v46 = vld [vmem:[%s0 + $0x58] sm:$0xff]
    %v47 = vld [vmem:[%s0 + $0x60] sm:$0xff]
    %v48 = vld [vmem:[%s0 + $0x68] sm:$0xff]
    %v49 = vld [vmem:[%s0 + $0x70] sm:$0xff]
    %v50 = vld [vmem:[%s0 + $0x78] sm:$0xff]
    %v51 = vld [vmem:[%s1] sm:$0x7]
    %53 = vset.pattern.permute.xlu0 0
    %54 = vperm.xlu0 %53, %v35
    %v55 = vpop.permute.xlu0 %54
    %58 = vset.pattern.permute.xlu0 0
    %59 = vperm.xlu0 %58, %v36
    %v60 = vpop.permute.xlu0 %59
    %63 = vset.pattern.permute.xlu0 0
    %64 = vperm.xlu0 %63, %v37
    %v65 = vpop.permute.xlu0 %64
    %68 = vset.pattern.permute.xlu0 0
    %69 = vperm.xlu0 %68, %v38
    %v70 = vpop.permute.xlu0 %69
    %73 = vset.pattern.permute.xlu0 0
    %74 = vperm.xlu0 %73, %v39
    %v75 = vpop.permute.xlu0 %74
    %78 = vset.pattern.permute.xlu0 0
    %79 = vperm.xlu0 %78, %v40
    %v80 = vpop.permute.xlu0 %79
    %83 = vset.pattern.permute.xlu0 0
    %84 = vperm.xlu0 %83, %v41
    %v85 = vpop.permute.xlu0 %84
    %88 = vset.pattern.permute.xlu0 0
    %89 = vperm.xlu0 %88, %v42
    %v90 = vpop.permute.xlu0 %89
    %93 = vset.pattern.permute.xlu0 0
    %94 = vperm.xlu0 %93, %v43
    %v95 = vpop.permute.xlu0 %94
    %98 = vset.pattern.permute.xlu0 0
    %99 = vperm.xlu0 %98, %v44
    %v100 = vpop.permute.xlu0 %99
    %103 = vset.pattern.permute.xlu0 0
    %104 = vperm.xlu0 %103, %v45
    %v105 = vpop.permute.xlu0 %104
    %108 = vset.pattern.permute.xlu0 0
    %109 = vperm.xlu0 %108, %v46
    %v110 = vpop.permute.xlu0 %109
    %113 = vset.pattern.permute.xlu0 0
    %114 = vperm.xlu0 %113, %v47
    %v115 = vpop.permute.xlu0 %114
    %118 = vset.pattern.permute.xlu0 0
    %119 = vperm.xlu0 %118, %v48
    %v120 = vpop.permute.xlu0 %119
    %123 = vset.pattern.permute.xlu0 0
    %124 = vperm.xlu0 %123, %v49
    %v125 = vpop.permute.xlu0 %124
    %128 = vset.pattern.permute.xlu0 0
    %129 = vperm.xlu0 %128, %v50
    %v130 = vpop.permute.xlu0 %129
    %v132 = vlaneseq
    %v133 = vshrl.u32 %v132, 7
    %v134 = vsub.s32 0, %v133
    %v135 = vrot.slane %v51, %v134
    %v136 = vmul.f32 %v55, %v135
    %v137 = vmul.f32 %v60, %v135
    %v138 = vmul.f32 %v65, %v135
    %v139 = vmul.f32 %v70, %v135
    %v140 = vmul.f32 %v75, %v135
    %v141 = vmul.f32 %v80, %v135
    %v142 = vmul.f32 %v85, %v135
    %v143 = vmul.f32 %v90, %v135
    %v144 = vmul.f32 %v95, %v135
    %v145 = vmul.f32 %v100, %v135
    %v146 = vmul.f32 %v105, %v135
    %v147 = vmul.f32 %v110, %v135
    %v148 = vmul.f32 %v115, %v135
    %v149 = vmul.f32 %v120, %v135
    %v150 = vmul.f32 %v125, %v135
    %v151 = vmul.f32 %v130, %v135
    %152 = vset.pattern.permute.xlu0 1
    %153 = vperm.xlu0 %152, %v35
    %v154 = vpop.permute.xlu0 %153
    %156 = vset.pattern.permute.xlu0 1
    %157 = vperm.xlu0 %156, %v36
    %v158 = vpop.permute.xlu0 %157
    %160 = vset.pattern.permute.xlu0 1
    %161 = vperm.xlu0 %160, %v37
    %v162 = vpop.permute.xlu0 %161
    %164 = vset.pattern.permute.xlu0 1
    %165 = vperm.xlu0 %164, %v38
    %v166 = vpop.permute.xlu0 %165
    %168 = vset.pattern.permute.xlu0 1
    %169 = vperm.xlu0 %168, %v39
    %v170 = vpop.permute.xlu0 %169
    %172 = vset.pattern.permute.xlu0 1
    %173 = vperm.xlu0 %172, %v40
    %v174 = vpop.permute.xlu0 %173
    %176 = vset.pattern.permute.xlu0 1
    %177 = vperm.xlu0 %176, %v41
    %v178 = vpop.permute.xlu0 %177
    %180 = vset.pattern.permute.xlu0 1
    %181 = vperm.xlu0 %180, %v42
    %v182 = vpop.permute.xlu0 %181
    %184 = vset.pattern.permute.xlu0 1
    %185 = vperm.xlu0 %184, %v43
    %v186 = vpop.permute.xlu0 %185
    %188 = vset.pattern.permute.xlu0 1
    %189 = vperm.xlu0 %188, %v44
    %v190 = vpop.permute.xlu0 %189
    %192 = vset.pattern.permute.xlu0 1
    %193 = vperm.xlu0 %192, %v45
    %v194 = vpop.permute.xlu0 %193
    %196 = vset.pattern.permute.xlu0 1
    %197 = vperm.xlu0 %196, %v46
    %v198 = vpop.permute.xlu0 %197
    %200 = vset.pattern.permute.xlu0 1
    %201 = vperm.xlu0 %200, %v47
    %v202 = vpop.permute.xlu0 %201
    %204 = vset.pattern.permute.xlu0 1
    %205 = vperm.xlu0 %204, %v48
    %v206 = vpop.permute.xlu0 %205
    %208 = vset.pattern.permute.xlu0 1
    %209 = vperm.xlu0 %208, %v49
    %v210 = vpop.permute.xlu0 %209
    %212 = vset.pattern.permute.xlu0 1
    %213 = vperm.xlu0 %212, %v50
    %v214 = vpop.permute.xlu0 %213
    %v216 = vlaneseq
    %v217 = vshrl.u32 %v216, 7
    %v218 = vsub.s32 1, %v217
    %v219 = vrot.slane %v51, %v218
    %v220 = vmul.f32 %v154, %v219
    %v221 = vmul.f32 %v158, %v219
    %v222 = vmul.f32 %v162, %v219
    %v223 = vmul.f32 %v166, %v219
    %v224 = vmul.f32 %v170, %v219
    %v225 = vmul.f32 %v174, %v219
    %v226 = vmul.f32 %v178, %v219
    %v227 = vmul.f32 %v182, %v219
    %v228 = vmul.f32 %v186, %v219
    %v229 = vmul.f32 %v190, %v219
    %v230 = vmul.f32 %v194, %v219
    %v231 = vmul.f32 %v198, %v219
    %v232 = vmul.f32 %v202, %v219
    %v233 = vmul.f32 %v206, %v219
    %v234 = vmul.f32 %v210, %v219
    %v235 = vmul.f32 %v214, %v219
    %v236 = vadd.f32 %v136, %v220
    %v237 = vadd.f32 %v137, %v221
    %v238 = vadd.f32 %v138, %v222
    %v239 = vadd.f32 %v139, %v223
    %v240 = vadd.f32 %v140, %v224
    %v241 = vadd.f32 %v141, %v225
    %v242 = vadd.f32 %v142, %v226
    %v243 = vadd.f32 %v143, %v227
    %v244 = vadd.f32 %v144, %v228
    %v245 = vadd.f32 %v145, %v229
    %v246 = vadd.f32 %v146, %v230
    %v247 = vadd.f32 %v147, %v231
    %v248 = vadd.f32 %v148, %v232
    %v249 = vadd.f32 %v149, %v233
    %v250 = vadd.f32 %v150, %v234
    %v251 = vadd.f32 %v151, %v235
    %252 = vset.pattern.permute.xlu0 2
    %253 = vperm.xlu0 %252, %v35
    %v254 = vpop.permute.xlu0 %253
    %256 = vset.pattern.permute.xlu0 2
    %257 = vperm.xlu0 %256, %v36
    %v258 = vpop.permute.xlu0 %257
    %260 = vset.pattern.permute.xlu0 2
    %261 = vperm.xlu0 %260, %v37
    %v262 = vpop.permute.xlu0 %261
    %264 = vset.pattern.permute.xlu0 2
    %265 = vperm.xlu0 %264, %v38
    %v266 = vpop.permute.xlu0 %265
    %268 = vset.pattern.permute.xlu0 2
    %269 = vperm.xlu0 %268, %v39
    %v270 = vpop.permute.xlu0 %269
    %272 = vset.pattern.permute.xlu0 2
    %273 = vperm.xlu0 %272, %v40
    %v274 = vpop.permute.xlu0 %273
    %276 = vset.pattern.permute.xlu0 2
    %277 = vperm.xlu0 %276, %v41
    %v278 = vpop.permute.xlu0 %277
    %280 = vset.pattern.permute.xlu0 2
    %281 = vperm.xlu0 %280, %v42
    %v282 = vpop.permute.xlu0 %281
    %284 = vset.pattern.permute.xlu0 2
    %285 = vperm.xlu0 %284, %v43
    %v286 = vpop.permute.xlu0 %285
    %288 = vset.pattern.permute.xlu0 2
    %289 = vperm.xlu0 %288, %v44
    %v290 = vpop.permute.xlu0 %289
    %292 = vset.pattern.permute.xlu0 2
    %293 = vperm.xlu0 %292, %v45
    %v294 = vpop.permute.xlu0 %293
    %296 = vset.pattern.permute.xlu0 2
    %297 = vperm.xlu0 %296, %v46
    %v298 = vpop.permute.xlu0 %297
    %300 = vset.pattern.permute.xlu0 2
    %301 = vperm.xlu0 %300, %v47
    %v302 = vpop.permute.xlu0 %301
    %304 = vset.pattern.permute.xlu0 2
    %305 = vperm.xlu0 %304, %v48
    %v306 = vpop.permute.xlu0 %305
    %308 = vset.pattern.permute.xlu0 2
    %309 = vperm.xlu0 %308, %v49
    %v310 = vpop.permute.xlu0 %309
    %312 = vset.pattern.permute.xlu0 2
    %313 = vperm.xlu0 %312, %v50
    %v314 = vpop.permute.xlu0 %313
    %v316 = vlaneseq
    %v317 = vshrl.u32 %v316, 7
    %v318 = vsub.s32 2, %v317
    %v319 = vrot.slane %v51, %v318
    %v320 = vmul.f32 %v254, %v319
    %v321 = vmul.f32 %v258, %v319
    %v322 = vmul.f32 %v262, %v319
    %v323 = vmul.f32 %v266, %v319
    %v324 = vmul.f32 %v270, %v319
    %v325 = vmul.f32 %v274, %v319
    %v326 = vmul.f32 %v278, %v319
    %v327 = vmul.f32 %v282, %v319
    %v328 = vmul.f32 %v286, %v319
    %v329 = vmul.f32 %v290, %v319
    %v330 = vmul.f32 %v294, %v319
    %v331 = vmul.f32 %v298, %v319
    %v332 = vmul.f32 %v302, %v319
    %v333 = vmul.f32 %v306, %v319
    %v334 = vmul.f32 %v310, %v319
    %v335 = vmul.f32 %v314, %v319
    %v336 = vadd.f32 %v236, %v320
    %v337 = vadd.f32 %v237, %v321
    %v338 = vadd.f32 %v238, %v322
    %v339 = vadd.f32 %v239, %v323
    %v340 = vadd.f32 %v240, %v324
    %v341 = vadd.f32 %v241, %v325
    %v342 = vadd.f32 %v242, %v326
    %v343 = vadd.f32 %v243, %v327
    %v344 = vadd.f32 %v244, %v328
    %v345 = vadd.f32 %v245, %v329
    %v346 = vadd.f32 %v246, %v330
    %v347 = vadd.f32 %v247, %v331
    %v348 = vadd.f32 %v248, %v332
    %v349 = vadd.f32 %v249, %v333
    %v350 = vadd.f32 %v250, %v334
    %v351 = vadd.f32 %v251, %v335
    %v352 = vld [vmem:[%s4] sm:$0x1]
    %v353 = vlaneseq
    %v354 = vshrl.u32 %v353, 7
    %v355 = vsub.s32 0, %v354
    %v356 = vrot.slane %v352, %v355
    %v357 = vadd.f32 %v336, %v356
    %v358 = vadd.f32 %v337, %v356
    %v359 = vadd.f32 %v338, %v356
    %v360 = vadd.f32 %v339, %v356
    %v361 = vadd.f32 %v340, %v356
    %v362 = vadd.f32 %v341, %v356
    %v363 = vadd.f32 %v342, %v356
    %v364 = vadd.f32 %v343, %v356
    %v365 = vadd.f32 %v344, %v356
    %v366 = vadd.f32 %v345, %v356
    %v367 = vadd.f32 %v346, %v356
    %v368 = vadd.f32 %v347, %v356
    %v369 = vadd.f32 %v348, %v356
    %v370 = vadd.f32 %v349, %v356
    %v371 = vadd.f32 %v350, %v356
    %v372 = vadd.f32 %v351, %v356
    %v373 = vmax.f32 %v357, 0.0
    %v374 = vmax.f32 %v358, 0.0
    %v375 = vmax.f32 %v359, 0.0
    %v376 = vmax.f32 %v360, 0.0
    %v377 = vmax.f32 %v361, 0.0
    %v378 = vmax.f32 %v362, 0.0
    %v379 = vmax.f32 %v363, 0.0
    %v380 = vmax.f32 %v364, 0.0
    %v381 = vmax.f32 %v365, 0.0
    %v382 = vmax.f32 %v366, 0.0
    %v383 = vmax.f32 %v367, 0.0
    %v384 = vmax.f32 %v368, 0.0
    %v385 = vmax.f32 %v369, 0.0
    %v386 = vmax.f32 %v370, 0.0
    %v387 = vmax.f32 %v371, 0.0
    %v388 = vmax.f32 %v372, 0.0
    %v389 = vld [vmem:[%s2] sm:$0xff]
    %v390 = vld [vmem:[%s2 + $0x8] sm:$0xff]
    %v391 = vld [vmem:[%s2 + $0x10] sm:$0xff]
    %v392 = vld [vmem:[%s2 + $0x18] sm:$0xff]
    %v393 = vld [vmem:[%s2 + $0x20] sm:$0xff]
    %v394 = vld [vmem:[%s2 + $0x28] sm:$0xff]
    %v395 = vld [vmem:[%s2 + $0x30] sm:$0xff]
    %v396 = vld [vmem:[%s2 + $0x38] sm:$0xff]
    %v397 = vld [vmem:[%s4 + $0x1] sm:$0x1]
    %v398 = vlaneseq
    %v399 = vshrl.u32 %v398, 7
    %v400 = vsub.s32 0, %v399
    %v401 = vrot.slane %v397, %v400
    %vm402 = vcmask 523264
    %v404 = vsel %vm402, %v373, 0
    %v407 = vsel %vm402, %v374, 0
    %v410 = vsel %vm402, %v375, 0
    %v413 = vsel %vm402, %v376, 0
    %v416 = vsel %vm402, %v377, 0
    %v419 = vsel %vm402, %v378, 0
    %v422 = vsel %vm402, %v379, 0
    %v425 = vsel %vm402, %v380, 0
    %v428 = vsel %vm402, %v381, 0
    %v431 = vsel %vm402, %v382, 0
    %v434 = vsel %vm402, %v383, 0
    %v437 = vsel %vm402, %v384, 0
    %v440 = vsel %vm402, %v385, 0
    %v443 = vsel %vm402, %v386, 0
    %v446 = vsel %vm402, %v387, 0
    %v449 = vsel %vm402, %v388, 0
    %451 = vmatprep.subr.mxu0 0.0
    %452 = vmatpush1.msra.mxu0 0.0
    %453 = vmatprep.subr.mxu0 0.0
    %454 = vmatpush1.msra.mxu0 0.0
    %455 = vmatprep.subr.mxu0 0.0
    %456 = vmatpush1.msra.mxu0 0.0
    %457 = vmatprep.subr.mxu0 0.0
    %458 = vmatpush1.msra.mxu0 0.0
    %459 = vmatprep.subr.mxu0 0.0
    %460 = vmatpush1.msra.mxu0 0.0
    %461 = vmatprep.subr.mxu0 0.0
    %462 = vmatpush1.msra.mxu0 0.0
    %463 = vmatprep.subr.mxu0 0.0
    %464 = vmatpush1.msra.mxu0 0.0
    %465 = vmatprep.subr.mxu0 0.0
    %466 = vmatpush1.msra.mxu0 0.0
    %467 = vmatprep.subr.mxu0 0.0
    %v468 = vand.u32 %v396, 4294901760
    %469 = vmatpush1.msra.mxu0 %v468
    %470 = vmatprep.subr.mxu0 0.0
    %v471 = vand.u32 %v395, 4294901760
    %472 = vmatpush1.msra.mxu0 %v471
    %473 = vmatprep.subr.mxu0 0.0
    %v474 = vand.u32 %v394, 4294901760
    %475 = vmatpush1.msra.mxu0 %v474
    %476 = vmatprep.subr.mxu0 0.0
    %v477 = vand.u32 %v393, 4294901760
    %478 = vmatpush1.msra.mxu0 %v477
    %479 = vmatprep.subr.mxu0 0.0
    %v480 = vand.u32 %v392, 4294901760
    %481 = vmatpush1.msra.mxu0 %v480
    %482 = vmatprep.subr.mxu0 0.0
    %v483 = vand.u32 %v391, 4294901760
    %484 = vmatpush1.msra.mxu0 %v483
    %485 = vmatprep.subr.mxu0 0.0
    %v486 = vand.u32 %v390, 4294901760
    %487 = vmatpush1.msra.mxu0 %v486
    %488 = vmatprep.subr.mxu0 0.0
    %v489 = vand.u32 %v389, 4294901760
    %490 = vmatpush1.msra.mxu0 %v489
    %491 = vmatprep.subr.mxu0 0.0
    %492 = vmatpush2.msra.mxu0 0.0
    %493 = vmatprep.subr.mxu0 0.0
    %494 = vmatpush2.msra.mxu0 0.0
    %495 = vmatprep.subr.mxu0 0.0
    %496 = vmatpush2.msra.mxu0 0.0
    %497 = vmatprep.subr.mxu0 0.0
    %498 = vmatpush2.msra.mxu0 0.0
    %499 = vmatprep.subr.mxu0 0.0
    %500 = vmatpush2.msra.mxu0 0.0
    %501 = vmatprep.subr.mxu0 0.0
    %502 = vmatpush2.msra.mxu0 0.0
    %503 = vmatprep.subr.mxu0 0.0
    %504 = vmatpush2.msra.mxu0 0.0
    %505 = vmatprep.subr.mxu0 0.0
    %506 = vmatpush2.msra.mxu0 0.0
    %507 = vmatprep.subr.mxu0 0.0
    %508 = vmatpush2.msra.mxu0 0.0
    %509 = vmatprep.subr.mxu0 0.0
    %510 = vmatpush2.msra.mxu0 0.0
    %511 = vmatprep.subr.mxu0 0.0
    %512 = vmatpush2.msra.mxu0 0.0
    %513 = vmatprep.subr.mxu0 0.0
    %514 = vmatpush2.msra.mxu0 0.0
    %515 = vmatprep.subr.mxu0 0.0
    %516 = vmatpush2.msra.mxu0 0.0
    %517 = vmatprep.subr.mxu0 0.0
    %518 = vmatpush2.msra.mxu0 0.0
    %519 = vmatprep.subr.mxu0 0.0
    %520 = vmatpush2.msra.mxu0 0.0
    %521 = vmatprep.subr.mxu0 0.0
    %522 = vmatpush2.msra.mxu0 0.0
    %523 = vmatprep.mubr.f32.mxu0 0.0
    %v524 = vand.u32 %v404, 4294901760
    %v525 = vsub.f32 %v404, %v524
    %v526 = vand.u32 %v525, 4294901760
    %v527 = vsub.f32 %v525, %v526
    %v528 = vand.u32 %v527, 4294901760
    %529 = vmatmul.mubr.f32.gmra.mxu0 %v528
    %v530 = vpop.f32.mrf.mxu0
    %v531 = vadd.f32 %v401, %v530
    %v532 = vpop.f32.mrf.mxu0
    %533 = vmatprep.mubr.f32.mxu0 0.0
    %v534 = vand.u32 %v407, 4294901760
    %v535 = vsub.f32 %v407, %v534
    %v536 = vand.u32 %v535, 4294901760
    %v537 = vsub.f32 %v535, %v536
    %v538 = vand.u32 %v537, 4294901760
    %539 = vmatmul.mubr.f32.gmra.mxu0 %v538
    %v540 = vpop.f32.mrf.mxu0
    %v541 = vadd.f32 %v401, %v540
    %v542 = vpop.f32.mrf.mxu0
    %543 = vmatprep.mubr.f32.mxu0 0.0
    %v544 = vand.u32 %v410, 4294901760
    %v545 = vsub.f32 %v410, %v544
    %v546 = vand.u32 %v545, 4294901760
    %v547 = vsub.f32 %v545, %v546
    %v548 = vand.u32 %v547, 4294901760
    %549 = vmatmul.mubr.f32.gmra.mxu0 %v548
    %v550 = vpop.f32.mrf.mxu0
    %v551 = vadd.f32 %v401, %v550
    %v552 = vpop.f32.mrf.mxu0
    %553 = vmatprep.mubr.f32.mxu0 0.0
    %v554 = vand.u32 %v413, 4294901760
    %v555 = vsub.f32 %v413, %v554
    %v556 = vand.u32 %v555, 4294901760
    %v557 = vsub.f32 %v555, %v556
    %v558 = vand.u32 %v557, 4294901760
    %559 = vmatmul.mubr.f32.gmra.mxu0 %v558
    %v560 = vpop.f32.mrf.mxu0
    %v561 = vadd.f32 %v401, %v560
    %v562 = vpop.f32.mrf.mxu0
    %563 = vmatprep.mubr.f32.mxu0 0.0
    %v564 = vand.u32 %v416, 4294901760
    %v565 = vsub.f32 %v416, %v564
    %v566 = vand.u32 %v565, 4294901760
    %v567 = vsub.f32 %v565, %v566
    %v568 = vand.u32 %v567, 4294901760
    %569 = vmatmul.mubr.f32.gmra.mxu0 %v568
    %v570 = vpop.f32.mrf.mxu0
    %v571 = vadd.f32 %v401, %v570
    %v572 = vpop.f32.mrf.mxu0
    %573 = vmatprep.mubr.f32.mxu0 0.0
    %v574 = vand.u32 %v419, 4294901760
    %v575 = vsub.f32 %v419, %v574
    %v576 = vand.u32 %v575, 4294901760
    %v577 = vsub.f32 %v575, %v576
    %v578 = vand.u32 %v577, 4294901760
    %579 = vmatmul.mubr.f32.gmra.mxu0 %v578
    %v580 = vpop.f32.mrf.mxu0
    %v581 = vadd.f32 %v401, %v580
    %v582 = vpop.f32.mrf.mxu0
    %583 = vmatprep.mubr.f32.mxu0 0.0
    %v584 = vand.u32 %v422, 4294901760
    %v585 = vsub.f32 %v422, %v584
    %v586 = vand.u32 %v585, 4294901760
    %v587 = vsub.f32 %v585, %v586
    %v588 = vand.u32 %v587, 4294901760
    %589 = vmatmul.mubr.f32.gmra.mxu0 %v588
    %v590 = vpop.f32.mrf.mxu0
    %v591 = vadd.f32 %v401, %v590
    %v592 = vpop.f32.mrf.mxu0
    %593 = vmatprep.mubr.f32.mxu0 0.0
    %v594 = vand.u32 %v425, 4294901760
    %v595 = vsub.f32 %v425, %v594
    %v596 = vand.u32 %v595, 4294901760
    %v597 = vsub.f32 %v595, %v596
    %v598 = vand.u32 %v597, 4294901760
    %599 = vmatmul.mubr.f32.gmra.mxu0 %v598
    %v600 = vpop.f32.mrf.mxu0
    %v601 = vadd.f32 %v401, %v600
    %v602 = vpop.f32.mrf.mxu0
    %603 = vmatprep.mubr.f32.mxu0 0.0
    %v604 = vand.u32 %v428, 4294901760
    %v605 = vsub.f32 %v428, %v604
    %v606 = vand.u32 %v605, 4294901760
    %v607 = vsub.f32 %v605, %v606
    %v608 = vand.u32 %v607, 4294901760
    %609 = vmatmul.mubr.f32.gmra.mxu0 %v608
    %v610 = vpop.f32.mrf.mxu0
    %v611 = vadd.f32 %v401, %v610
    %v612 = vpop.f32.mrf.mxu0
    %613 = vmatprep.mubr.f32.mxu0 0.0
    %v614 = vand.u32 %v431, 4294901760
    %v615 = vsub.f32 %v431, %v614
    %v616 = vand.u32 %v615, 4294901760
    %v617 = vsub.f32 %v615, %v616
    %v618 = vand.u32 %v617, 4294901760
    %619 = vmatmul.mubr.f32.gmra.mxu0 %v618
    %v620 = vpop.f32.mrf.mxu0
    %v621 = vadd.f32 %v401, %v620
    %v622 = vpop.f32.mrf.mxu0
    %623 = vmatprep.mubr.f32.mxu0 0.0
    %v624 = vand.u32 %v434, 4294901760
    %v625 = vsub.f32 %v434, %v624
    %v626 = vand.u32 %v625, 4294901760
    %v627 = vsub.f32 %v625, %v626
    %v628 = vand.u32 %v627, 4294901760
    %629 = vmatmul.mubr.f32.gmra.mxu0 %v628
    %v630 = vpop.f32.mrf.mxu0
    %v631 = vadd.f32 %v401, %v630
    %v632 = vpop.f32.mrf.mxu0
    %633 = vmatprep.mubr.f32.mxu0 0.0
    %v634 = vand.u32 %v437, 4294901760
    %v635 = vsub.f32 %v437, %v634
    %v636 = vand.u32 %v635, 4294901760
    %v637 = vsub.f32 %v635, %v636
    %v638 = vand.u32 %v637, 4294901760
    %639 = vmatmul.mubr.f32.gmra.mxu0 %v638
    %v640 = vpop.f32.mrf.mxu0
    %v641 = vadd.f32 %v401, %v640
    %v642 = vpop.f32.mrf.mxu0
    %643 = vmatprep.mubr.f32.mxu0 0.0
    %v644 = vand.u32 %v440, 4294901760
    %v645 = vsub.f32 %v440, %v644
    %v646 = vand.u32 %v645, 4294901760
    %v647 = vsub.f32 %v645, %v646
    %v648 = vand.u32 %v647, 4294901760
    %649 = vmatmul.mubr.f32.gmra.mxu0 %v648
    %v650 = vpop.f32.mrf.mxu0
    %v651 = vadd.f32 %v401, %v650
    %v652 = vpop.f32.mrf.mxu0
    %653 = vmatprep.mubr.f32.mxu0 0.0
    %v654 = vand.u32 %v443, 4294901760
    %v655 = vsub.f32 %v443, %v654
    %v656 = vand.u32 %v655, 4294901760
    %v657 = vsub.f32 %v655, %v656
    %v658 = vand.u32 %v657, 4294901760
    %659 = vmatmul.mubr.f32.gmra.mxu0 %v658
    %v660 = vpop.f32.mrf.mxu0
    %v661 = vadd.f32 %v401, %v660
    %v662 = vpop.f32.mrf.mxu0
    %663 = vmatprep.mubr.f32.mxu0 0.0
    %v664 = vand.u32 %v446, 4294901760
    %v665 = vsub.f32 %v446, %v664
    %v666 = vand.u32 %v665, 4294901760
    %v667 = vsub.f32 %v665, %v666
    %v668 = vand.u32 %v667, 4294901760
    %669 = vmatmul.mubr.f32.gmra.mxu0 %v668
    %v670 = vpop.f32.mrf.mxu0
    %v671 = vadd.f32 %v401, %v670
    %v672 = vpop.f32.mrf.mxu0
    %673 = vmatprep.mubr.f32.mxu0 0.0
    %v674 = vand.u32 %v449, 4294901760
    %v675 = vsub.f32 %v449, %v674
    %v676 = vand.u32 %v675, 4294901760
    %v677 = vsub.f32 %v675, %v676
    %v678 = vand.u32 %v677, 4294901760
    %679 = vmatmul.mubr.f32.gmra.mxu0 %v678
    %v680 = vpop.f32.mrf.mxu0
    %v681 = vadd.f32 %v401, %v680
    %v682 = vpop.f32.mrf.mxu0
    %683 = vdwg.mxu0
    %684 = vmatprep.subr.mxu0 0.0
    %685 = vmatpush1.msra.mxu0 0.0
    %686 = vmatprep.subr.mxu0 0.0
    %687 = vmatpush1.msra.mxu0 0.0
    %688 = vmatprep.subr.mxu0 0.0
    %689 = vmatpush1.msra.mxu0 0.0
    %690 = vmatprep.subr.mxu0 0.0
    %691 = vmatpush1.msra.mxu0 0.0
    %692 = vmatprep.subr.mxu0 0.0
    %693 = vmatpush1.msra.mxu0 0.0
    %694 = vmatprep.subr.mxu0 0.0
    %695 = vmatpush1.msra.mxu0 0.0
    %696 = vmatprep.subr.mxu0 0.0
    %697 = vmatpush1.msra.mxu0 0.0
    %698 = vmatprep.subr.mxu0 0.0
    %699 = vmatpush1.msra.mxu0 0.0
    %700 = vmatprep.subr.mxu0 0.0
    %v701 = vand.u32 %v396, 4294901760
    %v702 = vsub.f32 %v396, %v701
    %v703 = vand.u32 %v702, 4294901760
    %v704 = vsub.f32 %v702, %v703
    %v705 = vand.u32 %v704, 4294901760
    %706 = vmatpush1.msra.mxu0 %v705
    %707 = vmatprep.subr.mxu0 0.0
    %v708 = vand.u32 %v395, 4294901760
    %v709 = vsub.f32 %v395, %v708
    %v710 = vand.u32 %v709, 4294901760
    %v711 = vsub.f32 %v709, %v710
    %v712 = vand.u32 %v711, 4294901760
    %713 = vmatpush1.msra.mxu0 %v712
    %714 = vmatprep.subr.mxu0 0.0
    %v715 = vand.u32 %v394, 4294901760
    %v716 = vsub.f32 %v394, %v715
    %v717 = vand.u32 %v716, 4294901760
    %v718 = vsub.f32 %v716, %v717
    %v719 = vand.u32 %v718, 4294901760
    %720 = vmatpush1.msra.mxu0 %v719
    %721 = vmatprep.subr.mxu0 0.0
    %v722 = vand.u32 %v393, 4294901760
    %v723 = vsub.f32 %v393, %v722
    %v724 = vand.u32 %v723, 4294901760
    %v725 = vsub.f32 %v723, %v724
    %v726 = vand.u32 %v725, 4294901760
    %727 = vmatpush1.msra.mxu0 %v726
    %728 = vmatprep.subr.mxu0 0.0
    %v729 = vand.u32 %v392, 4294901760
    %v730 = vsub.f32 %v392, %v729
    %v731 = vand.u32 %v730, 4294901760
    %v732 = vsub.f32 %v730, %v731
    %v733 = vand.u32 %v732, 4294901760
    %734 = vmatpush1.msra.mxu0 %v733
    %735 = vmatprep.subr.mxu0 0.0
    %v736 = vand.u32 %v391, 4294901760
    %v737 = vsub.f32 %v391, %v736
    %v738 = vand.u32 %v737, 4294901760
    %v739 = vsub.f32 %v737, %v738
    %v740 = vand.u32 %v739, 4294901760
    %741 = vmatpush1.msra.mxu0 %v740
    %742 = vmatprep.subr.mxu0 0.0
    %v743 = vand.u32 %v390, 4294901760
    %v744 = vsub.f32 %v390, %v743
    %v745 = vand.u32 %v744, 4294901760
    %v746 = vsub.f32 %v744, %v745
    %v747 = vand.u32 %v746, 4294901760
    %748 = vmatpush1.msra.mxu0 %v747
    %749 = vmatprep.subr.mxu0 0.0
    %v750 = vand.u32 %v389, 4294901760
    %v751 = vsub.f32 %v389, %v750
    %v752 = vand.u32 %v751, 4294901760
    %v753 = vsub.f32 %v751, %v752
    %v754 = vand.u32 %v753, 4294901760
    %755 = vmatpush1.msra.mxu0 %v754
    %756 = vmatprep.subr.mxu0 0.0
    %757 = vmatpush2.msra.mxu0 0.0
    %758 = vmatprep.subr.mxu0 0.0
    %759 = vmatpush2.msra.mxu0 0.0
    %760 = vmatprep.subr.mxu0 0.0
    %761 = vmatpush2.msra.mxu0 0.0
    %762 = vmatprep.subr.mxu0 0.0
    %763 = vmatpush2.msra.mxu0 0.0
    %764 = vmatprep.subr.mxu0 0.0
    %765 = vmatpush2.msra.mxu0 0.0
    %766 = vmatprep.subr.mxu0 0.0
    %767 = vmatpush2.msra.mxu0 0.0
    %768 = vmatprep.subr.mxu0 0.0
    %769 = vmatpush2.msra.mxu0 0.0
    %770 = vmatprep.subr.mxu0 0.0
    %771 = vmatpush2.msra.mxu0 0.0
    %772 = vmatprep.subr.mxu0 0.0
    %773 = vmatpush2.msra.mxu0 0.0
    %774 = vmatprep.subr.mxu0 0.0
    %775 = vmatpush2.msra.mxu0 0.0
    %776 = vmatprep.subr.mxu0 0.0
    %777 = vmatpush2.msra.mxu0 0.0
    %778 = vmatprep.subr.mxu0 0.0
    %779 = vmatpush2.msra.mxu0 0.0
    %780 = vmatprep.subr.mxu0 0.0
    %781 = vmatpush2.msra.mxu0 0.0
    %782 = vmatprep.subr.mxu0 0.0
    %783 = vmatpush2.msra.mxu0 0.0
    %784 = vmatprep.subr.mxu0 0.0
    %785 = vmatpush2.msra.mxu0 0.0
    %786 = vmatprep.subr.mxu0 0.0
    %787 = vmatpush2.msra.mxu0 0.0
    %788 = vmatprep.mubr.f32.mxu0 0.0
    %v789 = vand.u32 %v404, 4294901760
    %790 = vmatmul.mubr.f32.gmra.mxu0 %v789
    %v791 = vpop.f32.mrf.mxu0
    %v792 = vadd.f32 %v531, %v791
    %v793 = vpop.f32.mrf.mxu0
    %794 = vmatprep.mubr.f32.mxu0 0.0
    %v795 = vand.u32 %v407, 4294901760
    %796 = vmatmul.mubr.f32.gmra.mxu0 %v795
    %v797 = vpop.f32.mrf.mxu0
    %v798 = vadd.f32 %v541, %v797
    %v799 = vpop.f32.mrf.mxu0
    %800 = vmatprep.mubr.f32.mxu0 0.0
    %v801 = vand.u32 %v410, 4294901760
    %802 = vmatmul.mubr.f32.gmra.mxu0 %v801
    %v803 = vpop.f32.mrf.mxu0
    %v804 = vadd.f32 %v551, %v803
    %v805 = vpop.f32.mrf.mxu0
    %806 = vmatprep.mubr.f32.mxu0 0.0
    %v807 = vand.u32 %v413, 4294901760
    %808 = vmatmul.mubr.f32.gmra.mxu0 %v807
    %v809 = vpop.f32.mrf.mxu0
    %v810 = vadd.f32 %v561, %v809
    %v811 = vpop.f32.mrf.mxu0
    %812 = vmatprep.mubr.f32.mxu0 0.0
    %v813 = vand.u32 %v416, 4294901760
    %814 = vmatmul.mubr.f32.gmra.mxu0 %v813
    %v815 = vpop.f32.mrf.mxu0
    %v816 = vadd.f32 %v571, %v815
    %v817 = vpop.f32.mrf.mxu0
    %818 = vmatprep.mubr.f32.mxu0 0.0
    %v819 = vand.u32 %v419, 4294901760
    %820 = vmatmul.mubr.f32.gmra.mxu0 %v819
    %v821 = vpop.f32.mrf.mxu0
    %v822 = vadd.f32 %v581, %v821
    %v823 = vpop.f32.mrf.mxu0
    %824 = vmatprep.mubr.f32.mxu0 0.0
    %v825 = vand.u32 %v422, 4294901760
    %826 = vmatmul.mubr.f32.gmra.mxu0 %v825
    %v827 = vpop.f32.mrf.mxu0
    %v828 = vadd.f32 %v591, %v827
    %v829 = vpop.f32.mrf.mxu0
    %830 = vmatprep.mubr.f32.mxu0 0.0
    %v831 = vand.u32 %v425, 4294901760
    %832 = vmatmul.mubr.f32.gmra.mxu0 %v831
    %v833 = vpop.f32.mrf.mxu0
    %v834 = vadd.f32 %v601, %v833
    %v835 = vpop.f32.mrf.mxu0
    %836 = vmatprep.mubr.f32.mxu0 0.0
    %v837 = vand.u32 %v428, 4294901760
    %838 = vmatmul.mubr.f32.gmra.mxu0 %v837
    %v839 = vpop.f32.mrf.mxu0
    %v840 = vadd.f32 %v611, %v839
    %v841 = vpop.f32.mrf.mxu0
    %842 = vmatprep.mubr.f32.mxu0 0.0
    %v843 = vand.u32 %v431, 4294901760
    %844 = vmatmul.mubr.f32.gmra.mxu0 %v843
    %v845 = vpop.f32.mrf.mxu0
    %v846 = vadd.f32 %v621, %v845
    %v847 = vpop.f32.mrf.mxu0
    %848 = vmatprep.mubr.f32.mxu0 0.0
    %v849 = vand.u32 %v434, 4294901760
    %850 = vmatmul.mubr.f32.gmra.mxu0 %v849
    %v851 = vpop.f32.mrf.mxu0
    %v852 = vadd.f32 %v631, %v851
    %v853 = vpop.f32.mrf.mxu0
    %854 = vmatprep.mubr.f32.mxu0 0.0
    %v855 = vand.u32 %v437, 4294901760
    %856 = vmatmul.mubr.f32.gmra.mxu0 %v855
    %v857 = vpop.f32.mrf.mxu0
    %v858 = vadd.f32 %v641, %v857
    %v859 = vpop.f32.mrf.mxu0
    %860 = vmatprep.mubr.f32.mxu0 0.0
    %v861 = vand.u32 %v440, 4294901760
    %862 = vmatmul.mubr.f32.gmra.mxu0 %v861
    %v863 = vpop.f32.mrf.mxu0
    %v864 = vadd.f32 %v651, %v863
    %v865 = vpop.f32.mrf.mxu0
    %866 = vmatprep.mubr.f32.mxu0 0.0
    %v867 = vand.u32 %v443, 4294901760
    %868 = vmatmul.mubr.f32.gmra.mxu0 %v867
    %v869 = vpop.f32.mrf.mxu0
    %v870 = vadd.f32 %v661, %v869
    %v871 = vpop.f32.mrf.mxu0
    %872 = vmatprep.mubr.f32.mxu0 0.0
    %v873 = vand.u32 %v446, 4294901760
    %874 = vmatmul.mubr.f32.gmra.mxu0 %v873
    %v875 = vpop.f32.mrf.mxu0
    %v876 = vadd.f32 %v671, %v875
    %v877 = vpop.f32.mrf.mxu0
    %878 = vmatprep.mubr.f32.mxu0 0.0
    %v879 = vand.u32 %v449, 4294901760
    %880 = vmatmul.mubr.f32.gmra.mxu0 %v879
    %v881 = vpop.f32.mrf.mxu0
    %v882 = vadd.f32 %v681, %v881
    %v883 = vpop.f32.mrf.mxu0
    %884 = vdwg.mxu0
    %885 = vmatprep.subr.mxu0 0.0
    %886 = vmatpush1.msra.mxu0 0.0
    %887 = vmatprep.subr.mxu0 0.0
    %888 = vmatpush1.msra.mxu0 0.0
    %889 = vmatprep.subr.mxu0 0.0
    %890 = vmatpush1.msra.mxu0 0.0
    %891 = vmatprep.subr.mxu0 0.0
    %892 = vmatpush1.msra.mxu0 0.0
    %893 = vmatprep.subr.mxu0 0.0
    %894 = vmatpush1.msra.mxu0 0.0
    %895 = vmatprep.subr.mxu0 0.0
    %896 = vmatpush1.msra.mxu0 0.0
    %897 = vmatprep.subr.mxu0 0.0
    %898 = vmatpush1.msra.mxu0 0.0
    %899 = vmatprep.subr.mxu0 0.0
    %900 = vmatpush1.msra.mxu0 0.0
    %901 = vmatprep.subr.mxu0 0.0
    %v902 = vand.u32 %v396, 4294901760
    %v903 = vsub.f32 %v396, %v902
    %904 = vmatpush1.msra.mxu0 %v903
    %905 = vmatprep.subr.mxu0 0.0
    %v906 = vand.u32 %v395, 4294901760
    %v907 = vsub.f32 %v395, %v906
    %908 = vmatpush1.msra.mxu0 %v907
    %909 = vmatprep.subr.mxu0 0.0
    %v910 = vand.u32 %v394, 4294901760
    %v911 = vsub.f32 %v394, %v910
    %912 = vmatpush1.msra.mxu0 %v911
    %913 = vmatprep.subr.mxu0 0.0
    %v914 = vand.u32 %v393, 4294901760
    %v915 = vsub.f32 %v393, %v914
    %916 = vmatpush1.msra.mxu0 %v915
    %917 = vmatprep.subr.mxu0 0.0
    %v918 = vand.u32 %v392, 4294901760
    %v919 = vsub.f32 %v392, %v918
    %920 = vmatpush1.msra.mxu0 %v919
    %921 = vmatprep.subr.mxu0 0.0
    %v922 = vand.u32 %v391, 4294901760
    %v923 = vsub.f32 %v391, %v922
    %924 = vmatpush1.msra.mxu0 %v923
    %925 = vmatprep.subr.mxu0 0.0
    %v926 = vand.u32 %v390, 4294901760
    %v927 = vsub.f32 %v390, %v926
    %928 = vmatpush1.msra.mxu0 %v927
    %929 = vmatprep.subr.mxu0 0.0
    %v930 = vand.u32 %v389, 4294901760
    %v931 = vsub.f32 %v389, %v930
    %932 = vmatpush1.msra.mxu0 %v931
    %933 = vmatprep.subr.mxu0 0.0
    %934 = vmatpush2.msra.mxu0 0.0
    %935 = vmatprep.subr.mxu0 0.0
    %936 = vmatpush2.msra.mxu0 0.0
    %937 = vmatprep.subr.mxu0 0.0
    %938 = vmatpush2.msra.mxu0 0.0
    %939 = vmatprep.subr.mxu0 0.0
    %940 = vmatpush2.msra.mxu0 0.0
    %941 = vmatprep.subr.mxu0 0.0
    %942 = vmatpush2.msra.mxu0 0.0
    %943 = vmatprep.subr.mxu0 0.0
    %944 = vmatpush2.msra.mxu0 0.0
    %945 = vmatprep.subr.mxu0 0.0
    %946 = vmatpush2.msra.mxu0 0.0
    %947 = vmatprep.subr.mxu0 0.0
    %948 = vmatpush2.msra.mxu0 0.0
    %949 = vmatprep.subr.mxu0 0.0
    %950 = vmatpush2.msra.mxu0 0.0
    %951 = vmatprep.subr.mxu0 0.0
    %952 = vmatpush2.msra.mxu0 0.0
    %953 = vmatprep.subr.mxu0 0.0
    %954 = vmatpush2.msra.mxu0 0.0
    %955 = vmatprep.subr.mxu0 0.0
    %956 = vmatpush2.msra.mxu0 0.0
    %957 = vmatprep.subr.mxu0 0.0
    %958 = vmatpush2.msra.mxu0 0.0
    %959 = vmatprep.subr.mxu0 0.0
    %960 = vmatpush2.msra.mxu0 0.0
    %961 = vmatprep.subr.mxu0 0.0
    %962 = vmatpush2.msra.mxu0 0.0
    %963 = vmatprep.subr.mxu0 0.0
    %964 = vmatpush2.msra.mxu0 0.0
    %965 = vmatprep.mubr.f32.mxu0 0.0
    %v966 = vand.u32 %v404, 4294901760
    %v967 = vsub.f32 %v404, %v966
    %968 = vmatmul.mubr.f32.gmra.mxu0 %v967
    %v969 = vpop.f32.mrf.mxu0
    %v970 = vadd.f32 %v792, %v969
    %v971 = vpop.f32.mrf.mxu0
    %972 = vmatprep.mubr.f32.mxu0 0.0
    %v973 = vand.u32 %v407, 4294901760
    %v974 = vsub.f32 %v407, %v973
    %975 = vmatmul.mubr.f32.gmra.mxu0 %v974
    %v976 = vpop.f32.mrf.mxu0
    %v977 = vadd.f32 %v798, %v976
    %v978 = vpop.f32.mrf.mxu0
    %979 = vmatprep.mubr.f32.mxu0 0.0
    %v980 = vand.u32 %v410, 4294901760
    %v981 = vsub.f32 %v410, %v980
    %982 = vmatmul.mubr.f32.gmra.mxu0 %v981
    %v983 = vpop.f32.mrf.mxu0
    %v984 = vadd.f32 %v804, %v983
    %v985 = vpop.f32.mrf.mxu0
    %986 = vmatprep.mubr.f32.mxu0 0.0
    %v987 = vand.u32 %v413, 4294901760
    %v988 = vsub.f32 %v413, %v987
    %989 = vmatmul.mubr.f32.gmra.mxu0 %v988
    %v990 = vpop.f32.mrf.mxu0
    %v991 = vadd.f32 %v810, %v990
    %v992 = vpop.f32.mrf.mxu0
    %993 = vmatprep.mubr.f32.mxu0 0.0
    %v994 = vand.u32 %v416, 4294901760
    %v995 = vsub.f32 %v416, %v994
    %996 = vmatmul.mubr.f32.gmra.mxu0 %v995
    %v997 = vpop.f32.mrf.mxu0
    %v998 = vadd.f32 %v816, %v997
    %v999 = vpop.f32.mrf.mxu0
    %1000 = vmatprep.mubr.f32.mxu0 0.0
    %v1001 = vand.u32 %v419, 4294901760
    %v1002 = vsub.f32 %v419, %v1001
    %1003 = vmatmul.mubr.f32.gmra.mxu0 %v1002
    %v1004 = vpop.f32.mrf.mxu0
    %v1005 = vadd.f32 %v822, %v1004
    %v1006 = vpop.f32.mrf.mxu0
    %1007 = vmatprep.mubr.f32.mxu0 0.0
    %v1008 = vand.u32 %v422, 4294901760
    %v1009 = vsub.f32 %v422, %v1008
    %1010 = vmatmul.mubr.f32.gmra.mxu0 %v1009
    %v1011 = vpop.f32.mrf.mxu0
    %v1012 = vadd.f32 %v828, %v1011
    %v1013 = vpop.f32.mrf.mxu0
    %1014 = vmatprep.mubr.f32.mxu0 0.0
    %v1015 = vand.u32 %v425, 4294901760
    %v1016 = vsub.f32 %v425, %v1015
    %1017 = vmatmul.mubr.f32.gmra.mxu0 %v1016
    %v1018 = vpop.f32.mrf.mxu0
    %v1019 = vadd.f32 %v834, %v1018
    %v1020 = vpop.f32.mrf.mxu0
    %1021 = vmatprep.mubr.f32.mxu0 0.0
    %v1022 = vand.u32 %v428, 4294901760
    %v1023 = vsub.f32 %v428, %v1022
    %1024 = vmatmul.mubr.f32.gmra.mxu0 %v1023
    %v1025 = vpop.f32.mrf.mxu0
    %v1026 = vadd.f32 %v840, %v1025
    %v1027 = vpop.f32.mrf.mxu0
    %1028 = vmatprep.mubr.f32.mxu0 0.0
    %v1029 = vand.u32 %v431, 4294901760
    %v1030 = vsub.f32 %v431, %v1029
    %1031 = vmatmul.mubr.f32.gmra.mxu0 %v1030
    %v1032 = vpop.f32.mrf.mxu0
    %v1033 = vadd.f32 %v846, %v1032
    %v1034 = vpop.f32.mrf.mxu0
    %1035 = vmatprep.mubr.f32.mxu0 0.0
    %v1036 = vand.u32 %v434, 4294901760
    %v1037 = vsub.f32 %v434, %v1036
    %1038 = vmatmul.mubr.f32.gmra.mxu0 %v1037
    %v1039 = vpop.f32.mrf.mxu0
    %v1040 = vadd.f32 %v852, %v1039
    %v1041 = vpop.f32.mrf.mxu0
    %1042 = vmatprep.mubr.f32.mxu0 0.0
    %v1043 = vand.u32 %v437, 4294901760
    %v1044 = vsub.f32 %v437, %v1043
    %1045 = vmatmul.mubr.f32.gmra.mxu0 %v1044
    %v1046 = vpop.f32.mrf.mxu0
    %v1047 = vadd.f32 %v858, %v1046
    %v1048 = vpop.f32.mrf.mxu0
    %1049 = vmatprep.mubr.f32.mxu0 0.0
    %v1050 = vand.u32 %v440, 4294901760
    %v1051 = vsub.f32 %v440, %v1050
    %1052 = vmatmul.mubr.f32.gmra.mxu0 %v1051
    %v1053 = vpop.f32.mrf.mxu0
    %v1054 = vadd.f32 %v864, %v1053
    %v1055 = vpop.f32.mrf.mxu0
    %1056 = vmatprep.mubr.f32.mxu0 0.0
    %v1057 = vand.u32 %v443, 4294901760
    %v1058 = vsub.f32 %v443, %v1057
    %1059 = vmatmul.mubr.f32.gmra.mxu0 %v1058
    %v1060 = vpop.f32.mrf.mxu0
    %v1061 = vadd.f32 %v870, %v1060
    %v1062 = vpop.f32.mrf.mxu0
    %1063 = vmatprep.mubr.f32.mxu0 0.0
    %v1064 = vand.u32 %v446, 4294901760
    %v1065 = vsub.f32 %v446, %v1064
    %1066 = vmatmul.mubr.f32.gmra.mxu0 %v1065
    %v1067 = vpop.f32.mrf.mxu0
    %v1068 = vadd.f32 %v876, %v1067
    %v1069 = vpop.f32.mrf.mxu0
    %1070 = vmatprep.mubr.f32.mxu0 0.0
    %v1071 = vand.u32 %v449, 4294901760
    %v1072 = vsub.f32 %v449, %v1071
    %1073 = vmatmul.mubr.f32.gmra.mxu0 %v1072
    %v1074 = vpop.f32.mrf.mxu0
    %v1075 = vadd.f32 %v882, %v1074
    %v1076 = vpop.f32.mrf.mxu0
    %1077 = vdwg.mxu0
    %1078 = vmatprep.subr.mxu0 0.0
    %1079 = vmatpush1.msra.mxu0 0.0
    %1080 = vmatprep.subr.mxu0 0.0
    %1081 = vmatpush1.msra.mxu0 0.0
    %1082 = vmatprep.subr.mxu0 0.0
    %1083 = vmatpush1.msra.mxu0 0.0
    %1084 = vmatprep.subr.mxu0 0.0
    %1085 = vmatpush1.msra.mxu0 0.0
    %1086 = vmatprep.subr.mxu0 0.0
    %1087 = vmatpush1.msra.mxu0 0.0
    %1088 = vmatprep.subr.mxu0 0.0
    %1089 = vmatpush1.msra.mxu0 0.0
    %1090 = vmatprep.subr.mxu0 0.0
    %1091 = vmatpush1.msra.mxu0 0.0
    %1092 = vmatprep.subr.mxu0 0.0
    %1093 = vmatpush1.msra.mxu0 0.0
    %1094 = vmatprep.subr.mxu0 0.0
    %v1095 = vand.u32 %v396, 4294901760
    %1096 = vmatpush1.msra.mxu0 %v1095
    %1097 = vmatprep.subr.mxu0 0.0
    %v1098 = vand.u32 %v395, 4294901760
    %1099 = vmatpush1.msra.mxu0 %v1098
    %1100 = vmatprep.subr.mxu0 0.0
    %v1101 = vand.u32 %v394, 4294901760
    %1102 = vmatpush1.msra.mxu0 %v1101
    %1103 = vmatprep.subr.mxu0 0.0
    %v1104 = vand.u32 %v393, 4294901760
    %1105 = vmatpush1.msra.mxu0 %v1104
    %1106 = vmatprep.subr.mxu0 0.0
    %v1107 = vand.u32 %v392, 4294901760
    %1108 = vmatpush1.msra.mxu0 %v1107
    %1109 = vmatprep.subr.mxu0 0.0
    %v1110 = vand.u32 %v391, 4294901760
    %1111 = vmatpush1.msra.mxu0 %v1110
    %1112 = vmatprep.subr.mxu0 0.0
    %v1113 = vand.u32 %v390, 4294901760
    %1114 = vmatpush1.msra.mxu0 %v1113
    %1115 = vmatprep.subr.mxu0 0.0
    %v1116 = vand.u32 %v389, 4294901760
    %1117 = vmatpush1.msra.mxu0 %v1116
    %1118 = vmatprep.subr.mxu0 0.0
    %1119 = vmatpush2.msra.mxu0 0.0
    %1120 = vmatprep.subr.mxu0 0.0
    %1121 = vmatpush2.msra.mxu0 0.0
    %1122 = vmatprep.subr.mxu0 0.0
    %1123 = vmatpush2.msra.mxu0 0.0
    %1124 = vmatprep.subr.mxu0 0.0
    %1125 = vmatpush2.msra.mxu0 0.0
    %1126 = vmatprep.subr.mxu0 0.0
    %1127 = vmatpush2.msra.mxu0 0.0
    %1128 = vmatprep.subr.mxu0 0.0
    %1129 = vmatpush2.msra.mxu0 0.0
    %1130 = vmatprep.subr.mxu0 0.0
    %1131 = vmatpush2.msra.mxu0 0.0
    %1132 = vmatprep.subr.mxu0 0.0
    %1133 = vmatpush2.msra.mxu0 0.0
    %1134 = vmatprep.subr.mxu0 0.0
    %1135 = vmatpush2.msra.mxu0 0.0
    %1136 = vmatprep.subr.mxu0 0.0
    %1137 = vmatpush2.msra.mxu0 0.0
    %1138 = vmatprep.subr.mxu0 0.0
    %1139 = vmatpush2.msra.mxu0 0.0
    %1140 = vmatprep.subr.mxu0 0.0
    %1141 = vmatpush2.msra.mxu0 0.0
    %1142 = vmatprep.subr.mxu0 0.0
    %1143 = vmatpush2.msra.mxu0 0.0
    %1144 = vmatprep.subr.mxu0 0.0
    %1145 = vmatpush2.msra.mxu0 0.0
    %1146 = vmatprep.subr.mxu0 0.0
    %1147 = vmatpush2.msra.mxu0 0.0
    %1148 = vmatprep.subr.mxu0 0.0
    %1149 = vmatpush2.msra.mxu0 0.0
    %1150 = vmatprep.mubr.f32.mxu0 0.0
    %v1151 = vand.u32 %v404, 4294901760
    %v1152 = vsub.f32 %v404, %v1151
    %v1153 = vand.u32 %v1152, 4294901760
    %1154 = vmatmul.mubr.f32.gmra.mxu0 %v1153
    %v1155 = vpop.f32.mrf.mxu0
    %v1156 = vadd.f32 %v970, %v1155
    %v1157 = vpop.f32.mrf.mxu0
    %1158 = vmatprep.mubr.f32.mxu0 0.0
    %v1159 = vand.u32 %v407, 4294901760
    %v1160 = vsub.f32 %v407, %v1159
    %v1161 = vand.u32 %v1160, 4294901760
    %1162 = vmatmul.mubr.f32.gmra.mxu0 %v1161
    %v1163 = vpop.f32.mrf.mxu0
    %v1164 = vadd.f32 %v977, %v1163
    %v1165 = vpop.f32.mrf.mxu0
    %1166 = vmatprep.mubr.f32.mxu0 0.0
    %v1167 = vand.u32 %v410, 4294901760
    %v1168 = vsub.f32 %v410, %v1167
    %v1169 = vand.u32 %v1168, 4294901760
    %1170 = vmatmul.mubr.f32.gmra.mxu0 %v1169
    %v1171 = vpop.f32.mrf.mxu0
    %v1172 = vadd.f32 %v984, %v1171
    %v1173 = vpop.f32.mrf.mxu0
    %1174 = vmatprep.mubr.f32.mxu0 0.0
    %v1175 = vand.u32 %v413, 4294901760
    %v1176 = vsub.f32 %v413, %v1175
    %v1177 = vand.u32 %v1176, 4294901760
    %1178 = vmatmul.mubr.f32.gmra.mxu0 %v1177
    %v1179 = vpop.f32.mrf.mxu0
    %v1180 = vadd.f32 %v991, %v1179
    %v1181 = vpop.f32.mrf.mxu0
    %1182 = vmatprep.mubr.f32.mxu0 0.0
    %v1183 = vand.u32 %v416, 4294901760
    %v1184 = vsub.f32 %v416, %v1183
    %v1185 = vand.u32 %v1184, 4294901760
    %1186 = vmatmul.mubr.f32.gmra.mxu0 %v1185
    %v1187 = vpop.f32.mrf.mxu0
    %v1188 = vadd.f32 %v998, %v1187
    %v1189 = vpop.f32.mrf.mxu0
    %1190 = vmatprep.mubr.f32.mxu0 0.0
    %v1191 = vand.u32 %v419, 4294901760
    %v1192 = vsub.f32 %v419, %v1191
    %v1193 = vand.u32 %v1192, 4294901760
    %1194 = vmatmul.mubr.f32.gmra.mxu0 %v1193
    %v1195 = vpop.f32.mrf.mxu0
    %v1196 = vadd.f32 %v1005, %v1195
    %v1197 = vpop.f32.mrf.mxu0
    %1198 = vmatprep.mubr.f32.mxu0 0.0
    %v1199 = vand.u32 %v422, 4294901760
    %v1200 = vsub.f32 %v422, %v1199
    %v1201 = vand.u32 %v1200, 4294901760
    %1202 = vmatmul.mubr.f32.gmra.mxu0 %v1201
    %v1203 = vpop.f32.mrf.mxu0
    %v1204 = vadd.f32 %v1012, %v1203
    %v1205 = vpop.f32.mrf.mxu0
    %1206 = vmatprep.mubr.f32.mxu0 0.0
    %v1207 = vand.u32 %v425, 4294901760
    %v1208 = vsub.f32 %v425, %v1207
    %v1209 = vand.u32 %v1208, 4294901760
    %1210 = vmatmul.mubr.f32.gmra.mxu0 %v1209
    %v1211 = vpop.f32.mrf.mxu0
    %v1212 = vadd.f32 %v1019, %v1211
    %v1213 = vpop.f32.mrf.mxu0
    %1214 = vmatprep.mubr.f32.mxu0 0.0
    %v1215 = vand.u32 %v428, 4294901760
    %v1216 = vsub.f32 %v428, %v1215
    %v1217 = vand.u32 %v1216, 4294901760
    %1218 = vmatmul.mubr.f32.gmra.mxu0 %v1217
    %v1219 = vpop.f32.mrf.mxu0
    %v1220 = vadd.f32 %v1026, %v1219
    %v1221 = vpop.f32.mrf.mxu0
    %1222 = vmatprep.mubr.f32.mxu0 0.0
    %v1223 = vand.u32 %v431, 4294901760
    %v1224 = vsub.f32 %v431, %v1223
    %v1225 = vand.u32 %v1224, 4294901760
    %1226 = vmatmul.mubr.f32.gmra.mxu0 %v1225
    %v1227 = vpop.f32.mrf.mxu0
    %v1228 = vadd.f32 %v1033, %v1227
    %v1229 = vpop.f32.mrf.mxu0
    %1230 = vmatprep.mubr.f32.mxu0 0.0
    %v1231 = vand.u32 %v434, 4294901760
    %v1232 = vsub.f32 %v434, %v1231
    %v1233 = vand.u32 %v1232, 4294901760
    %1234 = vmatmul.mubr.f32.gmra.mxu0 %v1233
    %v1235 = vpop.f32.mrf.mxu0
    %v1236 = vadd.f32 %v1040, %v1235
    %v1237 = vpop.f32.mrf.mxu0
    %1238 = vmatprep.mubr.f32.mxu0 0.0
    %v1239 = vand.u32 %v437, 4294901760
    %v1240 = vsub.f32 %v437, %v1239
    %v1241 = vand.u32 %v1240, 4294901760
    %1242 = vmatmul.mubr.f32.gmra.mxu0 %v1241
    %v1243 = vpop.f32.mrf.mxu0
    %v1244 = vadd.f32 %v1047, %v1243
    %v1245 = vpop.f32.mrf.mxu0
    %1246 = vmatprep.mubr.f32.mxu0 0.0
    %v1247 = vand.u32 %v440, 4294901760
    %v1248 = vsub.f32 %v440, %v1247
    %v1249 = vand.u32 %v1248, 4294901760
    %1250 = vmatmul.mubr.f32.gmra.mxu0 %v1249
    %v1251 = vpop.f32.mrf.mxu0
    %v1252 = vadd.f32 %v1054, %v1251
    %v1253 = vpop.f32.mrf.mxu0
    %1254 = vmatprep.mubr.f32.mxu0 0.0
    %v1255 = vand.u32 %v443, 4294901760
    %v1256 = vsub.f32 %v443, %v1255
    %v1257 = vand.u32 %v1256, 4294901760
    %1258 = vmatmul.mubr.f32.gmra.mxu0 %v1257
    %v1259 = vpop.f32.mrf.mxu0
    %v1260 = vadd.f32 %v1061, %v1259
    %v1261 = vpop.f32.mrf.mxu0
    %1262 = vmatprep.mubr.f32.mxu0 0.0
    %v1263 = vand.u32 %v446, 4294901760
    %v1264 = vsub.f32 %v446, %v1263
    %v1265 = vand.u32 %v1264, 4294901760
    %1266 = vmatmul.mubr.f32.gmra.mxu0 %v1265
    %v1267 = vpop.f32.mrf.mxu0
    %v1268 = vadd.f32 %v1068, %v1267
    %v1269 = vpop.f32.mrf.mxu0
    %1270 = vmatprep.mubr.f32.mxu0 0.0
    %v1271 = vand.u32 %v449, 4294901760
    %v1272 = vsub.f32 %v449, %v1271
    %v1273 = vand.u32 %v1272, 4294901760
    %1274 = vmatmul.mubr.f32.gmra.mxu0 %v1273
    %v1275 = vpop.f32.mrf.mxu0
    %v1276 = vadd.f32 %v1075, %v1275
    %v1277 = vpop.f32.mrf.mxu0
    %1278 = vdwg.mxu0
    %1279 = vmatprep.subr.mxu0 0.0
    %1280 = vmatpush1.msra.mxu0 0.0
    %1281 = vmatprep.subr.mxu0 0.0
    %1282 = vmatpush1.msra.mxu0 0.0
    %1283 = vmatprep.subr.mxu0 0.0
    %1284 = vmatpush1.msra.mxu0 0.0
    %1285 = vmatprep.subr.mxu0 0.0
    %1286 = vmatpush1.msra.mxu0 0.0
    %1287 = vmatprep.subr.mxu0 0.0
    %1288 = vmatpush1.msra.mxu0 0.0
    %1289 = vmatprep.subr.mxu0 0.0
    %1290 = vmatpush1.msra.mxu0 0.0
    %1291 = vmatprep.subr.mxu0 0.0
    %1292 = vmatpush1.msra.mxu0 0.0
    %1293 = vmatprep.subr.mxu0 0.0
    %1294 = vmatpush1.msra.mxu0 0.0
    %1295 = vmatprep.subr.mxu0 0.0
    %v1296 = vand.u32 %v396, 4294901760
    %v1297 = vsub.f32 %v396, %v1296
    %v1298 = vand.u32 %v1297, 4294901760
    %1299 = vmatpush1.msra.mxu0 %v1298
    %1300 = vmatprep.subr.mxu0 0.0
    %v1301 = vand.u32 %v395, 4294901760
    %v1302 = vsub.f32 %v395, %v1301
    %v1303 = vand.u32 %v1302, 4294901760
    %1304 = vmatpush1.msra.mxu0 %v1303
    %1305 = vmatprep.subr.mxu0 0.0
    %v1306 = vand.u32 %v394, 4294901760
    %v1307 = vsub.f32 %v394, %v1306
    %v1308 = vand.u32 %v1307, 4294901760
    %1309 = vmatpush1.msra.mxu0 %v1308
    %1310 = vmatprep.subr.mxu0 0.0
    %v1311 = vand.u32 %v393, 4294901760
    %v1312 = vsub.f32 %v393, %v1311
    %v1313 = vand.u32 %v1312, 4294901760
    %1314 = vmatpush1.msra.mxu0 %v1313
    %1315 = vmatprep.subr.mxu0 0.0
    %v1316 = vand.u32 %v392, 4294901760
    %v1317 = vsub.f32 %v392, %v1316
    %v1318 = vand.u32 %v1317, 4294901760
    %1319 = vmatpush1.msra.mxu0 %v1318
    %1320 = vmatprep.subr.mxu0 0.0
    %v1321 = vand.u32 %v391, 4294901760
    %v1322 = vsub.f32 %v391, %v1321
    %v1323 = vand.u32 %v1322, 4294901760
    %1324 = vmatpush1.msra.mxu0 %v1323
    %1325 = vmatprep.subr.mxu0 0.0
    %v1326 = vand.u32 %v390, 4294901760
    %v1327 = vsub.f32 %v390, %v1326
    %v1328 = vand.u32 %v1327, 4294901760
    %1329 = vmatpush1.msra.mxu0 %v1328
    %1330 = vmatprep.subr.mxu0 0.0
    %v1331 = vand.u32 %v389, 4294901760
    %v1332 = vsub.f32 %v389, %v1331
    %v1333 = vand.u32 %v1332, 4294901760
    %1334 = vmatpush1.msra.mxu0 %v1333
    %1335 = vmatprep.subr.mxu0 0.0
    %1336 = vmatpush2.msra.mxu0 0.0
    %1337 = vmatprep.subr.mxu0 0.0
    %1338 = vmatpush2.msra.mxu0 0.0
    %1339 = vmatprep.subr.mxu0 0.0
    %1340 = vmatpush2.msra.mxu0 0.0
    %1341 = vmatprep.subr.mxu0 0.0
    %1342 = vmatpush2.msra.mxu0 0.0
    %1343 = vmatprep.subr.mxu0 0.0
    %1344 = vmatpush2.msra.mxu0 0.0
    %1345 = vmatprep.subr.mxu0 0.0
    %1346 = vmatpush2.msra.mxu0 0.0
    %1347 = vmatprep.subr.mxu0 0.0
    %1348 = vmatpush2.msra.mxu0 0.0
    %1349 = vmatprep.subr.mxu0 0.0
    %1350 = vmatpush2.msra.mxu0 0.0
    %1351 = vmatprep.subr.mxu0 0.0
    %1352 = vmatpush2.msra.mxu0 0.0
    %1353 = vmatprep.subr.mxu0 0.0
    %1354 = vmatpush2.msra.mxu0 0.0
    %1355 = vmatprep.subr.mxu0 0.0
    %1356 = vmatpush2.msra.mxu0 0.0
    %1357 = vmatprep.subr.mxu0 0.0
    %1358 = vmatpush2.msra.mxu0 0.0
    %1359 = vmatprep.subr.mxu0 0.0
    %1360 = vmatpush2.msra.mxu0 0.0
    %1361 = vmatprep.subr.mxu0 0.0
    %1362 = vmatpush2.msra.mxu0 0.0
    %1363 = vmatprep.subr.mxu0 0.0
    %1364 = vmatpush2.msra.mxu0 0.0
    %1365 = vmatprep.subr.mxu0 0.0
    %1366 = vmatpush2.msra.mxu0 0.0
    %1367 = vmatprep.mubr.f32.mxu0 0.0
    %v1368 = vand.u32 %v404, 4294901760
    %1369 = vmatmul.mubr.f32.gmra.mxu0 %v1368
    %v1370 = vpop.f32.mrf.mxu0
    %v1371 = vadd.f32 %v1156, %v1370
    %v1372 = vpop.f32.mrf.mxu0
    %1373 = vmatprep.mubr.f32.mxu0 0.0
    %v1374 = vand.u32 %v407, 4294901760
    %1375 = vmatmul.mubr.f32.gmra.mxu0 %v1374
    %v1376 = vpop.f32.mrf.mxu0
    %v1377 = vadd.f32 %v1164, %v1376
    %v1378 = vpop.f32.mrf.mxu0
    %1379 = vmatprep.mubr.f32.mxu0 0.0
    %v1380 = vand.u32 %v410, 4294901760
    %1381 = vmatmul.mubr.f32.gmra.mxu0 %v1380
    %v1382 = vpop.f32.mrf.mxu0
    %v1383 = vadd.f32 %v1172, %v1382
    %v1384 = vpop.f32.mrf.mxu0
    %1385 = vmatprep.mubr.f32.mxu0 0.0
    %v1386 = vand.u32 %v413, 4294901760
    %1387 = vmatmul.mubr.f32.gmra.mxu0 %v1386
    %v1388 = vpop.f32.mrf.mxu0
    %v1389 = vadd.f32 %v1180, %v1388
    %v1390 = vpop.f32.mrf.mxu0
    %1391 = vmatprep.mubr.f32.mxu0 0.0
    %v1392 = vand.u32 %v416, 4294901760
    %1393 = vmatmul.mubr.f32.gmra.mxu0 %v1392
    %v1394 = vpop.f32.mrf.mxu0
    %v1395 = vadd.f32 %v1188, %v1394
    %v1396 = vpop.f32.mrf.mxu0
    %1397 = vmatprep.mubr.f32.mxu0 0.0
    %v1398 = vand.u32 %v419, 4294901760
    %1399 = vmatmul.mubr.f32.gmra.mxu0 %v1398
    %v1400 = vpop.f32.mrf.mxu0
    %v1401 = vadd.f32 %v1196, %v1400
    %v1402 = vpop.f32.mrf.mxu0
    %1403 = vmatprep.mubr.f32.mxu0 0.0
    %v1404 = vand.u32 %v422, 4294901760
    %1405 = vmatmul.mubr.f32.gmra.mxu0 %v1404
    %v1406 = vpop.f32.mrf.mxu0
    %v1407 = vadd.f32 %v1204, %v1406
    %v1408 = vpop.f32.mrf.mxu0
    %1409 = vmatprep.mubr.f32.mxu0 0.0
    %v1410 = vand.u32 %v425, 4294901760
    %1411 = vmatmul.mubr.f32.gmra.mxu0 %v1410
    %v1412 = vpop.f32.mrf.mxu0
    %v1413 = vadd.f32 %v1212, %v1412
    %v1414 = vpop.f32.mrf.mxu0
    %1415 = vmatprep.mubr.f32.mxu0 0.0
    %v1416 = vand.u32 %v428, 4294901760
    %1417 = vmatmul.mubr.f32.gmra.mxu0 %v1416
    %v1418 = vpop.f32.mrf.mxu0
    %v1419 = vadd.f32 %v1220, %v1418
    %v1420 = vpop.f32.mrf.mxu0
    %1421 = vmatprep.mubr.f32.mxu0 0.0
    %v1422 = vand.u32 %v431, 4294901760
    %1423 = vmatmul.mubr.f32.gmra.mxu0 %v1422
    %v1424 = vpop.f32.mrf.mxu0
    %v1425 = vadd.f32 %v1228, %v1424
    %v1426 = vpop.f32.mrf.mxu0
    %1427 = vmatprep.mubr.f32.mxu0 0.0
    %v1428 = vand.u32 %v434, 4294901760
    %1429 = vmatmul.mubr.f32.gmra.mxu0 %v1428
    %v1430 = vpop.f32.mrf.mxu0
    %v1431 = vadd.f32 %v1236, %v1430
    %v1432 = vpop.f32.mrf.mxu0
    %1433 = vmatprep.mubr.f32.mxu0 0.0
    %v1434 = vand.u32 %v437, 4294901760
    %1435 = vmatmul.mubr.f32.gmra.mxu0 %v1434
    %v1436 = vpop.f32.mrf.mxu0
    %v1437 = vadd.f32 %v1244, %v1436
    %v1438 = vpop.f32.mrf.mxu0
    %1439 = vmatprep.mubr.f32.mxu0 0.0
    %v1440 = vand.u32 %v440, 4294901760
    %1441 = vmatmul.mubr.f32.gmra.mxu0 %v1440
    %v1442 = vpop.f32.mrf.mxu0
    %v1443 = vadd.f32 %v1252, %v1442
    %v1444 = vpop.f32.mrf.mxu0
    %1445 = vmatprep.mubr.f32.mxu0 0.0
    %v1446 = vand.u32 %v443, 4294901760
    %1447 = vmatmul.mubr.f32.gmra.mxu0 %v1446
    %v1448 = vpop.f32.mrf.mxu0
    %v1449 = vadd.f32 %v1260, %v1448
    %v1450 = vpop.f32.mrf.mxu0
    %1451 = vmatprep.mubr.f32.mxu0 0.0
    %v1452 = vand.u32 %v446, 4294901760
    %1453 = vmatmul.mubr.f32.gmra.mxu0 %v1452
    %v1454 = vpop.f32.mrf.mxu0
    %v1455 = vadd.f32 %v1268, %v1454
    %v1456 = vpop.f32.mrf.mxu0
    %1457 = vmatprep.mubr.f32.mxu0 0.0
    %v1458 = vand.u32 %v449, 4294901760
    %1459 = vmatmul.mubr.f32.gmra.mxu0 %v1458
    %v1460 = vpop.f32.mrf.mxu0
    %v1461 = vadd.f32 %v1276, %v1460
    %v1462 = vpop.f32.mrf.mxu0
    %1463 = vdwg.mxu0
    %1464 = vmatprep.subr.mxu0 0.0
    %1465 = vmatpush1.msra.mxu0 0.0
    %1466 = vmatprep.subr.mxu0 0.0
    %1467 = vmatpush1.msra.mxu0 0.0
    %1468 = vmatprep.subr.mxu0 0.0
    %1469 = vmatpush1.msra.mxu0 0.0
    %1470 = vmatprep.subr.mxu0 0.0
    %1471 = vmatpush1.msra.mxu0 0.0
    %1472 = vmatprep.subr.mxu0 0.0
    %1473 = vmatpush1.msra.mxu0 0.0
    %1474 = vmatprep.subr.mxu0 0.0
    %1475 = vmatpush1.msra.mxu0 0.0
    %1476 = vmatprep.subr.mxu0 0.0
    %1477 = vmatpush1.msra.mxu0 0.0
    %1478 = vmatprep.subr.mxu0 0.0
    %1479 = vmatpush1.msra.mxu0 0.0
    %1480 = vmatprep.subr.mxu0 0.0
    %v1481 = vand.u32 %v396, 4294901760
    %1482 = vmatpush1.msra.mxu0 %v1481
    %1483 = vmatprep.subr.mxu0 0.0
    %v1484 = vand.u32 %v395, 4294901760
    %1485 = vmatpush1.msra.mxu0 %v1484
    %1486 = vmatprep.subr.mxu0 0.0
    %v1487 = vand.u32 %v394, 4294901760
    %1488 = vmatpush1.msra.mxu0 %v1487
    %1489 = vmatprep.subr.mxu0 0.0
    %v1490 = vand.u32 %v393, 4294901760
    %1491 = vmatpush1.msra.mxu0 %v1490
    %1492 = vmatprep.subr.mxu0 0.0
    %v1493 = vand.u32 %v392, 4294901760
    %1494 = vmatpush1.msra.mxu0 %v1493
    %1495 = vmatprep.subr.mxu0 0.0
    %v1496 = vand.u32 %v391, 4294901760
    %1497 = vmatpush1.msra.mxu0 %v1496
    %1498 = vmatprep.subr.mxu0 0.0
    %v1499 = vand.u32 %v390, 4294901760
    %1500 = vmatpush1.msra.mxu0 %v1499
    %1501 = vmatprep.subr.mxu0 0.0
    %v1502 = vand.u32 %v389, 4294901760
    %1503 = vmatpush1.msra.mxu0 %v1502
    %1504 = vmatprep.subr.mxu0 0.0
    %1505 = vmatpush2.msra.mxu0 0.0
    %1506 = vmatprep.subr.mxu0 0.0
    %1507 = vmatpush2.msra.mxu0 0.0
    %1508 = vmatprep.subr.mxu0 0.0
    %1509 = vmatpush2.msra.mxu0 0.0
    %1510 = vmatprep.subr.mxu0 0.0
    %1511 = vmatpush2.msra.mxu0 0.0
    %1512 = vmatprep.subr.mxu0 0.0
    %1513 = vmatpush2.msra.mxu0 0.0
    %1514 = vmatprep.subr.mxu0 0.0
    %1515 = vmatpush2.msra.mxu0 0.0
    %1516 = vmatprep.subr.mxu0 0.0
    %1517 = vmatpush2.msra.mxu0 0.0
    %1518 = vmatprep.subr.mxu0 0.0
    %1519 = vmatpush2.msra.mxu0 0.0
    %1520 = vmatprep.subr.mxu0 0.0
    %1521 = vmatpush2.msra.mxu0 0.0
    %1522 = vmatprep.subr.mxu0 0.0
    %1523 = vmatpush2.msra.mxu0 0.0
    %1524 = vmatprep.subr.mxu0 0.0
    %1525 = vmatpush2.msra.mxu0 0.0
    %1526 = vmatprep.subr.mxu0 0.0
    %1527 = vmatpush2.msra.mxu0 0.0
    %1528 = vmatprep.subr.mxu0 0.0
    %1529 = vmatpush2.msra.mxu0 0.0
    %1530 = vmatprep.subr.mxu0 0.0
    %1531 = vmatpush2.msra.mxu0 0.0
    %1532 = vmatprep.subr.mxu0 0.0
    %1533 = vmatpush2.msra.mxu0 0.0
    %1534 = vmatprep.subr.mxu0 0.0
    %1535 = vmatpush2.msra.mxu0 0.0
    %1536 = vmatprep.mubr.f32.mxu0 0.0
    %v1537 = vand.u32 %v404, 4294901760
    %1538 = vmatmul.mubr.f32.gmra.mxu0 %v1537
    %v1539 = vpop.f32.mrf.mxu0
    %v1540 = vadd.f32 %v1371, %v1539
    %v1541 = vpop.f32.mrf.mxu0
    %1542 = vmatprep.mubr.f32.mxu0 0.0
    %v1543 = vand.u32 %v407, 4294901760
    %1544 = vmatmul.mubr.f32.gmra.mxu0 %v1543
    %v1545 = vpop.f32.mrf.mxu0
    %v1546 = vadd.f32 %v1377, %v1545
    %v1547 = vpop.f32.mrf.mxu0
    %1548 = vmatprep.mubr.f32.mxu0 0.0
    %v1549 = vand.u32 %v410, 4294901760
    %1550 = vmatmul.mubr.f32.gmra.mxu0 %v1549
    %v1551 = vpop.f32.mrf.mxu0
    %v1552 = vadd.f32 %v1383, %v1551
    %v1553 = vpop.f32.mrf.mxu0
    %1554 = vmatprep.mubr.f32.mxu0 0.0
    %v1555 = vand.u32 %v413, 4294901760
    %1556 = vmatmul.mubr.f32.gmra.mxu0 %v1555
    %v1557 = vpop.f32.mrf.mxu0
    %v1558 = vadd.f32 %v1389, %v1557
    %v1559 = vpop.f32.mrf.mxu0
    %1560 = vmatprep.mubr.f32.mxu0 0.0
    %v1561 = vand.u32 %v416, 4294901760
    %1562 = vmatmul.mubr.f32.gmra.mxu0 %v1561
    %v1563 = vpop.f32.mrf.mxu0
    %v1564 = vadd.f32 %v1395, %v1563
    %v1565 = vpop.f32.mrf.mxu0
    %1566 = vmatprep.mubr.f32.mxu0 0.0
    %v1567 = vand.u32 %v419, 4294901760
    %1568 = vmatmul.mubr.f32.gmra.mxu0 %v1567
    %v1569 = vpop.f32.mrf.mxu0
    %v1570 = vadd.f32 %v1401, %v1569
    %v1571 = vpop.f32.mrf.mxu0
    %1572 = vmatprep.mubr.f32.mxu0 0.0
    %v1573 = vand.u32 %v422, 4294901760
    %1574 = vmatmul.mubr.f32.gmra.mxu0 %v1573
    %v1575 = vpop.f32.mrf.mxu0
    %v1576 = vadd.f32 %v1407, %v1575
    %v1577 = vpop.f32.mrf.mxu0
    %1578 = vmatprep.mubr.f32.mxu0 0.0
    %v1579 = vand.u32 %v425, 4294901760
    %1580 = vmatmul.mubr.f32.gmra.mxu0 %v1579
    %v1581 = vpop.f32.mrf.mxu0
    %v1582 = vadd.f32 %v1413, %v1581
    %v1583 = vpop.f32.mrf.mxu0
    %1584 = vmatprep.mubr.f32.mxu0 0.0
    %v1585 = vand.u32 %v428, 4294901760
    %1586 = vmatmul.mubr.f32.gmra.mxu0 %v1585
    %v1587 = vpop.f32.mrf.mxu0
    %v1588 = vadd.f32 %v1419, %v1587
    %v1589 = vpop.f32.mrf.mxu0
    %1590 = vmatprep.mubr.f32.mxu0 0.0
    %v1591 = vand.u32 %v431, 4294901760
    %1592 = vmatmul.mubr.f32.gmra.mxu0 %v1591
    %v1593 = vpop.f32.mrf.mxu0
    %v1594 = vadd.f32 %v1425, %v1593
    %v1595 = vpop.f32.mrf.mxu0
    %1596 = vmatprep.mubr.f32.mxu0 0.0
    %v1597 = vand.u32 %v434, 4294901760
    %1598 = vmatmul.mubr.f32.gmra.mxu0 %v1597
    %v1599 = vpop.f32.mrf.mxu0
    %v1600 = vadd.f32 %v1431, %v1599
    %v1601 = vpop.f32.mrf.mxu0
    %1602 = vmatprep.mubr.f32.mxu0 0.0
    %v1603 = vand.u32 %v437, 4294901760
    %1604 = vmatmul.mubr.f32.gmra.mxu0 %v1603
    %v1605 = vpop.f32.mrf.mxu0
    %v1606 = vadd.f32 %v1437, %v1605
    %v1607 = vpop.f32.mrf.mxu0
    %1608 = vmatprep.mubr.f32.mxu0 0.0
    %v1609 = vand.u32 %v440, 4294901760
    %1610 = vmatmul.mubr.f32.gmra.mxu0 %v1609
    %v1611 = vpop.f32.mrf.mxu0
    %v1612 = vadd.f32 %v1443, %v1611
    %v1613 = vpop.f32.mrf.mxu0
    %1614 = vmatprep.mubr.f32.mxu0 0.0
    %v1615 = vand.u32 %v443, 4294901760
    %1616 = vmatmul.mubr.f32.gmra.mxu0 %v1615
    %v1617 = vpop.f32.mrf.mxu0
    %v1618 = vadd.f32 %v1449, %v1617
    %v1619 = vpop.f32.mrf.mxu0
    %1620 = vmatprep.mubr.f32.mxu0 0.0
    %v1621 = vand.u32 %v446, 4294901760
    %1622 = vmatmul.mubr.f32.gmra.mxu0 %v1621
    %v1623 = vpop.f32.mrf.mxu0
    %v1624 = vadd.f32 %v1455, %v1623
    %v1625 = vpop.f32.mrf.mxu0
    %1626 = vmatprep.mubr.f32.mxu0 0.0
    %v1627 = vand.u32 %v449, 4294901760
    %1628 = vmatmul.mubr.f32.gmra.mxu0 %v1627
    %v1629 = vpop.f32.mrf.mxu0
    %v1630 = vadd.f32 %v1461, %v1629
    %v1631 = vpop.f32.mrf.mxu0
    %1632 = vdwg.mxu0
    %v1633 = vmax.f32 %v1540, 0.0
    %v1634 = vmax.f32 %v1546, 0.0
    %v1635 = vmax.f32 %v1552, 0.0
    %v1636 = vmax.f32 %v1558, 0.0
    %v1637 = vmax.f32 %v1564, 0.0
    %v1638 = vmax.f32 %v1570, 0.0
    %v1639 = vmax.f32 %v1576, 0.0
    %v1640 = vmax.f32 %v1582, 0.0
    %v1641 = vmax.f32 %v1588, 0.0
    %v1642 = vmax.f32 %v1594, 0.0
    %v1643 = vmax.f32 %v1600, 0.0
    %v1644 = vmax.f32 %v1606, 0.0
    %v1645 = vmax.f32 %v1612, 0.0
    %v1646 = vmax.f32 %v1618, 0.0
    %v1647 = vmax.f32 %v1624, 0.0
    %v1648 = vmax.f32 %v1630, 0.0
    %v1649 = vld [vmem:[#allocation2] sm:$0xff]
    %v1650 = vld [vmem:[#allocation2 + $0x8] sm:$0xff]
    %v1651 = vld [vmem:[#allocation2 + $0x10] sm:$0xff]
    %v1652 = vld [vmem:[#allocation2 + $0x18] sm:$0xff]
    %v1653 = vld [vmem:[#allocation2 + $0x20] sm:$0xff]
    %v1654 = vld [vmem:[#allocation2 + $0x28] sm:$0xff]
    %v1655 = vld [vmem:[#allocation2 + $0x30] sm:$0xff]
    %v1656 = vld [vmem:[#allocation2 + $0x38] sm:$0xff]
    %v1657 = vld [vmem:[#allocation2 + $0x40] sm:$0xff]
    %v1658 = vld [vmem:[#allocation2 + $0x48] sm:$0xff]
    %v1659 = vld [vmem:[#allocation2 + $0x50] sm:$0xff]
    %v1660 = vld [vmem:[#allocation2 + $0x58] sm:$0xff]
    %v1661 = vld [vmem:[#allocation2 + $0x60] sm:$0xff]
    %v1662 = vld [vmem:[#allocation2 + $0x68] sm:$0xff]
    %v1663 = vld [vmem:[#allocation2 + $0x70] sm:$0xff]
    %v1664 = vld [vmem:[#allocation2 + $0x78] sm:$0xff]
    %v1665 = vld [vmem:[#allocation2 + $0x80] sm:$0xff]
    %v1666 = vld [vmem:[#allocation2 + $0x88] sm:$0xff]
    %v1667 = vld [vmem:[#allocation2 + $0x90] sm:$0xff]
    %v1668 = vld [vmem:[#allocation2 + $0x98] sm:$0xff]
    %v1669 = vld [vmem:[#allocation2 + $0xa0] sm:$0xff]
    %v1670 = vld [vmem:[#allocation2 + $0xa8] sm:$0xff]
    %v1671 = vld [vmem:[#allocation2 + $0xb0] sm:$0xff]
    %v1672 = vld [vmem:[#allocation2 + $0xb8] sm:$0xff]
    %v1673 = vld [vmem:[#allocation2 + $0xc0] sm:$0xff]
    %v1674 = vld [vmem:[#allocation2 + $0xc8] sm:$0xff]
    %v1675 = vld [vmem:[#allocation2 + $0xd0] sm:$0xff]
    %v1676 = vld [vmem:[#allocation2 + $0xd8] sm:$0xff]
    %v1677 = vld [vmem:[#allocation2 + $0xe0] sm:$0xff]
    %v1678 = vld [vmem:[#allocation2 + $0xe8] sm:$0xff]
    %v1679 = vld [vmem:[#allocation2 + $0xf0] sm:$0xff]
    %v1680 = vld [vmem:[#allocation2 + $0xf8] sm:$0xff]
    %s1681 = scalar_lea.vmem %s4, 2
    %v1682 = vld [vmem:[%s1681] ss:$4 sm:$0x3]
    %v1684 = vlaneseq
    %v1685 = vshrl.u32 %v1684, 7
    %v1686 = vsub.s32 0, %v1685
    %v1687 = vrot.slane %v1682, %v1686
    %v1688 = vlaneseq
    %v1689 = vshrl.u32 %v1688, 7
    %v1690 = vsub.s32 1, %v1689
    %v1691 = vrot.slane %v1682, %v1690
    %v1694 = vand.u32 %v1680, 4294901760
    %1695 = vmatprep.subr.mxu0 %v1694
    %v1696 = vand.u32 %v1679, 4294901760
    %1697 = vmatpush1.msra.mxu0 %v1696
    %v1698 = vand.u32 %v1678, 4294901760
    %1699 = vmatprep.subr.mxu0 %v1698
    %v1700 = vand.u32 %v1677, 4294901760
    %1701 = vmatpush1.msra.mxu0 %v1700
    %v1702 = vand.u32 %v1676, 4294901760
    %1703 = vmatprep.subr.mxu0 %v1702
    %v1704 = vand.u32 %v1675, 4294901760
    %1705 = vmatpush1.msra.mxu0 %v1704
    %v1706 = vand.u32 %v1674, 4294901760
    %1707 = vmatprep.subr.mxu0 %v1706
    %v1708 = vand.u32 %v1673, 4294901760
    %1709 = vmatpush1.msra.mxu0 %v1708
    %v1710 = vand.u32 %v1672, 4294901760
    %1711 = vmatprep.subr.mxu0 %v1710
    %v1712 = vand.u32 %v1671, 4294901760
    %1713 = vmatpush1.msra.mxu0 %v1712
    %v1714 = vand.u32 %v1670, 4294901760
    %1715 = vmatprep.subr.mxu0 %v1714
    %v1716 = vand.u32 %v1669, 4294901760
    %1717 = vmatpush1.msra.mxu0 %v1716
    %v1718 = vand.u32 %v1668, 4294901760
    %1719 = vmatprep.subr.mxu0 %v1718
    %v1720 = vand.u32 %v1667, 4294901760
    %1721 = vmatpush1.msra.mxu0 %v1720
    %v1722 = vand.u32 %v1666, 4294901760
    %1723 = vmatprep.subr.mxu0 %v1722
    %v1724 = vand.u32 %v1665, 4294901760
    %1725 = vmatpush1.msra.mxu0 %v1724
    %v1726 = vand.u32 %v1664, 4294901760
    %1727 = vmatprep.subr.mxu0 %v1726
    %v1728 = vand.u32 %v1663, 4294901760
    %1729 = vmatpush1.msra.mxu0 %v1728
    %v1730 = vand.u32 %v1662, 4294901760
    %1731 = vmatprep.subr.mxu0 %v1730
    %v1732 = vand.u32 %v1661, 4294901760
    %1733 = vmatpush1.msra.mxu0 %v1732
    %v1734 = vand.u32 %v1660, 4294901760
    %1735 = vmatprep.subr.mxu0 %v1734
    %v1736 = vand.u32 %v1659, 4294901760
    %1737 = vmatpush1.msra.mxu0 %v1736
    %v1738 = vand.u32 %v1658, 4294901760
    %1739 = vmatprep.subr.mxu0 %v1738
    %v1740 = vand.u32 %v1657, 4294901760
    %1741 = vmatpush1.msra.mxu0 %v1740
    %v1742 = vand.u32 %v1656, 4294901760
    %1743 = vmatprep.subr.mxu0 %v1742
    %v1744 = vand.u32 %v1655, 4294901760
    %1745 = vmatpush1.msra.mxu0 %v1744
    %v1746 = vand.u32 %v1654, 4294901760
    %1747 = vmatprep.subr.mxu0 %v1746
    %v1748 = vand.u32 %v1653, 4294901760
    %1749 = vmatpush1.msra.mxu0 %v1748
    %v1750 = vand.u32 %v1652, 4294901760
    %1751 = vmatprep.subr.mxu0 %v1750
    %v1752 = vand.u32 %v1651, 4294901760
    %1753 = vmatpush1.msra.mxu0 %v1752
    %v1754 = vand.u32 %v1650, 4294901760
    %1755 = vmatprep.subr.mxu0 %v1754
    %v1756 = vand.u32 %v1649, 4294901760
    %1757 = vmatpush1.msra.mxu0 %v1756
    %1758 = vmatprep.subr.mxu0 0.0
    %1759 = vmatpush2.msra.mxu0 0.0
    %1760 = vmatprep.subr.mxu0 0.0
    %1761 = vmatpush2.msra.mxu0 0.0
    %1762 = vmatprep.subr.mxu0 0.0
    %1763 = vmatpush2.msra.mxu0 0.0
    %1764 = vmatprep.subr.mxu0 0.0
    %1765 = vmatpush2.msra.mxu0 0.0
    %1766 = vmatprep.subr.mxu0 0.0
    %1767 = vmatpush2.msra.mxu0 0.0
    %1768 = vmatprep.subr.mxu0 0.0
    %1769 = vmatpush2.msra.mxu0 0.0
    %1770 = vmatprep.subr.mxu0 0.0
    %1771 = vmatpush2.msra.mxu0 0.0
    %1772 = vmatprep.subr.mxu0 0.0
    %1773 = vmatpush2.msra.mxu0 0.0
    %1774 = vmatprep.subr.mxu0 0.0
    %1775 = vmatpush2.msra.mxu0 0.0
    %1776 = vmatprep.subr.mxu0 0.0
    %1777 = vmatpush2.msra.mxu0 0.0
    %1778 = vmatprep.subr.mxu0 0.0
    %1779 = vmatpush2.msra.mxu0 0.0
    %1780 = vmatprep.subr.mxu0 0.0
    %1781 = vmatpush2.msra.mxu0 0.0
    %1782 = vmatprep.subr.mxu0 0.0
    %1783 = vmatpush2.msra.mxu0 0.0
    %1784 = vmatprep.subr.mxu0 0.0
    %1785 = vmatpush2.msra.mxu0 0.0
    %1786 = vmatprep.subr.mxu0 0.0
    %1787 = vmatpush2.msra.mxu0 0.0
    %1788 = vmatprep.subr.mxu0 0.0
    %1789 = vmatpush2.msra.mxu0 0.0
    %1790 = vmatprep.mubr.f32.mxu0 0.0
    %v1791 = vand.u32 %v1633, 4294901760
    %v1792 = vsub.f32 %v1633, %v1791
    %v1793 = vand.u32 %v1792, 4294901760
    %v1794 = vsub.f32 %v1792, %v1793
    %v1795 = vand.u32 %v1794, 4294901760
    %1796 = vmatmul.mubr.f32.gmra.mxu0 %v1795
    %v1797 = vpop.f32.mrf.mxu0
    %v1798 = vadd.f32 %v1687, %v1797
    %v1799 = vpop.f32.mrf.mxu0
    %v1800 = vadd.f32 %v1691, %v1799
    %1801 = vmatprep.mubr.f32.mxu0 0.0
    %v1802 = vand.u32 %v1634, 4294901760
    %v1803 = vsub.f32 %v1634, %v1802
    %v1804 = vand.u32 %v1803, 4294901760
    %v1805 = vsub.f32 %v1803, %v1804
    %v1806 = vand.u32 %v1805, 4294901760
    %1807 = vmatmul.mubr.f32.gmra.mxu0 %v1806
    %v1808 = vpop.f32.mrf.mxu0
    %v1809 = vadd.f32 %v1687, %v1808
    %v1810 = vpop.f32.mrf.mxu0
    %v1811 = vadd.f32 %v1691, %v1810
    %1812 = vmatprep.mubr.f32.mxu0 0.0
    %v1813 = vand.u32 %v1635, 4294901760
    %v1814 = vsub.f32 %v1635, %v1813
    %v1815 = vand.u32 %v1814, 4294901760
    %v1816 = vsub.f32 %v1814, %v1815
    %v1817 = vand.u32 %v1816, 4294901760
    %1818 = vmatmul.mubr.f32.gmra.mxu0 %v1817
    %v1819 = vpop.f32.mrf.mxu0
    %v1820 = vadd.f32 %v1687, %v1819
    %v1821 = vpop.f32.mrf.mxu0
    %v1822 = vadd.f32 %v1691, %v1821
    %1823 = vmatprep.mubr.f32.mxu0 0.0
    %v1824 = vand.u32 %v1636, 4294901760
    %v1825 = vsub.f32 %v1636, %v1824
    %v1826 = vand.u32 %v1825, 4294901760
    %v1827 = vsub.f32 %v1825, %v1826
    %v1828 = vand.u32 %v1827, 4294901760
    %1829 = vmatmul.mubr.f32.gmra.mxu0 %v1828
    %v1830 = vpop.f32.mrf.mxu0
    %v1831 = vadd.f32 %v1687, %v1830
    %v1832 = vpop.f32.mrf.mxu0
    %v1833 = vadd.f32 %v1691, %v1832
    %1834 = vmatprep.mubr.f32.mxu0 0.0
    %v1835 = vand.u32 %v1637, 4294901760
    %v1836 = vsub.f32 %v1637, %v1835
    %v1837 = vand.u32 %v1836, 4294901760
    %v1838 = vsub.f32 %v1836, %v1837
    %v1839 = vand.u32 %v1838, 4294901760
    %1840 = vmatmul.mubr.f32.gmra.mxu0 %v1839
    %v1841 = vpop.f32.mrf.mxu0
    %v1842 = vadd.f32 %v1687, %v1841
    %v1843 = vpop.f32.mrf.mxu0
    %v1844 = vadd.f32 %v1691, %v1843
    %1845 = vmatprep.mubr.f32.mxu0 0.0
    %v1846 = vand.u32 %v1638, 4294901760
    %v1847 = vsub.f32 %v1638, %v1846
    %v1848 = vand.u32 %v1847, 4294901760
    %v1849 = vsub.f32 %v1847, %v1848
    %v1850 = vand.u32 %v1849, 4294901760
    %1851 = vmatmul.mubr.f32.gmra.mxu0 %v1850
    %v1852 = vpop.f32.mrf.mxu0
    %v1853 = vadd.f32 %v1687, %v1852
    %v1854 = vpop.f32.mrf.mxu0
    %v1855 = vadd.f32 %v1691, %v1854
    %1856 = vmatprep.mubr.f32.mxu0 0.0
    %v1857 = vand.u32 %v1639, 4294901760
    %v1858 = vsub.f32 %v1639, %v1857
    %v1859 = vand.u32 %v1858, 4294901760
    %v1860 = vsub.f32 %v1858, %v1859
    %v1861 = vand.u32 %v1860, 4294901760
    %1862 = vmatmul.mubr.f32.gmra.mxu0 %v1861
    %v1863 = vpop.f32.mrf.mxu0
    %v1864 = vadd.f32 %v1687, %v1863
    %v1865 = vpop.f32.mrf.mxu0
    %v1866 = vadd.f32 %v1691, %v1865
    %1867 = vmatprep.mubr.f32.mxu0 0.0
    %v1868 = vand.u32 %v1640, 4294901760
    %v1869 = vsub.f32 %v1640, %v1868
    %v1870 = vand.u32 %v1869, 4294901760
    %v1871 = vsub.f32 %v1869, %v1870
    %v1872 = vand.u32 %v1871, 4294901760
    %1873 = vmatmul.mubr.f32.gmra.mxu0 %v1872
    %v1874 = vpop.f32.mrf.mxu0
    %v1875 = vadd.f32 %v1687, %v1874
    %v1876 = vpop.f32.mrf.mxu0
    %v1877 = vadd.f32 %v1691, %v1876
    %1878 = vmatprep.mubr.f32.mxu0 0.0
    %v1879 = vand.u32 %v1641, 4294901760
    %v1880 = vsub.f32 %v1641, %v1879
    %v1881 = vand.u32 %v1880, 4294901760
    %v1882 = vsub.f32 %v1880, %v1881
    %v1883 = vand.u32 %v1882, 4294901760
    %1884 = vmatmul.mubr.f32.gmra.mxu0 %v1883
    %v1885 = vpop.f32.mrf.mxu0
    %v1886 = vadd.f32 %v1687, %v1885
    %v1887 = vpop.f32.mrf.mxu0
    %v1888 = vadd.f32 %v1691, %v1887
    %1889 = vmatprep.mubr.f32.mxu0 0.0
    %v1890 = vand.u32 %v1642, 4294901760
    %v1891 = vsub.f32 %v1642, %v1890
    %v1892 = vand.u32 %v1891, 4294901760
    %v1893 = vsub.f32 %v1891, %v1892
    %v1894 = vand.u32 %v1893, 4294901760
    %1895 = vmatmul.mubr.f32.gmra.mxu0 %v1894
    %v1896 = vpop.f32.mrf.mxu0
    %v1897 = vadd.f32 %v1687, %v1896
    %v1898 = vpop.f32.mrf.mxu0
    %v1899 = vadd.f32 %v1691, %v1898
    %1900 = vmatprep.mubr.f32.mxu0 0.0
    %v1901 = vand.u32 %v1643, 4294901760
    %v1902 = vsub.f32 %v1643, %v1901
    %v1903 = vand.u32 %v1902, 4294901760
    %v1904 = vsub.f32 %v1902, %v1903
    %v1905 = vand.u32 %v1904, 4294901760
    %1906 = vmatmul.mubr.f32.gmra.mxu0 %v1905
    %v1907 = vpop.f32.mrf.mxu0
    %v1908 = vadd.f32 %v1687, %v1907
    %v1909 = vpop.f32.mrf.mxu0
    %v1910 = vadd.f32 %v1691, %v1909
    %1911 = vmatprep.mubr.f32.mxu0 0.0
    %v1912 = vand.u32 %v1644, 4294901760
    %v1913 = vsub.f32 %v1644, %v1912
    %v1914 = vand.u32 %v1913, 4294901760
    %v1915 = vsub.f32 %v1913, %v1914
    %v1916 = vand.u32 %v1915, 4294901760
    %1917 = vmatmul.mubr.f32.gmra.mxu0 %v1916
    %v1918 = vpop.f32.mrf.mxu0
    %v1919 = vadd.f32 %v1687, %v1918
    %v1920 = vpop.f32.mrf.mxu0
    %v1921 = vadd.f32 %v1691, %v1920
    %1922 = vmatprep.mubr.f32.mxu0 0.0
    %v1923 = vand.u32 %v1645, 4294901760
    %v1924 = vsub.f32 %v1645, %v1923
    %v1925 = vand.u32 %v1924, 4294901760
    %v1926 = vsub.f32 %v1924, %v1925
    %v1927 = vand.u32 %v1926, 4294901760
    %1928 = vmatmul.mubr.f32.gmra.mxu0 %v1927
    %v1929 = vpop.f32.mrf.mxu0
    %v1930 = vadd.f32 %v1687, %v1929
    %v1931 = vpop.f32.mrf.mxu0
    %v1932 = vadd.f32 %v1691, %v1931
    %1933 = vmatprep.mubr.f32.mxu0 0.0
    %v1934 = vand.u32 %v1646, 4294901760
    %v1935 = vsub.f32 %v1646, %v1934
    %v1936 = vand.u32 %v1935, 4294901760
    %v1937 = vsub.f32 %v1935, %v1936
    %v1938 = vand.u32 %v1937, 4294901760
    %1939 = vmatmul.mubr.f32.gmra.mxu0 %v1938
    %v1940 = vpop.f32.mrf.mxu0
    %v1941 = vadd.f32 %v1687, %v1940
    %v1942 = vpop.f32.mrf.mxu0
    %v1943 = vadd.f32 %v1691, %v1942
    %1944 = vmatprep.mubr.f32.mxu0 0.0
    %v1945 = vand.u32 %v1647, 4294901760
    %v1946 = vsub.f32 %v1647, %v1945
    %v1947 = vand.u32 %v1946, 4294901760
    %v1948 = vsub.f32 %v1946, %v1947
    %v1949 = vand.u32 %v1948, 4294901760
    %1950 = vmatmul.mubr.f32.gmra.mxu0 %v1949
    %v1951 = vpop.f32.mrf.mxu0
    %v1952 = vadd.f32 %v1687, %v1951
    %v1953 = vpop.f32.mrf.mxu0
    %v1954 = vadd.f32 %v1691, %v1953
    %1955 = vmatprep.mubr.f32.mxu0 0.0
    %v1956 = vand.u32 %v1648, 4294901760
    %v1957 = vsub.f32 %v1648, %v1956
    %v1958 = vand.u32 %v1957, 4294901760
    %v1959 = vsub.f32 %v1957, %v1958
    %v1960 = vand.u32 %v1959, 4294901760
    %1961 = vmatmul.mubr.f32.gmra.mxu0 %v1960
    %v1962 = vpop.f32.mrf.mxu0
    %v1963 = vadd.f32 %v1687, %v1962
    %v1964 = vpop.f32.mrf.mxu0
    %v1965 = vadd.f32 %v1691, %v1964
    %1966 = vdwg.mxu0
    %v1967 = vand.u32 %v1680, 4294901760
    %v1968 = vsub.f32 %v1680, %v1967
    %v1969 = vand.u32 %v1968, 4294901760
    %v1970 = vsub.f32 %v1968, %v1969
    %v1971 = vand.u32 %v1970, 4294901760
    %1972 = vmatprep.subr.mxu0 %v1971
    %v1973 = vand.u32 %v1679, 4294901760
    %v1974 = vsub.f32 %v1679, %v1973
    %v1975 = vand.u32 %v1974, 4294901760
    %v1976 = vsub.f32 %v1974, %v1975
    %v1977 = vand.u32 %v1976, 4294901760
    %1978 = vmatpush1.msra.mxu0 %v1977
    %v1979 = vand.u32 %v1678, 4294901760
    %v1980 = vsub.f32 %v1678, %v1979
    %v1981 = vand.u32 %v1980, 4294901760
    %v1982 = vsub.f32 %v1980, %v1981
    %v1983 = vand.u32 %v1982, 4294901760
    %1984 = vmatprep.subr.mxu0 %v1983
    %v1985 = vand.u32 %v1677, 4294901760
    %v1986 = vsub.f32 %v1677, %v1985
    %v1987 = vand.u32 %v1986, 4294901760
    %v1988 = vsub.f32 %v1986, %v1987
    %v1989 = vand.u32 %v1988, 4294901760
    %1990 = vmatpush1.msra.mxu0 %v1989
    %v1991 = vand.u32 %v1676, 4294901760
    %v1992 = vsub.f32 %v1676, %v1991
    %v1993 = vand.u32 %v1992, 4294901760
    %v1994 = vsub.f32 %v1992, %v1993
    %v1995 = vand.u32 %v1994, 4294901760
    %1996 = vmatprep.subr.mxu0 %v1995
    %v1997 = vand.u32 %v1675, 4294901760
    %v1998 = vsub.f32 %v1675, %v1997
    %v1999 = vand.u32 %v1998, 4294901760
    %v2000 = vsub.f32 %v1998, %v1999
    %v2001 = vand.u32 %v2000, 4294901760
    %2002 = vmatpush1.msra.mxu0 %v2001
    %v2003 = vand.u32 %v1674, 4294901760
    %v2004 = vsub.f32 %v1674, %v2003
    %v2005 = vand.u32 %v2004, 4294901760
    %v2006 = vsub.f32 %v2004, %v2005
    %v2007 = vand.u32 %v2006, 4294901760
    %2008 = vmatprep.subr.mxu0 %v2007
    %v2009 = vand.u32 %v1673, 4294901760
    %v2010 = vsub.f32 %v1673, %v2009
    %v2011 = vand.u32 %v2010, 4294901760
    %v2012 = vsub.f32 %v2010, %v2011
    %v2013 = vand.u32 %v2012, 4294901760
    %2014 = vmatpush1.msra.mxu0 %v2013
    %v2015 = vand.u32 %v1672, 4294901760
    %v2016 = vsub.f32 %v1672, %v2015
    %v2017 = vand.u32 %v2016, 4294901760
    %v2018 = vsub.f32 %v2016, %v2017
    %v2019 = vand.u32 %v2018, 4294901760
    %2020 = vmatprep.subr.mxu0 %v2019
    %v2021 = vand.u32 %v1671, 4294901760
    %v2022 = vsub.f32 %v1671, %v2021
    %v2023 = vand.u32 %v2022, 4294901760
    %v2024 = vsub.f32 %v2022, %v2023
    %v2025 = vand.u32 %v2024, 4294901760
    %2026 = vmatpush1.msra.mxu0 %v2025
    %v2027 = vand.u32 %v1670, 4294901760
    %v2028 = vsub.f32 %v1670, %v2027
    %v2029 = vand.u32 %v2028, 4294901760
    %v2030 = vsub.f32 %v2028, %v2029
    %v2031 = vand.u32 %v2030, 4294901760
    %2032 = vmatprep.subr.mxu0 %v2031
    %v2033 = vand.u32 %v1669, 4294901760
    %v2034 = vsub.f32 %v1669, %v2033
    %v2035 = vand.u32 %v2034, 4294901760
    %v2036 = vsub.f32 %v2034, %v2035
    %v2037 = vand.u32 %v2036, 4294901760
    %2038 = vmatpush1.msra.mxu0 %v2037
    %v2039 = vand.u32 %v1668, 4294901760
    %v2040 = vsub.f32 %v1668, %v2039
    %v2041 = vand.u32 %v2040, 4294901760
    %v2042 = vsub.f32 %v2040, %v2041
    %v2043 = vand.u32 %v2042, 4294901760
    %2044 = vmatprep.subr.mxu0 %v2043
    %v2045 = vand.u32 %v1667, 4294901760
    %v2046 = vsub.f32 %v1667, %v2045
    %v2047 = vand.u32 %v2046, 4294901760
    %v2048 = vsub.f32 %v2046, %v2047
    %v2049 = vand.u32 %v2048, 4294901760
    %2050 = vmatpush1.msra.mxu0 %v2049
    %v2051 = vand.u32 %v1666, 4294901760
    %v2052 = vsub.f32 %v1666, %v2051
    %v2053 = vand.u32 %v2052, 4294901760
    %v2054 = vsub.f32 %v2052, %v2053
    %v2055 = vand.u32 %v2054, 4294901760
    %2056 = vmatprep.subr.mxu0 %v2055
    %v2057 = vand.u32 %v1665, 4294901760
    %v2058 = vsub.f32 %v1665, %v2057
    %v2059 = vand.u32 %v2058, 4294901760
    %v2060 = vsub.f32 %v2058, %v2059
    %v2061 = vand.u32 %v2060, 4294901760
    %2062 = vmatpush1.msra.mxu0 %v2061
    %v2063 = vand.u32 %v1664, 4294901760
    %v2064 = vsub.f32 %v1664, %v2063
    %v2065 = vand.u32 %v2064, 4294901760
    %v2066 = vsub.f32 %v2064, %v2065
    %v2067 = vand.u32 %v2066, 4294901760
    %2068 = vmatprep.subr.mxu0 %v2067
    %v2069 = vand.u32 %v1663, 4294901760
    %v2070 = vsub.f32 %v1663, %v2069
    %v2071 = vand.u32 %v2070, 4294901760
    %v2072 = vsub.f32 %v2070, %v2071
    %v2073 = vand.u32 %v2072, 4294901760
    %2074 = vmatpush1.msra.mxu0 %v2073
    %v2075 = vand.u32 %v1662, 4294901760
    %v2076 = vsub.f32 %v1662, %v2075
    %v2077 = vand.u32 %v2076, 4294901760
    %v2078 = vsub.f32 %v2076, %v2077
    %v2079 = vand.u32 %v2078, 4294901760
    %2080 = vmatprep.subr.mxu0 %v2079
    %v2081 = vand.u32 %v1661, 4294901760
    %v2082 = vsub.f32 %v1661, %v2081
    %v2083 = vand.u32 %v2082, 4294901760
    %v2084 = vsub.f32 %v2082, %v2083
    %v2085 = vand.u32 %v2084, 4294901760
    %2086 = vmatpush1.msra.mxu0 %v2085
    %v2087 = vand.u32 %v1660, 4294901760
    %v2088 = vsub.f32 %v1660, %v2087
    %v2089 = vand.u32 %v2088, 4294901760
    %v2090 = vsub.f32 %v2088, %v2089
    %v2091 = vand.u32 %v2090, 4294901760
    %2092 = vmatprep.subr.mxu0 %v2091
    %v2093 = vand.u32 %v1659, 4294901760
    %v2094 = vsub.f32 %v1659, %v2093
    %v2095 = vand.u32 %v2094, 4294901760
    %v2096 = vsub.f32 %v2094, %v2095
    %v2097 = vand.u32 %v2096, 4294901760
    %2098 = vmatpush1.msra.mxu0 %v2097
    %v2099 = vand.u32 %v1658, 4294901760
    %v2100 = vsub.f32 %v1658, %v2099
    %v2101 = vand.u32 %v2100, 4294901760
    %v2102 = vsub.f32 %v2100, %v2101
    %v2103 = vand.u32 %v2102, 4294901760
    %2104 = vmatprep.subr.mxu0 %v2103
    %v2105 = vand.u32 %v1657, 4294901760
    %v2106 = vsub.f32 %v1657, %v2105
    %v2107 = vand.u32 %v2106, 4294901760
    %v2108 = vsub.f32 %v2106, %v2107
    %v2109 = vand.u32 %v2108, 4294901760
    %2110 = vmatpush1.msra.mxu0 %v2109
    %v2111 = vand.u32 %v1656, 4294901760
    %v2112 = vsub.f32 %v1656, %v2111
    %v2113 = vand.u32 %v2112, 4294901760
    %v2114 = vsub.f32 %v2112, %v2113
    %v2115 = vand.u32 %v2114, 4294901760
    %2116 = vmatprep.subr.mxu0 %v2115
    %v2117 = vand.u32 %v1655, 4294901760
    %v2118 = vsub.f32 %v1655, %v2117
    %v2119 = vand.u32 %v2118, 4294901760
    %v2120 = vsub.f32 %v2118, %v2119
    %v2121 = vand.u32 %v2120, 4294901760
    %2122 = vmatpush1.msra.mxu0 %v2121
    %v2123 = vand.u32 %v1654, 4294901760
    %v2124 = vsub.f32 %v1654, %v2123
    %v2125 = vand.u32 %v2124, 4294901760
    %v2126 = vsub.f32 %v2124, %v2125
    %v2127 = vand.u32 %v2126, 4294901760
    %2128 = vmatprep.subr.mxu0 %v2127
    %v2129 = vand.u32 %v1653, 4294901760
    %v2130 = vsub.f32 %v1653, %v2129
    %v2131 = vand.u32 %v2130, 4294901760
    %v2132 = vsub.f32 %v2130, %v2131
    %v2133 = vand.u32 %v2132, 4294901760
    %2134 = vmatpush1.msra.mxu0 %v2133
    %v2135 = vand.u32 %v1652, 4294901760
    %v2136 = vsub.f32 %v1652, %v2135
    %v2137 = vand.u32 %v2136, 4294901760
    %v2138 = vsub.f32 %v2136, %v2137
    %v2139 = vand.u32 %v2138, 4294901760
    %2140 = vmatprep.subr.mxu0 %v2139
    %v2141 = vand.u32 %v1651, 4294901760
    %v2142 = vsub.f32 %v1651, %v2141
    %v2143 = vand.u32 %v2142, 4294901760
    %v2144 = vsub.f32 %v2142, %v2143
    %v2145 = vand.u32 %v2144, 4294901760
    %2146 = vmatpush1.msra.mxu0 %v2145
    %v2147 = vand.u32 %v1650, 4294901760
    %v2148 = vsub.f32 %v1650, %v2147
    %v2149 = vand.u32 %v2148, 4294901760
    %v2150 = vsub.f32 %v2148, %v2149
    %v2151 = vand.u32 %v2150, 4294901760
    %2152 = vmatprep.subr.mxu0 %v2151
    %v2153 = vand.u32 %v1649, 4294901760
    %v2154 = vsub.f32 %v1649, %v2153
    %v2155 = vand.u32 %v2154, 4294901760
    %v2156 = vsub.f32 %v2154, %v2155
    %v2157 = vand.u32 %v2156, 4294901760
    %2158 = vmatpush1.msra.mxu0 %v2157
    %2159 = vmatprep.subr.mxu0 0.0
    %2160 = vmatpush2.msra.mxu0 0.0
    %2161 = vmatprep.subr.mxu0 0.0
    %2162 = vmatpush2.msra.mxu0 0.0
    %2163 = vmatprep.subr.mxu0 0.0
    %2164 = vmatpush2.msra.mxu0 0.0
    %2165 = vmatprep.subr.mxu0 0.0
    %2166 = vmatpush2.msra.mxu0 0.0
    %2167 = vmatprep.subr.mxu0 0.0
    %2168 = vmatpush2.msra.mxu0 0.0
    %2169 = vmatprep.subr.mxu0 0.0
    %2170 = vmatpush2.msra.mxu0 0.0
    %2171 = vmatprep.subr.mxu0 0.0
    %2172 = vmatpush2.msra.mxu0 0.0
    %2173 = vmatprep.subr.mxu0 0.0
    %2174 = vmatpush2.msra.mxu0 0.0
    %2175 = vmatprep.subr.mxu0 0.0
    %2176 = vmatpush2.msra.mxu0 0.0
    %2177 = vmatprep.subr.mxu0 0.0
    %2178 = vmatpush2.msra.mxu0 0.0
    %2179 = vmatprep.subr.mxu0 0.0
    %2180 = vmatpush2.msra.mxu0 0.0
    %2181 = vmatprep.subr.mxu0 0.0
    %2182 = vmatpush2.msra.mxu0 0.0
    %2183 = vmatprep.subr.mxu0 0.0
    %2184 = vmatpush2.msra.mxu0 0.0
    %2185 = vmatprep.subr.mxu0 0.0
    %2186 = vmatpush2.msra.mxu0 0.0
    %2187 = vmatprep.subr.mxu0 0.0
    %2188 = vmatpush2.msra.mxu0 0.0
    %2189 = vmatprep.subr.mxu0 0.0
    %2190 = vmatpush2.msra.mxu0 0.0
    %2191 = vmatprep.mubr.f32.mxu0 0.0
    %v2192 = vand.u32 %v1633, 4294901760
    %2193 = vmatmul.mubr.f32.gmra.mxu0 %v2192
    %v2194 = vpop.f32.mrf.mxu0
    %v2195 = vadd.f32 %v1798, %v2194
    %v2196 = vpop.f32.mrf.mxu0
    %v2197 = vadd.f32 %v1800, %v2196
    %2198 = vmatprep.mubr.f32.mxu0 0.0
    %v2199 = vand.u32 %v1634, 4294901760
    %2200 = vmatmul.mubr.f32.gmra.mxu0 %v2199
    %v2201 = vpop.f32.mrf.mxu0
    %v2202 = vadd.f32 %v1809, %v2201
    %v2203 = vpop.f32.mrf.mxu0
    %v2204 = vadd.f32 %v1811, %v2203
    %2205 = vmatprep.mubr.f32.mxu0 0.0
    %v2206 = vand.u32 %v1635, 4294901760
    %2207 = vmatmul.mubr.f32.gmra.mxu0 %v2206
    %v2208 = vpop.f32.mrf.mxu0
    %v2209 = vadd.f32 %v1820, %v2208
    %v2210 = vpop.f32.mrf.mxu0
    %v2211 = vadd.f32 %v1822, %v2210
    %2212 = vmatprep.mubr.f32.mxu0 0.0
    %v2213 = vand.u32 %v1636, 4294901760
    %2214 = vmatmul.mubr.f32.gmra.mxu0 %v2213
    %v2215 = vpop.f32.mrf.mxu0
    %v2216 = vadd.f32 %v1831, %v2215
    %v2217 = vpop.f32.mrf.mxu0
    %v2218 = vadd.f32 %v1833, %v2217
    %2219 = vmatprep.mubr.f32.mxu0 0.0
    %v2220 = vand.u32 %v1637, 4294901760
    %2221 = vmatmul.mubr.f32.gmra.mxu0 %v2220
    %v2222 = vpop.f32.mrf.mxu0
    %v2223 = vadd.f32 %v1842, %v2222
    %v2224 = vpop.f32.mrf.mxu0
    %v2225 = vadd.f32 %v1844, %v2224
    %2226 = vmatprep.mubr.f32.mxu0 0.0
    %v2227 = vand.u32 %v1638, 4294901760
    %2228 = vmatmul.mubr.f32.gmra.mxu0 %v2227
    %v2229 = vpop.f32.mrf.mxu0
    %v2230 = vadd.f32 %v1853, %v2229
    %v2231 = vpop.f32.mrf.mxu0
    %v2232 = vadd.f32 %v1855, %v2231
    %2233 = vmatprep.mubr.f32.mxu0 0.0
    %v2234 = vand.u32 %v1639, 4294901760
    %2235 = vmatmul.mubr.f32.gmra.mxu0 %v2234
    %v2236 = vpop.f32.mrf.mxu0
    %v2237 = vadd.f32 %v1864, %v2236
    %v2238 = vpop.f32.mrf.mxu0
    %v2239 = vadd.f32 %v1866, %v2238
    %2240 = vmatprep.mubr.f32.mxu0 0.0
    %v2241 = vand.u32 %v1640, 4294901760
    %2242 = vmatmul.mubr.f32.gmra.mxu0 %v2241
    %v2243 = vpop.f32.mrf.mxu0
    %v2244 = vadd.f32 %v1875, %v2243
    %v2245 = vpop.f32.mrf.mxu0
    %v2246 = vadd.f32 %v1877, %v2245
    %2247 = vmatprep.mubr.f32.mxu0 0.0
    %v2248 = vand.u32 %v1641, 4294901760
    %2249 = vmatmul.mubr.f32.gmra.mxu0 %v2248
    %v2250 = vpop.f32.mrf.mxu0
    %v2251 = vadd.f32 %v1886, %v2250
    %v2252 = vpop.f32.mrf.mxu0
    %v2253 = vadd.f32 %v1888, %v2252
    %2254 = vmatprep.mubr.f32.mxu0 0.0
    %v2255 = vand.u32 %v1642, 4294901760
    %2256 = vmatmul.mubr.f32.gmra.mxu0 %v2255
    %v2257 = vpop.f32.mrf.mxu0
    %v2258 = vadd.f32 %v1897, %v2257
    %v2259 = vpop.f32.mrf.mxu0
    %v2260 = vadd.f32 %v1899, %v2259
    %2261 = vmatprep.mubr.f32.mxu0 0.0
    %v2262 = vand.u32 %v1643, 4294901760
    %2263 = vmatmul.mubr.f32.gmra.mxu0 %v2262
    %v2264 = vpop.f32.mrf.mxu0
    %v2265 = vadd.f32 %v1908, %v2264
    %v2266 = vpop.f32.mrf.mxu0
    %v2267 = vadd.f32 %v1910, %v2266
    %2268 = vmatprep.mubr.f32.mxu0 0.0
    %v2269 = vand.u32 %v1644, 4294901760
    %2270 = vmatmul.mubr.f32.gmra.mxu0 %v2269
    %v2271 = vpop.f32.mrf.mxu0
    %v2272 = vadd.f32 %v1919, %v2271
    %v2273 = vpop.f32.mrf.mxu0
    %v2274 = vadd.f32 %v1921, %v2273
    %2275 = vmatprep.mubr.f32.mxu0 0.0
    %v2276 = vand.u32 %v1645, 4294901760
    %2277 = vmatmul.mubr.f32.gmra.mxu0 %v2276
    %v2278 = vpop.f32.mrf.mxu0
    %v2279 = vadd.f32 %v1930, %v2278
    %v2280 = vpop.f32.mrf.mxu0
    %v2281 = vadd.f32 %v1932, %v2280
    %2282 = vmatprep.mubr.f32.mxu0 0.0
    %v2283 = vand.u32 %v1646, 4294901760
    %2284 = vmatmul.mubr.f32.gmra.mxu0 %v2283
    %v2285 = vpop.f32.mrf.mxu0
    %v2286 = vadd.f32 %v1941, %v2285
    %v2287 = vpop.f32.mrf.mxu0
    %v2288 = vadd.f32 %v1943, %v2287
    %2289 = vmatprep.mubr.f32.mxu0 0.0
    %v2290 = vand.u32 %v1647, 4294901760
    %2291 = vmatmul.mubr.f32.gmra.mxu0 %v2290
    %v2292 = vpop.f32.mrf.mxu0
    %v2293 = vadd.f32 %v1952, %v2292
    %v2294 = vpop.f32.mrf.mxu0
    %v2295 = vadd.f32 %v1954, %v2294
    %2296 = vmatprep.mubr.f32.mxu0 0.0
    %v2297 = vand.u32 %v1648, 4294901760
    %2298 = vmatmul.mubr.f32.gmra.mxu0 %v2297
    %v2299 = vpop.f32.mrf.mxu0
    %v2300 = vadd.f32 %v1963, %v2299
    %v2301 = vpop.f32.mrf.mxu0
    %v2302 = vadd.f32 %v1965, %v2301
    %2303 = vdwg.mxu0
    %v2304 = vand.u32 %v1680, 4294901760
    %v2305 = vsub.f32 %v1680, %v2304
    %2306 = vmatprep.subr.mxu0 %v2305
    %v2307 = vand.u32 %v1679, 4294901760
    %v2308 = vsub.f32 %v1679, %v2307
    %2309 = vmatpush1.msra.mxu0 %v2308
    %v2310 = vand.u32 %v1678, 4294901760
    %v2311 = vsub.f32 %v1678, %v2310
    %2312 = vmatprep.subr.mxu0 %v2311
    %v2313 = vand.u32 %v1677, 4294901760
    %v2314 = vsub.f32 %v1677, %v2313
    %2315 = vmatpush1.msra.mxu0 %v2314
    %v2316 = vand.u32 %v1676, 4294901760
    %v2317 = vsub.f32 %v1676, %v2316
    %2318 = vmatprep.subr.mxu0 %v2317
    %v2319 = vand.u32 %v1675, 4294901760
    %v2320 = vsub.f32 %v1675, %v2319
    %2321 = vmatpush1.msra.mxu0 %v2320
    %v2322 = vand.u32 %v1674, 4294901760
    %v2323 = vsub.f32 %v1674, %v2322
    %2324 = vmatprep.subr.mxu0 %v2323
    %v2325 = vand.u32 %v1673, 4294901760
    %v2326 = vsub.f32 %v1673, %v2325
    %2327 = vmatpush1.msra.mxu0 %v2326
    %v2328 = vand.u32 %v1672, 4294901760
    %v2329 = vsub.f32 %v1672, %v2328
    %2330 = vmatprep.subr.mxu0 %v2329
    %v2331 = vand.u32 %v1671, 4294901760
    %v2332 = vsub.f32 %v1671, %v2331
    %2333 = vmatpush1.msra.mxu0 %v2332
    %v2334 = vand.u32 %v1670, 4294901760
    %v2335 = vsub.f32 %v1670, %v2334
    %2336 = vmatprep.subr.mxu0 %v2335
    %v2337 = vand.u32 %v1669, 4294901760
    %v2338 = vsub.f32 %v1669, %v2337
    %2339 = vmatpush1.msra.mxu0 %v2338
    %v2340 = vand.u32 %v1668, 4294901760
    %v2341 = vsub.f32 %v1668, %v2340
    %2342 = vmatprep.subr.mxu0 %v2341
    %v2343 = vand.u32 %v1667, 4294901760
    %v2344 = vsub.f32 %v1667, %v2343
    %2345 = vmatpush1.msra.mxu0 %v2344
    %v2346 = vand.u32 %v1666, 4294901760
    %v2347 = vsub.f32 %v1666, %v2346
    %2348 = vmatprep.subr.mxu0 %v2347
    %v2349 = vand.u32 %v1665, 4294901760
    %v2350 = vsub.f32 %v1665, %v2349
    %2351 = vmatpush1.msra.mxu0 %v2350
    %v2352 = vand.u32 %v1664, 4294901760
    %v2353 = vsub.f32 %v1664, %v2352
    %2354 = vmatprep.subr.mxu0 %v2353
    %v2355 = vand.u32 %v1663, 4294901760
    %v2356 = vsub.f32 %v1663, %v2355
    %2357 = vmatpush1.msra.mxu0 %v2356
    %v2358 = vand.u32 %v1662, 4294901760
    %v2359 = vsub.f32 %v1662, %v2358
    %2360 = vmatprep.subr.mxu0 %v2359
    %v2361 = vand.u32 %v1661, 4294901760
    %v2362 = vsub.f32 %v1661, %v2361
    %2363 = vmatpush1.msra.mxu0 %v2362
    %v2364 = vand.u32 %v1660, 4294901760
    %v2365 = vsub.f32 %v1660, %v2364
    %2366 = vmatprep.subr.mxu0 %v2365
    %v2367 = vand.u32 %v1659, 4294901760
    %v2368 = vsub.f32 %v1659, %v2367
    %2369 = vmatpush1.msra.mxu0 %v2368
    %v2370 = vand.u32 %v1658, 4294901760
    %v2371 = vsub.f32 %v1658, %v2370
    %2372 = vmatprep.subr.mxu0 %v2371
    %v2373 = vand.u32 %v1657, 4294901760
    %v2374 = vsub.f32 %v1657, %v2373
    %2375 = vmatpush1.msra.mxu0 %v2374
    %v2376 = vand.u32 %v1656, 4294901760
    %v2377 = vsub.f32 %v1656, %v2376
    %2378 = vmatprep.subr.mxu0 %v2377
    %v2379 = vand.u32 %v1655, 4294901760
    %v2380 = vsub.f32 %v1655, %v2379
    %2381 = vmatpush1.msra.mxu0 %v2380
    %v2382 = vand.u32 %v1654, 4294901760
    %v2383 = vsub.f32 %v1654, %v2382
    %2384 = vmatprep.subr.mxu0 %v2383
    %v2385 = vand.u32 %v1653, 4294901760
    %v2386 = vsub.f32 %v1653, %v2385
    %2387 = vmatpush1.msra.mxu0 %v2386
    %v2388 = vand.u32 %v1652, 4294901760
    %v2389 = vsub.f32 %v1652, %v2388
    %2390 = vmatprep.subr.mxu0 %v2389
    %v2391 = vand.u32 %v1651, 4294901760
    %v2392 = vsub.f32 %v1651, %v2391
    %2393 = vmatpush1.msra.mxu0 %v2392
    %v2394 = vand.u32 %v1650, 4294901760
    %v2395 = vsub.f32 %v1650, %v2394
    %2396 = vmatprep.subr.mxu0 %v2395
    %v2397 = vand.u32 %v1649, 4294901760
    %v2398 = vsub.f32 %v1649, %v2397
    %2399 = vmatpush1.msra.mxu0 %v2398
    %2400 = vmatprep.subr.mxu0 0.0
    %2401 = vmatpush2.msra.mxu0 0.0
    %2402 = vmatprep.subr.mxu0 0.0
    %2403 = vmatpush2.msra.mxu0 0.0
    %2404 = vmatprep.subr.mxu0 0.0
    %2405 = vmatpush2.msra.mxu0 0.0
    %2406 = vmatprep.subr.mxu0 0.0
    %2407 = vmatpush2.msra.mxu0 0.0
    %2408 = vmatprep.subr.mxu0 0.0
    %2409 = vmatpush2.msra.mxu0 0.0
    %2410 = vmatprep.subr.mxu0 0.0
    %2411 = vmatpush2.msra.mxu0 0.0
    %2412 = vmatprep.subr.mxu0 0.0
    %2413 = vmatpush2.msra.mxu0 0.0
    %2414 = vmatprep.subr.mxu0 0.0
    %2415 = vmatpush2.msra.mxu0 0.0
    %2416 = vmatprep.subr.mxu0 0.0
    %2417 = vmatpush2.msra.mxu0 0.0
    %2418 = vmatprep.subr.mxu0 0.0
    %2419 = vmatpush2.msra.mxu0 0.0
    %2420 = vmatprep.subr.mxu0 0.0
    %2421 = vmatpush2.msra.mxu0 0.0
    %2422 = vmatprep.subr.mxu0 0.0
    %2423 = vmatpush2.msra.mxu0 0.0
    %2424 = vmatprep.subr.mxu0 0.0
    %2425 = vmatpush2.msra.mxu0 0.0
    %2426 = vmatprep.subr.mxu0 0.0
    %2427 = vmatpush2.msra.mxu0 0.0
    %2428 = vmatprep.subr.mxu0 0.0
    %2429 = vmatpush2.msra.mxu0 0.0
    %2430 = vmatprep.subr.mxu0 0.0
    %2431 = vmatpush2.msra.mxu0 0.0
    %2432 = vmatprep.mubr.f32.mxu0 0.0
    %v2433 = vand.u32 %v1633, 4294901760
    %v2434 = vsub.f32 %v1633, %v2433
    %2435 = vmatmul.mubr.f32.gmra.mxu0 %v2434
    %v2436 = vpop.f32.mrf.mxu0
    %v2437 = vadd.f32 %v2195, %v2436
    %v2438 = vpop.f32.mrf.mxu0
    %v2439 = vadd.f32 %v2197, %v2438
    %2440 = vmatprep.mubr.f32.mxu0 0.0
    %v2441 = vand.u32 %v1634, 4294901760
    %v2442 = vsub.f32 %v1634, %v2441
    %2443 = vmatmul.mubr.f32.gmra.mxu0 %v2442
    %v2444 = vpop.f32.mrf.mxu0
    %v2445 = vadd.f32 %v2202, %v2444
    %v2446 = vpop.f32.mrf.mxu0
    %v2447 = vadd.f32 %v2204, %v2446
    %2448 = vmatprep.mubr.f32.mxu0 0.0
    %v2449 = vand.u32 %v1635, 4294901760
    %v2450 = vsub.f32 %v1635, %v2449
    %2451 = vmatmul.mubr.f32.gmra.mxu0 %v2450
    %v2452 = vpop.f32.mrf.mxu0
    %v2453 = vadd.f32 %v2209, %v2452
    %v2454 = vpop.f32.mrf.mxu0
    %v2455 = vadd.f32 %v2211, %v2454
    %2456 = vmatprep.mubr.f32.mxu0 0.0
    %v2457 = vand.u32 %v1636, 4294901760
    %v2458 = vsub.f32 %v1636, %v2457
    %2459 = vmatmul.mubr.f32.gmra.mxu0 %v2458
    %v2460 = vpop.f32.mrf.mxu0
    %v2461 = vadd.f32 %v2216, %v2460
    %v2462 = vpop.f32.mrf.mxu0
    %v2463 = vadd.f32 %v2218, %v2462
    %2464 = vmatprep.mubr.f32.mxu0 0.0
    %v2465 = vand.u32 %v1637, 4294901760
    %v2466 = vsub.f32 %v1637, %v2465
    %2467 = vmatmul.mubr.f32.gmra.mxu0 %v2466
    %v2468 = vpop.f32.mrf.mxu0
    %v2469 = vadd.f32 %v2223, %v2468
    %v2470 = vpop.f32.mrf.mxu0
    %v2471 = vadd.f32 %v2225, %v2470
    %2472 = vmatprep.mubr.f32.mxu0 0.0
    %v2473 = vand.u32 %v1638, 4294901760
    %v2474 = vsub.f32 %v1638, %v2473
    %2475 = vmatmul.mubr.f32.gmra.mxu0 %v2474
    %v2476 = vpop.f32.mrf.mxu0
    %v2477 = vadd.f32 %v2230, %v2476
    %v2478 = vpop.f32.mrf.mxu0
    %v2479 = vadd.f32 %v2232, %v2478
    %2480 = vmatprep.mubr.f32.mxu0 0.0
    %v2481 = vand.u32 %v1639, 4294901760
    %v2482 = vsub.f32 %v1639, %v2481
    %2483 = vmatmul.mubr.f32.gmra.mxu0 %v2482
    %v2484 = vpop.f32.mrf.mxu0
    %v2485 = vadd.f32 %v2237, %v2484
    %v2486 = vpop.f32.mrf.mxu0
    %v2487 = vadd.f32 %v2239, %v2486
    %2488 = vmatprep.mubr.f32.mxu0 0.0
    %v2489 = vand.u32 %v1640, 4294901760
    %v2490 = vsub.f32 %v1640, %v2489
    %2491 = vmatmul.mubr.f32.gmra.mxu0 %v2490
    %v2492 = vpop.f32.mrf.mxu0
    %v2493 = vadd.f32 %v2244, %v2492
    %v2494 = vpop.f32.mrf.mxu0
    %v2495 = vadd.f32 %v2246, %v2494
    %2496 = vmatprep.mubr.f32.mxu0 0.0
    %v2497 = vand.u32 %v1641, 4294901760
    %v2498 = vsub.f32 %v1641, %v2497
    %2499 = vmatmul.mubr.f32.gmra.mxu0 %v2498
    %v2500 = vpop.f32.mrf.mxu0
    %v2501 = vadd.f32 %v2251, %v2500
    %v2502 = vpop.f32.mrf.mxu0
    %v2503 = vadd.f32 %v2253, %v2502
    %2504 = vmatprep.mubr.f32.mxu0 0.0
    %v2505 = vand.u32 %v1642, 4294901760
    %v2506 = vsub.f32 %v1642, %v2505
    %2507 = vmatmul.mubr.f32.gmra.mxu0 %v2506
    %v2508 = vpop.f32.mrf.mxu0
    %v2509 = vadd.f32 %v2258, %v2508
    %v2510 = vpop.f32.mrf.mxu0
    %v2511 = vadd.f32 %v2260, %v2510
    %2512 = vmatprep.mubr.f32.mxu0 0.0
    %v2513 = vand.u32 %v1643, 4294901760
    %v2514 = vsub.f32 %v1643, %v2513
    %2515 = vmatmul.mubr.f32.gmra.mxu0 %v2514
    %v2516 = vpop.f32.mrf.mxu0
    %v2517 = vadd.f32 %v2265, %v2516
    %v2518 = vpop.f32.mrf.mxu0
    %v2519 = vadd.f32 %v2267, %v2518
    %2520 = vmatprep.mubr.f32.mxu0 0.0
    %v2521 = vand.u32 %v1644, 4294901760
    %v2522 = vsub.f32 %v1644, %v2521
    %2523 = vmatmul.mubr.f32.gmra.mxu0 %v2522
    %v2524 = vpop.f32.mrf.mxu0
    %v2525 = vadd.f32 %v2272, %v2524
    %v2526 = vpop.f32.mrf.mxu0
    %v2527 = vadd.f32 %v2274, %v2526
    %2528 = vmatprep.mubr.f32.mxu0 0.0
    %v2529 = vand.u32 %v1645, 4294901760
    %v2530 = vsub.f32 %v1645, %v2529
    %2531 = vmatmul.mubr.f32.gmra.mxu0 %v2530
    %v2532 = vpop.f32.mrf.mxu0
    %v2533 = vadd.f32 %v2279, %v2532
    %v2534 = vpop.f32.mrf.mxu0
    %v2535 = vadd.f32 %v2281, %v2534
    %2536 = vmatprep.mubr.f32.mxu0 0.0
    %v2537 = vand.u32 %v1646, 4294901760
    %v2538 = vsub.f32 %v1646, %v2537
    %2539 = vmatmul.mubr.f32.gmra.mxu0 %v2538
    %v2540 = vpop.f32.mrf.mxu0
    %v2541 = vadd.f32 %v2286, %v2540
    %v2542 = vpop.f32.mrf.mxu0
    %v2543 = vadd.f32 %v2288, %v2542
    %2544 = vmatprep.mubr.f32.mxu0 0.0
    %v2545 = vand.u32 %v1647, 4294901760
    %v2546 = vsub.f32 %v1647, %v2545
    %2547 = vmatmul.mubr.f32.gmra.mxu0 %v2546
    %v2548 = vpop.f32.mrf.mxu0
    %v2549 = vadd.f32 %v2293, %v2548
    %v2550 = vpop.f32.mrf.mxu0
    %v2551 = vadd.f32 %v2295, %v2550
    %2552 = vmatprep.mubr.f32.mxu0 0.0
    %v2553 = vand.u32 %v1648, 4294901760
    %v2554 = vsub.f32 %v1648, %v2553
    %2555 = vmatmul.mubr.f32.gmra.mxu0 %v2554
    %v2556 = vpop.f32.mrf.mxu0
    %v2557 = vadd.f32 %v2300, %v2556
    %v2558 = vpop.f32.mrf.mxu0
    %v2559 = vadd.f32 %v2302, %v2558
    %2560 = vdwg.mxu0
    %v2561 = vand.u32 %v1680, 4294901760
    %2562 = vmatprep.subr.mxu0 %v2561
    %v2563 = vand.u32 %v1679, 4294901760
    %2564 = vmatpush1.msra.mxu0 %v2563
    %v2565 = vand.u32 %v1678, 4294901760
    %2566 = vmatprep.subr.mxu0 %v2565
    %v2567 = vand.u32 %v1677, 4294901760
    %2568 = vmatpush1.msra.mxu0 %v2567
    %v2569 = vand.u32 %v1676, 4294901760
    %2570 = vmatprep.subr.mxu0 %v2569
    %v2571 = vand.u32 %v1675, 4294901760
    %2572 = vmatpush1.msra.mxu0 %v2571
    %v2573 = vand.u32 %v1674, 4294901760
    %2574 = vmatprep.subr.mxu0 %v2573
    %v2575 = vand.u32 %v1673, 4294901760
    %2576 = vmatpush1.msra.mxu0 %v2575
    %v2577 = vand.u32 %v1672, 4294901760
    %2578 = vmatprep.subr.mxu0 %v2577
    %v2579 = vand.u32 %v1671, 4294901760
    %2580 = vmatpush1.msra.mxu0 %v2579
    %v2581 = vand.u32 %v1670, 4294901760
    %2582 = vmatprep.subr.mxu0 %v2581
    %v2583 = vand.u32 %v1669, 4294901760
    %2584 = vmatpush1.msra.mxu0 %v2583
    %v2585 = vand.u32 %v1668, 4294901760
    %2586 = vmatprep.subr.mxu0 %v2585
    %v2587 = vand.u32 %v1667, 4294901760
    %2588 = vmatpush1.msra.mxu0 %v2587
    %v2589 = vand.u32 %v1666, 4294901760
    %2590 = vmatprep.subr.mxu0 %v2589
    %v2591 = vand.u32 %v1665, 4294901760
    %2592 = vmatpush1.msra.mxu0 %v2591
    %v2593 = vand.u32 %v1664, 4294901760
    %2594 = vmatprep.subr.mxu0 %v2593
    %v2595 = vand.u32 %v1663, 4294901760
    %2596 = vmatpush1.msra.mxu0 %v2595
    %v2597 = vand.u32 %v1662, 4294901760
    %2598 = vmatprep.subr.mxu0 %v2597
    %v2599 = vand.u32 %v1661, 4294901760
    %2600 = vmatpush1.msra.mxu0 %v2599
    %v2601 = vand.u32 %v1660, 4294901760
    %2602 = vmatprep.subr.mxu0 %v2601
    %v2603 = vand.u32 %v1659, 4294901760
    %2604 = vmatpush1.msra.mxu0 %v2603
    %v2605 = vand.u32 %v1658, 4294901760
    %2606 = vmatprep.subr.mxu0 %v2605
    %v2607 = vand.u32 %v1657, 4294901760
    %2608 = vmatpush1.msra.mxu0 %v2607
    %v2609 = vand.u32 %v1656, 4294901760
    %2610 = vmatprep.subr.mxu0 %v2609
    %v2611 = vand.u32 %v1655, 4294901760
    %2612 = vmatpush1.msra.mxu0 %v2611
    %v2613 = vand.u32 %v1654, 4294901760
    %2614 = vmatprep.subr.mxu0 %v2613
    %v2615 = vand.u32 %v1653, 4294901760
    %2616 = vmatpush1.msra.mxu0 %v2615
    %v2617 = vand.u32 %v1652, 4294901760
    %2618 = vmatprep.subr.mxu0 %v2617
    %v2619 = vand.u32 %v1651, 4294901760
    %2620 = vmatpush1.msra.mxu0 %v2619
    %v2621 = vand.u32 %v1650, 4294901760
    %2622 = vmatprep.subr.mxu0 %v2621
    %v2623 = vand.u32 %v1649, 4294901760
    %2624 = vmatpush1.msra.mxu0 %v2623
    %2625 = vmatprep.subr.mxu0 0.0
    %2626 = vmatpush2.msra.mxu0 0.0
    %2627 = vmatprep.subr.mxu0 0.0
    %2628 = vmatpush2.msra.mxu0 0.0
    %2629 = vmatprep.subr.mxu0 0.0
    %2630 = vmatpush2.msra.mxu0 0.0
    %2631 = vmatprep.subr.mxu0 0.0
    %2632 = vmatpush2.msra.mxu0 0.0
    %2633 = vmatprep.subr.mxu0 0.0
    %2634 = vmatpush2.msra.mxu0 0.0
    %2635 = vmatprep.subr.mxu0 0.0
    %2636 = vmatpush2.msra.mxu0 0.0
    %2637 = vmatprep.subr.mxu0 0.0
    %2638 = vmatpush2.msra.mxu0 0.0
    %2639 = vmatprep.subr.mxu0 0.0
    %2640 = vmatpush2.msra.mxu0 0.0
    %2641 = vmatprep.subr.mxu0 0.0
    %2642 = vmatpush2.msra.mxu0 0.0
    %2643 = vmatprep.subr.mxu0 0.0
    %2644 = vmatpush2.msra.mxu0 0.0
    %2645 = vmatprep.subr.mxu0 0.0
    %2646 = vmatpush2.msra.mxu0 0.0
    %2647 = vmatprep.subr.mxu0 0.0
    %2648 = vmatpush2.msra.mxu0 0.0
    %2649 = vmatprep.subr.mxu0 0.0
    %2650 = vmatpush2.msra.mxu0 0.0
    %2651 = vmatprep.subr.mxu0 0.0
    %2652 = vmatpush2.msra.mxu0 0.0
    %2653 = vmatprep.subr.mxu0 0.0
    %2654 = vmatpush2.msra.mxu0 0.0
    %2655 = vmatprep.subr.mxu0 0.0
    %2656 = vmatpush2.msra.mxu0 0.0
    %2657 = vmatprep.mubr.f32.mxu0 0.0
    %v2658 = vand.u32 %v1633, 4294901760
    %v2659 = vsub.f32 %v1633, %v2658
    %v2660 = vand.u32 %v2659, 4294901760
    %2661 = vmatmul.mubr.f32.gmra.mxu0 %v2660
    %v2662 = vpop.f32.mrf.mxu0
    %v2663 = vadd.f32 %v2437, %v2662
    %v2664 = vpop.f32.mrf.mxu0
    %v2665 = vadd.f32 %v2439, %v2664
    %2666 = vmatprep.mubr.f32.mxu0 0.0
    %v2667 = vand.u32 %v1634, 4294901760
    %v2668 = vsub.f32 %v1634, %v2667
    %v2669 = vand.u32 %v2668, 4294901760
    %2670 = vmatmul.mubr.f32.gmra.mxu0 %v2669
    %v2671 = vpop.f32.mrf.mxu0
    %v2672 = vadd.f32 %v2445, %v2671
    %v2673 = vpop.f32.mrf.mxu0
    %v2674 = vadd.f32 %v2447, %v2673
    %2675 = vmatprep.mubr.f32.mxu0 0.0
    %v2676 = vand.u32 %v1635, 4294901760
    %v2677 = vsub.f32 %v1635, %v2676
    %v2678 = vand.u32 %v2677, 4294901760
    %2679 = vmatmul.mubr.f32.gmra.mxu0 %v2678
    %v2680 = vpop.f32.mrf.mxu0
    %v2681 = vadd.f32 %v2453, %v2680
    %v2682 = vpop.f32.mrf.mxu0
    %v2683 = vadd.f32 %v2455, %v2682
    %2684 = vmatprep.mubr.f32.mxu0 0.0
    %v2685 = vand.u32 %v1636, 4294901760
    %v2686 = vsub.f32 %v1636, %v2685
    %v2687 = vand.u32 %v2686, 4294901760
    %2688 = vmatmul.mubr.f32.gmra.mxu0 %v2687
    %v2689 = vpop.f32.mrf.mxu0
    %v2690 = vadd.f32 %v2461, %v2689
    %v2691 = vpop.f32.mrf.mxu0
    %v2692 = vadd.f32 %v2463, %v2691
    %2693 = vmatprep.mubr.f32.mxu0 0.0
    %v2694 = vand.u32 %v1637, 4294901760
    %v2695 = vsub.f32 %v1637, %v2694
    %v2696 = vand.u32 %v2695, 4294901760
    %2697 = vmatmul.mubr.f32.gmra.mxu0 %v2696
    %v2698 = vpop.f32.mrf.mxu0
    %v2699 = vadd.f32 %v2469, %v2698
    %v2700 = vpop.f32.mrf.mxu0
    %v2701 = vadd.f32 %v2471, %v2700
    %2702 = vmatprep.mubr.f32.mxu0 0.0
    %v2703 = vand.u32 %v1638, 4294901760
    %v2704 = vsub.f32 %v1638, %v2703
    %v2705 = vand.u32 %v2704, 4294901760
    %2706 = vmatmul.mubr.f32.gmra.mxu0 %v2705
    %v2707 = vpop.f32.mrf.mxu0
    %v2708 = vadd.f32 %v2477, %v2707
    %v2709 = vpop.f32.mrf.mxu0
    %v2710 = vadd.f32 %v2479, %v2709
    %2711 = vmatprep.mubr.f32.mxu0 0.0
    %v2712 = vand.u32 %v1639, 4294901760
    %v2713 = vsub.f32 %v1639, %v2712
    %v2714 = vand.u32 %v2713, 4294901760
    %2715 = vmatmul.mubr.f32.gmra.mxu0 %v2714
    %v2716 = vpop.f32.mrf.mxu0
    %v2717 = vadd.f32 %v2485, %v2716
    %v2718 = vpop.f32.mrf.mxu0
    %v2719 = vadd.f32 %v2487, %v2718
    %2720 = vmatprep.mubr.f32.mxu0 0.0
    %v2721 = vand.u32 %v1640, 4294901760
    %v2722 = vsub.f32 %v1640, %v2721
    %v2723 = vand.u32 %v2722, 4294901760
    %2724 = vmatmul.mubr.f32.gmra.mxu0 %v2723
    %v2725 = vpop.f32.mrf.mxu0
    %v2726 = vadd.f32 %v2493, %v2725
    %v2727 = vpop.f32.mrf.mxu0
    %v2728 = vadd.f32 %v2495, %v2727
    %2729 = vmatprep.mubr.f32.mxu0 0.0
    %v2730 = vand.u32 %v1641, 4294901760
    %v2731 = vsub.f32 %v1641, %v2730
    %v2732 = vand.u32 %v2731, 4294901760
    %2733 = vmatmul.mubr.f32.gmra.mxu0 %v2732
    %v2734 = vpop.f32.mrf.mxu0
    %v2735 = vadd.f32 %v2501, %v2734
    %v2736 = vpop.f32.mrf.mxu0
    %v2737 = vadd.f32 %v2503, %v2736
    %2738 = vmatprep.mubr.f32.mxu0 0.0
    %v2739 = vand.u32 %v1642, 4294901760
    %v2740 = vsub.f32 %v1642, %v2739
    %v2741 = vand.u32 %v2740, 4294901760
    %2742 = vmatmul.mubr.f32.gmra.mxu0 %v2741
    %v2743 = vpop.f32.mrf.mxu0
    %v2744 = vadd.f32 %v2509, %v2743
    %v2745 = vpop.f32.mrf.mxu0
    %v2746 = vadd.f32 %v2511, %v2745
    %2747 = vmatprep.mubr.f32.mxu0 0.0
    %v2748 = vand.u32 %v1643, 4294901760
    %v2749 = vsub.f32 %v1643, %v2748
    %v2750 = vand.u32 %v2749, 4294901760
    %2751 = vmatmul.mubr.f32.gmra.mxu0 %v2750
    %v2752 = vpop.f32.mrf.mxu0
    %v2753 = vadd.f32 %v2517, %v2752
    %v2754 = vpop.f32.mrf.mxu0
    %v2755 = vadd.f32 %v2519, %v2754
    %2756 = vmatprep.mubr.f32.mxu0 0.0
    %v2757 = vand.u32 %v1644, 4294901760
    %v2758 = vsub.f32 %v1644, %v2757
    %v2759 = vand.u32 %v2758, 4294901760
    %2760 = vmatmul.mubr.f32.gmra.mxu0 %v2759
    %v2761 = vpop.f32.mrf.mxu0
    %v2762 = vadd.f32 %v2525, %v2761
    %v2763 = vpop.f32.mrf.mxu0
    %v2764 = vadd.f32 %v2527, %v2763
    %2765 = vmatprep.mubr.f32.mxu0 0.0
    %v2766 = vand.u32 %v1645, 4294901760
    %v2767 = vsub.f32 %v1645, %v2766
    %v2768 = vand.u32 %v2767, 4294901760
    %2769 = vmatmul.mubr.f32.gmra.mxu0 %v2768
    %v2770 = vpop.f32.mrf.mxu0
    %v2771 = vadd.f32 %v2533, %v2770
    %v2772 = vpop.f32.mrf.mxu0
    %v2773 = vadd.f32 %v2535, %v2772
    %2774 = vmatprep.mubr.f32.mxu0 0.0
    %v2775 = vand.u32 %v1646, 4294901760
    %v2776 = vsub.f32 %v1646, %v2775
    %v2777 = vand.u32 %v2776, 4294901760
    %2778 = vmatmul.mubr.f32.gmra.mxu0 %v2777
    %v2779 = vpop.f32.mrf.mxu0
    %v2780 = vadd.f32 %v2541, %v2779
    %v2781 = vpop.f32.mrf.mxu0
    %v2782 = vadd.f32 %v2543, %v2781
    %2783 = vmatprep.mubr.f32.mxu0 0.0
    %v2784 = vand.u32 %v1647, 4294901760
    %v2785 = vsub.f32 %v1647, %v2784
    %v2786 = vand.u32 %v2785, 4294901760
    %2787 = vmatmul.mubr.f32.gmra.mxu0 %v2786
    %v2788 = vpop.f32.mrf.mxu0
    %v2789 = vadd.f32 %v2549, %v2788
    %v2790 = vpop.f32.mrf.mxu0
    %v2791 = vadd.f32 %v2551, %v2790
    %2792 = vmatprep.mubr.f32.mxu0 0.0
    %v2793 = vand.u32 %v1648, 4294901760
    %v2794 = vsub.f32 %v1648, %v2793
    %v2795 = vand.u32 %v2794, 4294901760
    %2796 = vmatmul.mubr.f32.gmra.mxu0 %v2795
    %v2797 = vpop.f32.mrf.mxu0
    %v2798 = vadd.f32 %v2557, %v2797
    %v2799 = vpop.f32.mrf.mxu0
    %v2800 = vadd.f32 %v2559, %v2799
    %2801 = vdwg.mxu0
    %v2802 = vand.u32 %v1680, 4294901760
    %v2803 = vsub.f32 %v1680, %v2802
    %v2804 = vand.u32 %v2803, 4294901760
    %2805 = vmatprep.subr.mxu0 %v2804
    %v2806 = vand.u32 %v1679, 4294901760
    %v2807 = vsub.f32 %v1679, %v2806
    %v2808 = vand.u32 %v2807, 4294901760
    %2809 = vmatpush1.msra.mxu0 %v2808
    %v2810 = vand.u32 %v1678, 4294901760
    %v2811 = vsub.f32 %v1678, %v2810
    %v2812 = vand.u32 %v2811, 4294901760
    %2813 = vmatprep.subr.mxu0 %v2812
    %v2814 = vand.u32 %v1677, 4294901760
    %v2815 = vsub.f32 %v1677, %v2814
    %v2816 = vand.u32 %v2815, 4294901760
    %2817 = vmatpush1.msra.mxu0 %v2816
    %v2818 = vand.u32 %v1676, 4294901760
    %v2819 = vsub.f32 %v1676, %v2818
    %v2820 = vand.u32 %v2819, 4294901760
    %2821 = vmatprep.subr.mxu0 %v2820
    %v2822 = vand.u32 %v1675, 4294901760
    %v2823 = vsub.f32 %v1675, %v2822
    %v2824 = vand.u32 %v2823, 4294901760
    %2825 = vmatpush1.msra.mxu0 %v2824
    %v2826 = vand.u32 %v1674, 4294901760
    %v2827 = vsub.f32 %v1674, %v2826
    %v2828 = vand.u32 %v2827, 4294901760
    %2829 = vmatprep.subr.mxu0 %v2828
    %v2830 = vand.u32 %v1673, 4294901760
    %v2831 = vsub.f32 %v1673, %v2830
    %v2832 = vand.u32 %v2831, 4294901760
    %2833 = vmatpush1.msra.mxu0 %v2832
    %v2834 = vand.u32 %v1672, 4294901760
    %v2835 = vsub.f32 %v1672, %v2834
    %v2836 = vand.u32 %v2835, 4294901760
    %2837 = vmatprep.subr.mxu0 %v2836
    %v2838 = vand.u32 %v1671, 4294901760
    %v2839 = vsub.f32 %v1671, %v2838
    %v2840 = vand.u32 %v2839, 4294901760
    %2841 = vmatpush1.msra.mxu0 %v2840
    %v2842 = vand.u32 %v1670, 4294901760
    %v2843 = vsub.f32 %v1670, %v2842
    %v2844 = vand.u32 %v2843, 4294901760
    %2845 = vmatprep.subr.mxu0 %v2844
    %v2846 = vand.u32 %v1669, 4294901760
    %v2847 = vsub.f32 %v1669, %v2846
    %v2848 = vand.u32 %v2847, 4294901760
    %2849 = vmatpush1.msra.mxu0 %v2848
    %v2850 = vand.u32 %v1668, 4294901760
    %v2851 = vsub.f32 %v1668, %v2850
    %v2852 = vand.u32 %v2851, 4294901760
    %2853 = vmatprep.subr.mxu0 %v2852
    %v2854 = vand.u32 %v1667, 4294901760
    %v2855 = vsub.f32 %v1667, %v2854
    %v2856 = vand.u32 %v2855, 4294901760
    %2857 = vmatpush1.msra.mxu0 %v2856
    %v2858 = vand.u32 %v1666, 4294901760
    %v2859 = vsub.f32 %v1666, %v2858
    %v2860 = vand.u32 %v2859, 4294901760
    %2861 = vmatprep.subr.mxu0 %v2860
    %v2862 = vand.u32 %v1665, 4294901760
    %v2863 = vsub.f32 %v1665, %v2862
    %v2864 = vand.u32 %v2863, 4294901760
    %2865 = vmatpush1.msra.mxu0 %v2864
    %v2866 = vand.u32 %v1664, 4294901760
    %v2867 = vsub.f32 %v1664, %v2866
    %v2868 = vand.u32 %v2867, 4294901760
    %2869 = vmatprep.subr.mxu0 %v2868
    %v2870 = vand.u32 %v1663, 4294901760
    %v2871 = vsub.f32 %v1663, %v2870
    %v2872 = vand.u32 %v2871, 4294901760
    %2873 = vmatpush1.msra.mxu0 %v2872
    %v2874 = vand.u32 %v1662, 4294901760
    %v2875 = vsub.f32 %v1662, %v2874
    %v2876 = vand.u32 %v2875, 4294901760
    %2877 = vmatprep.subr.mxu0 %v2876
    %v2878 = vand.u32 %v1661, 4294901760
    %v2879 = vsub.f32 %v1661, %v2878
    %v2880 = vand.u32 %v2879, 4294901760
    %2881 = vmatpush1.msra.mxu0 %v2880
    %v2882 = vand.u32 %v1660, 4294901760
    %v2883 = vsub.f32 %v1660, %v2882
    %v2884 = vand.u32 %v2883, 4294901760
    %2885 = vmatprep.subr.mxu0 %v2884
    %v2886 = vand.u32 %v1659, 4294901760
    %v2887 = vsub.f32 %v1659, %v2886
    %v2888 = vand.u32 %v2887, 4294901760
    %2889 = vmatpush1.msra.mxu0 %v2888
    %v2890 = vand.u32 %v1658, 4294901760
    %v2891 = vsub.f32 %v1658, %v2890
    %v2892 = vand.u32 %v2891, 4294901760
    %2893 = vmatprep.subr.mxu0 %v2892
    %v2894 = vand.u32 %v1657, 4294901760
    %v2895 = vsub.f32 %v1657, %v2894
    %v2896 = vand.u32 %v2895, 4294901760
    %2897 = vmatpush1.msra.mxu0 %v2896
    %v2898 = vand.u32 %v1656, 4294901760
    %v2899 = vsub.f32 %v1656, %v2898
    %v2900 = vand.u32 %v2899, 4294901760
    %2901 = vmatprep.subr.mxu0 %v2900
    %v2902 = vand.u32 %v1655, 4294901760
    %v2903 = vsub.f32 %v1655, %v2902
    %v2904 = vand.u32 %v2903, 4294901760
    %2905 = vmatpush1.msra.mxu0 %v2904
    %v2906 = vand.u32 %v1654, 4294901760
    %v2907 = vsub.f32 %v1654, %v2906
    %v2908 = vand.u32 %v2907, 4294901760
    %2909 = vmatprep.subr.mxu0 %v2908
    %v2910 = vand.u32 %v1653, 4294901760
    %v2911 = vsub.f32 %v1653, %v2910
    %v2912 = vand.u32 %v2911, 4294901760
    %2913 = vmatpush1.msra.mxu0 %v2912
    %v2914 = vand.u32 %v1652, 4294901760
    %v2915 = vsub.f32 %v1652, %v2914
    %v2916 = vand.u32 %v2915, 4294901760
    %2917 = vmatprep.subr.mxu0 %v2916
    %v2918 = vand.u32 %v1651, 4294901760
    %v2919 = vsub.f32 %v1651, %v2918
    %v2920 = vand.u32 %v2919, 4294901760
    %2921 = vmatpush1.msra.mxu0 %v2920
    %v2922 = vand.u32 %v1650, 4294901760
    %v2923 = vsub.f32 %v1650, %v2922
    %v2924 = vand.u32 %v2923, 4294901760
    %2925 = vmatprep.subr.mxu0 %v2924
    %v2926 = vand.u32 %v1649, 4294901760
    %v2927 = vsub.f32 %v1649, %v2926
    %v2928 = vand.u32 %v2927, 4294901760
    %2929 = vmatpush1.msra.mxu0 %v2928
    %2930 = vmatprep.subr.mxu0 0.0
    %2931 = vmatpush2.msra.mxu0 0.0
    %2932 = vmatprep.subr.mxu0 0.0
    %2933 = vmatpush2.msra.mxu0 0.0
    %2934 = vmatprep.subr.mxu0 0.0
    %2935 = vmatpush2.msra.mxu0 0.0
    %2936 = vmatprep.subr.mxu0 0.0
    %2937 = vmatpush2.msra.mxu0 0.0
    %2938 = vmatprep.subr.mxu0 0.0
    %2939 = vmatpush2.msra.mxu0 0.0
    %2940 = vmatprep.subr.mxu0 0.0
    %2941 = vmatpush2.msra.mxu0 0.0
    %2942 = vmatprep.subr.mxu0 0.0
    %2943 = vmatpush2.msra.mxu0 0.0
    %2944 = vmatprep.subr.mxu0 0.0
    %2945 = vmatpush2.msra.mxu0 0.0
    %2946 = vmatprep.subr.mxu0 0.0
    %2947 = vmatpush2.msra.mxu0 0.0
    %2948 = vmatprep.subr.mxu0 0.0
    %2949 = vmatpush2.msra.mxu0 0.0
    %2950 = vmatprep.subr.mxu0 0.0
    %2951 = vmatpush2.msra.mxu0 0.0
    %2952 = vmatprep.subr.mxu0 0.0
    %2953 = vmatpush2.msra.mxu0 0.0
    %2954 = vmatprep.subr.mxu0 0.0
    %2955 = vmatpush2.msra.mxu0 0.0
    %2956 = vmatprep.subr.mxu0 0.0
    %2957 = vmatpush2.msra.mxu0 0.0
    %2958 = vmatprep.subr.mxu0 0.0
    %2959 = vmatpush2.msra.mxu0 0.0
    %2960 = vmatprep.subr.mxu0 0.0
    %2961 = vmatpush2.msra.mxu0 0.0
    %2962 = vmatprep.mubr.f32.mxu0 0.0
    %v2963 = vand.u32 %v1633, 4294901760
    %2964 = vmatmul.mubr.f32.gmra.mxu0 %v2963
    %v2965 = vpop.f32.mrf.mxu0
    %v2966 = vadd.f32 %v2663, %v2965
    %v2967 = vpop.f32.mrf.mxu0
    %v2968 = vadd.f32 %v2665, %v2967
    %2969 = vmatprep.mubr.f32.mxu0 0.0
    %v2970 = vand.u32 %v1634, 4294901760
    %2971 = vmatmul.mubr.f32.gmra.mxu0 %v2970
    %v2972 = vpop.f32.mrf.mxu0
    %v2973 = vadd.f32 %v2672, %v2972
    %v2974 = vpop.f32.mrf.mxu0
    %v2975 = vadd.f32 %v2674, %v2974
    %2976 = vmatprep.mubr.f32.mxu0 0.0
    %v2977 = vand.u32 %v1635, 4294901760
    %2978 = vmatmul.mubr.f32.gmra.mxu0 %v2977
    %v2979 = vpop.f32.mrf.mxu0
    %v2980 = vadd.f32 %v2681, %v2979
    %v2981 = vpop.f32.mrf.mxu0
    %v2982 = vadd.f32 %v2683, %v2981
    %2983 = vmatprep.mubr.f32.mxu0 0.0
    %v2984 = vand.u32 %v1636, 4294901760
    %2985 = vmatmul.mubr.f32.gmra.mxu0 %v2984
    %v2986 = vpop.f32.mrf.mxu0
    %v2987 = vadd.f32 %v2690, %v2986
    %v2988 = vpop.f32.mrf.mxu0
    %v2989 = vadd.f32 %v2692, %v2988
    %2990 = vmatprep.mubr.f32.mxu0 0.0
    %v2991 = vand.u32 %v1637, 4294901760
    %2992 = vmatmul.mubr.f32.gmra.mxu0 %v2991
    %v2993 = vpop.f32.mrf.mxu0
    %v2994 = vadd.f32 %v2699, %v2993
    %v2995 = vpop.f32.mrf.mxu0
    %v2996 = vadd.f32 %v2701, %v2995
    %2997 = vmatprep.mubr.f32.mxu0 0.0
    %v2998 = vand.u32 %v1638, 4294901760
    %2999 = vmatmul.mubr.f32.gmra.mxu0 %v2998
    %v3000 = vpop.f32.mrf.mxu0
    %v3001 = vadd.f32 %v2708, %v3000
    %v3002 = vpop.f32.mrf.mxu0
    %v3003 = vadd.f32 %v2710, %v3002
    %3004 = vmatprep.mubr.f32.mxu0 0.0
    %v3005 = vand.u32 %v1639, 4294901760
    %3006 = vmatmul.mubr.f32.gmra.mxu0 %v3005
    %v3007 = vpop.f32.mrf.mxu0
    %v3008 = vadd.f32 %v2717, %v3007
    %v3009 = vpop.f32.mrf.mxu0
    %v3010 = vadd.f32 %v2719, %v3009
    %3011 = vmatprep.mubr.f32.mxu0 0.0
    %v3012 = vand.u32 %v1640, 4294901760
    %3013 = vmatmul.mubr.f32.gmra.mxu0 %v3012
    %v3014 = vpop.f32.mrf.mxu0
    %v3015 = vadd.f32 %v2726, %v3014
    %v3016 = vpop.f32.mrf.mxu0
    %v3017 = vadd.f32 %v2728, %v3016
    %3018 = vmatprep.mubr.f32.mxu0 0.0
    %v3019 = vand.u32 %v1641, 4294901760
    %3020 = vmatmul.mubr.f32.gmra.mxu0 %v3019
    %v3021 = vpop.f32.mrf.mxu0
    %v3022 = vadd.f32 %v2735, %v3021
    %v3023 = vpop.f32.mrf.mxu0
    %v3024 = vadd.f32 %v2737, %v3023
    %3025 = vmatprep.mubr.f32.mxu0 0.0
    %v3026 = vand.u32 %v1642, 4294901760
    %3027 = vmatmul.mubr.f32.gmra.mxu0 %v3026
    %v3028 = vpop.f32.mrf.mxu0
    %v3029 = vadd.f32 %v2744, %v3028
    %v3030 = vpop.f32.mrf.mxu0
    %v3031 = vadd.f32 %v2746, %v3030
    %3032 = vmatprep.mubr.f32.mxu0 0.0
    %v3033 = vand.u32 %v1643, 4294901760
    %3034 = vmatmul.mubr.f32.gmra.mxu0 %v3033
    %v3035 = vpop.f32.mrf.mxu0
    %v3036 = vadd.f32 %v2753, %v3035
    %v3037 = vpop.f32.mrf.mxu0
    %v3038 = vadd.f32 %v2755, %v3037
    %3039 = vmatprep.mubr.f32.mxu0 0.0
    %v3040 = vand.u32 %v1644, 4294901760
    %3041 = vmatmul.mubr.f32.gmra.mxu0 %v3040
    %v3042 = vpop.f32.mrf.mxu0
    %v3043 = vadd.f32 %v2762, %v3042
    %v3044 = vpop.f32.mrf.mxu0
    %v3045 = vadd.f32 %v2764, %v3044
    %3046 = vmatprep.mubr.f32.mxu0 0.0
    %v3047 = vand.u32 %v1645, 4294901760
    %3048 = vmatmul.mubr.f32.gmra.mxu0 %v3047
    %v3049 = vpop.f32.mrf.mxu0
    %v3050 = vadd.f32 %v2771, %v3049
    %v3051 = vpop.f32.mrf.mxu0
    %v3052 = vadd.f32 %v2773, %v3051
    %3053 = vmatprep.mubr.f32.mxu0 0.0
    %v3054 = vand.u32 %v1646, 4294901760
    %3055 = vmatmul.mubr.f32.gmra.mxu0 %v3054
    %v3056 = vpop.f32.mrf.mxu0
    %v3057 = vadd.f32 %v2780, %v3056
    %v3058 = vpop.f32.mrf.mxu0
    %v3059 = vadd.f32 %v2782, %v3058
    %3060 = vmatprep.mubr.f32.mxu0 0.0
    %v3061 = vand.u32 %v1647, 4294901760
    %3062 = vmatmul.mubr.f32.gmra.mxu0 %v3061
    %v3063 = vpop.f32.mrf.mxu0
    %v3064 = vadd.f32 %v2789, %v3063
    %v3065 = vpop.f32.mrf.mxu0
    %v3066 = vadd.f32 %v2791, %v3065
    %3067 = vmatprep.mubr.f32.mxu0 0.0
    %v3068 = vand.u32 %v1648, 4294901760
    %3069 = vmatmul.mubr.f32.gmra.mxu0 %v3068
    %v3070 = vpop.f32.mrf.mxu0
    %v3071 = vadd.f32 %v2798, %v3070
    %v3072 = vpop.f32.mrf.mxu0
    %v3073 = vadd.f32 %v2800, %v3072
    %3074 = vdwg.mxu0
    %v3075 = vand.u32 %v1680, 4294901760
    %3076 = vmatprep.subr.mxu0 %v3075
    %v3077 = vand.u32 %v1679, 4294901760
    %3078 = vmatpush1.msra.mxu0 %v3077
    %v3079 = vand.u32 %v1678, 4294901760
    %3080 = vmatprep.subr.mxu0 %v3079
    %v3081 = vand.u32 %v1677, 4294901760
    %3082 = vmatpush1.msra.mxu0 %v3081
    %v3083 = vand.u32 %v1676, 4294901760
    %3084 = vmatprep.subr.mxu0 %v3083
    %v3085 = vand.u32 %v1675, 4294901760
    %3086 = vmatpush1.msra.mxu0 %v3085
    %v3087 = vand.u32 %v1674, 4294901760
    %3088 = vmatprep.subr.mxu0 %v3087
    %v3089 = vand.u32 %v1673, 4294901760
    %3090 = vmatpush1.msra.mxu0 %v3089
    %v3091 = vand.u32 %v1672, 4294901760
    %3092 = vmatprep.subr.mxu0 %v3091
    %v3093 = vand.u32 %v1671, 4294901760
    %3094 = vmatpush1.msra.mxu0 %v3093
    %v3095 = vand.u32 %v1670, 4294901760
    %3096 = vmatprep.subr.mxu0 %v3095
    %v3097 = vand.u32 %v1669, 4294901760
    %3098 = vmatpush1.msra.mxu0 %v3097
    %v3099 = vand.u32 %v1668, 4294901760
    %3100 = vmatprep.subr.mxu0 %v3099
    %v3101 = vand.u32 %v1667, 4294901760
    %3102 = vmatpush1.msra.mxu0 %v3101
    %v3103 = vand.u32 %v1666, 4294901760
    %3104 = vmatprep.subr.mxu0 %v3103
    %v3105 = vand.u32 %v1665, 4294901760
    %3106 = vmatpush1.msra.mxu0 %v3105
    %v3107 = vand.u32 %v1664, 4294901760
    %3108 = vmatprep.subr.mxu0 %v3107
    %v3109 = vand.u32 %v1663, 4294901760
    %3110 = vmatpush1.msra.mxu0 %v3109
    %v3111 = vand.u32 %v1662, 4294901760
    %3112 = vmatprep.subr.mxu0 %v3111
    %v3113 = vand.u32 %v1661, 4294901760
    %3114 = vmatpush1.msra.mxu0 %v3113
    %v3115 = vand.u32 %v1660, 4294901760
    %3116 = vmatprep.subr.mxu0 %v3115
    %v3117 = vand.u32 %v1659, 4294901760
    %3118 = vmatpush1.msra.mxu0 %v3117
    %v3119 = vand.u32 %v1658, 4294901760
    %3120 = vmatprep.subr.mxu0 %v3119
    %v3121 = vand.u32 %v1657, 4294901760
    %3122 = vmatpush1.msra.mxu0 %v3121
    %v3123 = vand.u32 %v1656, 4294901760
    %3124 = vmatprep.subr.mxu0 %v3123
    %v3125 = vand.u32 %v1655, 4294901760
    %3126 = vmatpush1.msra.mxu0 %v3125
    %v3127 = vand.u32 %v1654, 4294901760
    %3128 = vmatprep.subr.mxu0 %v3127
    %v3129 = vand.u32 %v1653, 4294901760
    %3130 = vmatpush1.msra.mxu0 %v3129
    %v3131 = vand.u32 %v1652, 4294901760
    %3132 = vmatprep.subr.mxu0 %v3131
    %v3133 = vand.u32 %v1651, 4294901760
    %3134 = vmatpush1.msra.mxu0 %v3133
    %v3135 = vand.u32 %v1650, 4294901760
    %3136 = vmatprep.subr.mxu0 %v3135
    %v3137 = vand.u32 %v1649, 4294901760
    %3138 = vmatpush1.msra.mxu0 %v3137
    %3139 = vmatprep.subr.mxu0 0.0
    %3140 = vmatpush2.msra.mxu0 0.0
    %3141 = vmatprep.subr.mxu0 0.0
    %3142 = vmatpush2.msra.mxu0 0.0
    %3143 = vmatprep.subr.mxu0 0.0
    %3144 = vmatpush2.msra.mxu0 0.0
    %3145 = vmatprep.subr.mxu0 0.0
    %3146 = vmatpush2.msra.mxu0 0.0
    %3147 = vmatprep.subr.mxu0 0.0
    %3148 = vmatpush2.msra.mxu0 0.0
    %3149 = vmatprep.subr.mxu0 0.0
    %3150 = vmatpush2.msra.mxu0 0.0
    %3151 = vmatprep.subr.mxu0 0.0
    %3152 = vmatpush2.msra.mxu0 0.0
    %3153 = vmatprep.subr.mxu0 0.0
    %3154 = vmatpush2.msra.mxu0 0.0
    %3155 = vmatprep.subr.mxu0 0.0
    %3156 = vmatpush2.msra.mxu0 0.0
    %3157 = vmatprep.subr.mxu0 0.0
    %3158 = vmatpush2.msra.mxu0 0.0
    %3159 = vmatprep.subr.mxu0 0.0
    %3160 = vmatpush2.msra.mxu0 0.0
    %3161 = vmatprep.subr.mxu0 0.0
    %3162 = vmatpush2.msra.mxu0 0.0
    %3163 = vmatprep.subr.mxu0 0.0
    %3164 = vmatpush2.msra.mxu0 0.0
    %3165 = vmatprep.subr.mxu0 0.0
    %3166 = vmatpush2.msra.mxu0 0.0
    %3167 = vmatprep.subr.mxu0 0.0
    %3168 = vmatpush2.msra.mxu0 0.0
    %3169 = vmatprep.subr.mxu0 0.0
    %3170 = vmatpush2.msra.mxu0 0.0
    %3171 = vmatprep.mubr.f32.mxu0 0.0
    %v3172 = vand.u32 %v1633, 4294901760
    %3173 = vmatmul.mubr.f32.gmra.mxu0 %v3172
    %v3174 = vpop.f32.mrf.mxu0
    %v3175 = vadd.f32 %v2966, %v3174
    %v3176 = vpop.f32.mrf.mxu0
    %v3177 = vadd.f32 %v2968, %v3176
    %3178 = vmatprep.mubr.f32.mxu0 0.0
    %v3179 = vand.u32 %v1634, 4294901760
    %3180 = vmatmul.mubr.f32.gmra.mxu0 %v3179
    %v3181 = vpop.f32.mrf.mxu0
    %v3182 = vadd.f32 %v2973, %v3181
    %v3183 = vpop.f32.mrf.mxu0
    %v3184 = vadd.f32 %v2975, %v3183
    %3185 = vmatprep.mubr.f32.mxu0 0.0
    %v3186 = vand.u32 %v1635, 4294901760
    %3187 = vmatmul.mubr.f32.gmra.mxu0 %v3186
    %v3188 = vpop.f32.mrf.mxu0
    %v3189 = vadd.f32 %v2980, %v3188
    %v3190 = vpop.f32.mrf.mxu0
    %v3191 = vadd.f32 %v2982, %v3190
    %3192 = vmatprep.mubr.f32.mxu0 0.0
    %v3193 = vand.u32 %v1636, 4294901760
    %3194 = vmatmul.mubr.f32.gmra.mxu0 %v3193
    %v3195 = vpop.f32.mrf.mxu0
    %v3196 = vadd.f32 %v2987, %v3195
    %v3197 = vpop.f32.mrf.mxu0
    %v3198 = vadd.f32 %v2989, %v3197
    %3199 = vmatprep.mubr.f32.mxu0 0.0
    %v3200 = vand.u32 %v1637, 4294901760
    %3201 = vmatmul.mubr.f32.gmra.mxu0 %v3200
    %v3202 = vpop.f32.mrf.mxu0
    %v3203 = vadd.f32 %v2994, %v3202
    %v3204 = vpop.f32.mrf.mxu0
    %v3205 = vadd.f32 %v2996, %v3204
    %3206 = vmatprep.mubr.f32.mxu0 0.0
    %v3207 = vand.u32 %v1638, 4294901760
    %3208 = vmatmul.mubr.f32.gmra.mxu0 %v3207
    %v3209 = vpop.f32.mrf.mxu0
    %v3210 = vadd.f32 %v3001, %v3209
    %v3211 = vpop.f32.mrf.mxu0
    %v3212 = vadd.f32 %v3003, %v3211
    %3213 = vmatprep.mubr.f32.mxu0 0.0
    %v3214 = vand.u32 %v1639, 4294901760
    %3215 = vmatmul.mubr.f32.gmra.mxu0 %v3214
    %v3216 = vpop.f32.mrf.mxu0
    %v3217 = vadd.f32 %v3008, %v3216
    %v3218 = vpop.f32.mrf.mxu0
    %v3219 = vadd.f32 %v3010, %v3218
    %3220 = vmatprep.mubr.f32.mxu0 0.0
    %v3221 = vand.u32 %v1640, 4294901760
    %3222 = vmatmul.mubr.f32.gmra.mxu0 %v3221
    %v3223 = vpop.f32.mrf.mxu0
    %v3224 = vadd.f32 %v3015, %v3223
    %v3225 = vpop.f32.mrf.mxu0
    %v3226 = vadd.f32 %v3017, %v3225
    %3227 = vmatprep.mubr.f32.mxu0 0.0
    %v3228 = vand.u32 %v1641, 4294901760
    %3229 = vmatmul.mubr.f32.gmra.mxu0 %v3228
    %v3230 = vpop.f32.mrf.mxu0
    %v3231 = vadd.f32 %v3022, %v3230
    %v3232 = vpop.f32.mrf.mxu0
    %v3233 = vadd.f32 %v3024, %v3232
    %3234 = vmatprep.mubr.f32.mxu0 0.0
    %v3235 = vand.u32 %v1642, 4294901760
    %3236 = vmatmul.mubr.f32.gmra.mxu0 %v3235
    %v3237 = vpop.f32.mrf.mxu0
    %v3238 = vadd.f32 %v3029, %v3237
    %v3239 = vpop.f32.mrf.mxu0
    %v3240 = vadd.f32 %v3031, %v3239
    %3241 = vmatprep.mubr.f32.mxu0 0.0
    %v3242 = vand.u32 %v1643, 4294901760
    %3243 = vmatmul.mubr.f32.gmra.mxu0 %v3242
    %v3244 = vpop.f32.mrf.mxu0
    %v3245 = vadd.f32 %v3036, %v3244
    %v3246 = vpop.f32.mrf.mxu0
    %v3247 = vadd.f32 %v3038, %v3246
    %3248 = vmatprep.mubr.f32.mxu0 0.0
    %v3249 = vand.u32 %v1644, 4294901760
    %3250 = vmatmul.mubr.f32.gmra.mxu0 %v3249
    %v3251 = vpop.f32.mrf.mxu0
    %v3252 = vadd.f32 %v3043, %v3251
    %v3253 = vpop.f32.mrf.mxu0
    %v3254 = vadd.f32 %v3045, %v3253
    %3255 = vmatprep.mubr.f32.mxu0 0.0
    %v3256 = vand.u32 %v1645, 4294901760
    %3257 = vmatmul.mubr.f32.gmra.mxu0 %v3256
    %v3258 = vpop.f32.mrf.mxu0
    %v3259 = vadd.f32 %v3050, %v3258
    %v3260 = vpop.f32.mrf.mxu0
    %v3261 = vadd.f32 %v3052, %v3260
    %3262 = vmatprep.mubr.f32.mxu0 0.0
    %v3263 = vand.u32 %v1646, 4294901760
    %3264 = vmatmul.mubr.f32.gmra.mxu0 %v3263
    %v3265 = vpop.f32.mrf.mxu0
    %v3266 = vadd.f32 %v3057, %v3265
    %v3267 = vpop.f32.mrf.mxu0
    %v3268 = vadd.f32 %v3059, %v3267
    %3269 = vmatprep.mubr.f32.mxu0 0.0
    %v3270 = vand.u32 %v1647, 4294901760
    %3271 = vmatmul.mubr.f32.gmra.mxu0 %v3270
    %v3272 = vpop.f32.mrf.mxu0
    %v3273 = vadd.f32 %v3064, %v3272
    %v3274 = vpop.f32.mrf.mxu0
    %v3275 = vadd.f32 %v3066, %v3274
    %3276 = vmatprep.mubr.f32.mxu0 0.0
    %v3277 = vand.u32 %v1648, 4294901760
    %3278 = vmatmul.mubr.f32.gmra.mxu0 %v3277
    %v3279 = vpop.f32.mrf.mxu0
    %v3280 = vadd.f32 %v3071, %v3279
    %v3281 = vpop.f32.mrf.mxu0
    %v3282 = vadd.f32 %v3073, %v3281
    %3283 = vdwg.mxu0
    %v3284 = vmax.f32 %v3175, %v3189
    %v3285 = vmax.f32 %v3182, %v3196
    %v3286 = vmax.f32 %v3284, %v3203
    %v3287 = vmax.f32 %v3285, %v3210
    %v3288 = vmax.f32 %v3286, %v3217
    %v3289 = vmax.f32 %v3287, %v3224
    %v3290 = vmax.f32 %v3288, %v3289
    %v3291 = vrot.slane %v3290, 4
    %v3292 = vmax.f32 %v3290, %v3291
    %v3293 = vrot.slane %v3292, 2
    %v3294 = vmax.f32 %v3292, %v3293
    %v3295 = vrot.slane %v3294, 1
    %v3296 = vmax.f32 %v3294, %v3295
    %v3297 = vmax.f32 %v3177, %v3191
    %v3298 = vmax.f32 %v3184, %v3198
    %v3299 = vmax.f32 %v3297, %v3205
    %v3300 = vmax.f32 %v3298, %v3212
    %v3301 = vmax.f32 %v3299, %v3219
    %v3302 = vmax.f32 %v3300, %v3226
    %v3303 = vmax.f32 %v3301, %v3302
    %v3304 = vrot.slane %v3303, 4
    %v3305 = vmax.f32 %v3303, %v3304
    %v3306 = vrot.slane %v3305, 2
    %v3307 = vmax.f32 %v3305, %v3306
    %v3308 = vrot.slane %v3307, 1
    %v3309 = vmax.f32 %v3307, %v3308
    %v3310 = vmax.f32 %v3231, %v3245
    %v3311 = vmax.f32 %v3238, %v3252
    %v3312 = vmax.f32 %v3310, %v3259
    %v3313 = vmax.f32 %v3311, %v3266
    %v3314 = vmax.f32 %v3312, %v3273
    %v3315 = vmax.f32 %v3313, %v3280
    %v3316 = vmax.f32 %v3314, %v3315
    %v3317 = vrot.slane %v3316, 4
    %v3318 = vmax.f32 %v3316, %v3317
    %v3319 = vrot.slane %v3318, 2
    %v3320 = vmax.f32 %v3318, %v3319
    %v3321 = vrot.slane %v3320, 1
    %v3322 = vmax.f32 %v3320, %v3321
    %v3323 = vmax.f32 %v3233, %v3247
    %v3324 = vmax.f32 %v3240, %v3254
    %v3325 = vmax.f32 %v3323, %v3261
    %v3326 = vmax.f32 %v3324, %v3268
    %v3327 = vmax.f32 %v3325, %v3275
    %v3328 = vmax.f32 %v3326, %v3282
    %v3329 = vmax.f32 %v3327, %v3328
    %v3330 = vrot.slane %v3329, 4
    %v3331 = vmax.f32 %v3329, %v3330
    %v3332 = vrot.slane %v3331, 2
    %v3333 = vmax.f32 %v3331, %v3332
    %v3334 = vrot.slane %v3333, 1
    %v3335 = vmax.f32 %v3333, %v3334
    %vm3336 = vcmask 1040384
    %v3337 = vsel %vm3336, %v3296, %v3322
    %v3338 = vsel %vm3336, %v3309, %v3335
    %v3341 = vcombine.low %v3337, %v3338
    %v3343 = vunpack.c.l.s4 1983009808
    %v3344 = vunpack.c.0.s8 %v3343
    %v3345 = vlaneseq
    %v3346 = vshrl.u32 %v3345, 7
    %v3347 = vsub.s32 %v3344, %v3346
    %v3348 = vrot.slane %v3341, %v3347
    %3350 = vst [vmem:[#allocation5] sm:$0xf] %v3348
    // Predicated region
    $region26: #{tpu_custom_call.1} parent=1 // pred_check
      _
    $region27: #{tpu_custom_call.1} parent=1 // pred_check_branch
      %3352 = sbr.rel (0) target = $region29
    $region28: #{tpu_custom_call.1} parent=1 // pred_region
      %s3354 = ssub.s32 64, 64
      %3355 = vsyncadd [#allocation4], %s3354
      %s3357 = sshll.u32 [#allocation5], 4
      %s3358 = int_to_ptr.vmem [resolvable:$true] %s3357
      %3360 = dma.vmem_to_hbm [thread:$0]  %s3358, 64, %s5, [#allocation4]
    $region29: #{tpu_custom_call.1} parent=1 // pred_fallthru
      _
    // Predicated region
    $region30: #{tpu_custom_call.1} parent=1 // pred_check
      _
    $region31: #{tpu_custom_call.1} parent=1 // pred_check_branch
      %3362 = sbr.rel (0) target = $region33
    $region32: #{tpu_custom_call.1} parent=1 // pred_region
      %3363 = dma.done [#allocation4], 64
    $region33: #{tpu_custom_call.1} parent=1 // pred_fallthru
      _
    %3364 = vsyncpa [#allocation3], 1
    %3365 = vsyncpa [#allocation4], 1

</llo_original>
